<compile_context>
chip_gen: v6e
topology: v6e:2x2x1
jax: 0.10.0
libtpu: 0.0.40
codegen_flags: <defaults>
</compile_context>

<pallas_src>
import functools

import jax
import jax.numpy as jnp
import numpy as np
from jax.experimental import pallas as pl
from jax.experimental.pallas import tpu as pltpu


def predcells_kernel(lam_ref, x_ref,
                     w0t_ref, b0_ref,
                     wih1t_ref, whh1t_ref, bih1_ref, bhh1_ref,
                     v1t_ref, bv1_ref,
                     w1t_ref, b1_ref,
                     wih2t_ref, whh2t_ref, bih2_ref, bhh2_ref,
                     v2t_ref, bv2_ref,
                     loss_ref,
                     xwb_scr, h1_hist, h2_hist,
                     *, T, H):
    f32 = jnp.float32
    bf16 = jnp.bfloat16

    # ---------------- prologue: one-time algebraic weight fusion (f32) ---------------
    wih1t = wih1t_ref[...]                      # (2H, 4H)
    wih1_bu = wih1t[0:H, :]                     # rows acting on BU_err0
    wih1_td = wih1t[H:2 * H, :]                 # rows acting on TD_err1(prev)
    wih2t = wih2t_ref[...]                      # (H, 4H)
    v1t, v2t = v1t_ref[...], v2t_ref[...]       # (H, C), (H, H)
    bv1, bv2 = bv1_ref[...], bv2_ref[...]       # (1, C), (1, H)

    # err_units[0].W folded into LSTM1's input side; err_units[1].W into LSTM2's.
    w01 = jnp.dot(w0t_ref[...], wih1_bu, preferred_element_type=f32)            # (C, 4H)
    w12 = jnp.dot(w1t_ref[...], wih2t, preferred_element_type=f32)              # (H, 4H)

    # V1/V2 folded into the recurrent gate weights (recon matmuls leave the loop):
    #   gates1_t += h1_{t-1} @ (Whh1 + Wih1_td - V1@W01) + h2_{t-2} @ (-V2@Wih1_td)
    #   gates2_t += h1_t @ W12 + h2_{t-1} @ (Whh2 - V2@W12)
    w_h1_g1 = (whh1t_ref[...] + wih1_td
               - jnp.dot(v1t, w01, preferred_element_type=f32))                 # (H, 4H)
    w_h2pp_g1 = -jnp.dot(v2t, wih1_td, preferred_element_type=f32)              # (H, 4H)
    w_h2_g2 = whh2t_ref[...] - jnp.dot(v2t, w12, preferred_element_type=f32)    # (H, 4H)

    bias1_base = (jnp.dot(b0_ref[...], wih1_bu, preferred_element_type=f32)
                  + bih1_ref[...] + bhh1_ref[...])                              # (1, 4H)
    corr_bv1 = jnp.dot(bv1, w01, preferred_element_type=f32)        # recon1 bias (td0 path)
    corr_bv2a = jnp.dot(bv2, wih1_td, preferred_element_type=f32)   # recon2 bias (td1_prev path)
    bias2_base = (jnp.dot(b1_ref[...], wih2t, preferred_element_type=f32)
                  + bih2_ref[...] + bhh2_ref[...])                              # (1, 4H)
    bias2_fold = bias2_base - jnp.dot(bv2, w12, preferred_element_type=f32)

    # Hoisted per-step input contribution with the steady-state (t>=2) bias folded in.
    xwb_scr[...] = (jnp.dot(x_ref[...], w01, preferred_element_type=f32)
                    + (bias1_base - corr_bv1 - corr_bv2a))                      # (T, 4H)

    # bf16 copies of every weight the in-loop MXU touches (accumulation stays f32).
    w_h1_g1 = w_h1_g1.astype(bf16)
    w_h2pp_g1 = w_h2pp_g1.astype(bf16)
    w_h1_g2 = w12.astype(bf16)
    w_h2_g2 = w_h2_g2.astype(bf16)

    def lstm_update(gates, c):
        # Full-row nonlinearities (one sigmoid + one tanh EUP push), then slice the
        # PyTorch LSTMCell gate order i/f/g/o.
        sg = jax.nn.sigmoid(gates)
        th = jnp.tanh(gates)
        i = sg[:, 0:H]
        f = sg[:, H:2 * H]
        g = th[:, 2 * H:3 * H]
        o = sg[:, 3 * H:4 * H]
        c_new = f * c + i * g
        return o * jnp.tanh(c_new), c_new

    zH = jnp.zeros((1, H), f32)
    h1, c1, c2 = zH, zH, zH
    h2_prev, h2_pp = zH, zH                      # h2_{t-1}, h2_{t-2}

    # T is a trace-time constant: fully unrolled loop; t=0 / t=1 boundary terms
    # (reconstructions start at zero) resolve at trace time with no runtime cost.
    for t in range(T):
        xwb_t = xwb_scr[pl.ds(t, 1), :]                                          # (1, 4H)

        # ---- layer-1 state unit: the only serial MXU push is h1_{t-1} @ w_h1_g1 ----
        if t == 0:
            gates1 = xwb_t + corr_bv1 + corr_bv2a
        elif t == 1:
            gates1 = (xwb_t + corr_bv2a
                      + jnp.dot(h1.astype(bf16), w_h1_g1, preferred_element_type=f32))
        else:
            gates1 = (xwb_t
                      + jnp.dot(h1.astype(bf16), w_h1_g1, preferred_element_type=f32)
                      + jnp.dot(h2_pp.astype(bf16), w_h2pp_g1, preferred_element_type=f32))
        h1, c1 = lstm_update(gates1, c1)

        # ---- layer-2 (top) state unit: serial push is h1_t @ w_h1_g2; the h2_{t-1}
        #      push depends only on step-start state and overlaps with layer 1. ----
        g2_h1 = jnp.dot(h1.astype(bf16), w_h1_g2, preferred_element_type=f32)
        if t == 0:
            gates2 = bias2_base + g2_h1
        else:
            gates2 = (bias2_fold + g2_h1
                      + jnp.dot(h2_prev.astype(bf16), w_h2_g2, preferred_element_type=f32))
        h2, c2 = lstm_update(gates2, c2)

        # Stash states for the deferred reconstruction / loss (stores, off the chain).
        h1_hist[pl.ds(t, 1), :] = h1
        h2_hist[pl.ds(t, 1), :] = h2
        h2_pp = h2_prev
        h2_prev = h2

    # --------- epilogue: deferred recon + |TD_err| loss as batched (T, .) matmuls ----
    x_all = x_ref[...]                                                           # (T, C)
    h1_all = h1_hist[...]                                                        # (T, H)
    h2_all = h2_hist[...]                                                        # (T, H)
    r1 = jnp.dot(h1_all, v1t, preferred_element_type=f32) + bv1                  # recon1_t
    r2 = jnp.dot(h2_all, v2t, preferred_element_type=f32) + bv2                  # recon2_t

    def sum_abs(v):
        return jnp.sum(jnp.abs(v), keepdims=True)                                # -> (1, 1)

    abs0 = sum_abs(x_all[0:1, :])                 # t = 0: recon1_{-1} == 0
    abs1 = sum_abs(h1_all[0:1, :])                # t = 0: recon2_{-1} == 0
    if T > 1:
        abs0 = abs0 + sum_abs(x_all[1:T, :] - r1[0:T - 1, :])
        abs1 = abs1 + sum_abs(h1_all[1:T, :] - r2[0:T - 1, :])

    # Top-layer ErrorUnit.forward is never called in PredCells.forward, so its TD_err
    # stays zero and contributes lam**2 * 0 to the loss.
    lam = lam_ref[0]
    loss_ref[...] = abs0 + lam * abs1


def predcells_forward(x, params, iternumber):
    """PredCells(num_layers=3).forward(input_sentence, iternumber) -> scalar loss."""
    T, C = x.shape
    H = params["w0t"].shape[1]
    # lam enters as a runtime SMEM scalar: no retrace when iternumber crosses 1000.
    lam = jnp.where(jnp.asarray(iternumber, jnp.int32) <= 1000,
                    jnp.float32(0.0001), jnp.float32(0.01)).reshape((1,))
    kernel = functools.partial(predcells_kernel, T=T, H=H)
    args = [lam, x,
            params["w0t"], params["b0"],
            params["wih1t"], params["whh1t"], params["bih1"], params["bhh1"],
            params["v1t"], params["bv1"],
            params["w1t"], params["b1"],
            params["wih2t"], params["whh2t"], params["bih2"], params["bhh2"],
            params["v2t"], params["bv2"]]
    in_specs = ([pl.BlockSpec(memory_space=pltpu.MemorySpace.SMEM)]
                + [pl.BlockSpec(memory_space=pltpu.MemorySpace.VMEM)] * (len(args) - 1))
    out = pl.pallas_call(
        kernel,
        out_shape=jax.ShapeDtypeStruct((1, 1), jnp.float32),
        in_specs=in_specs,
        out_specs=pl.BlockSpec(memory_space=pltpu.MemorySpace.VMEM),
        scratch_shapes=[
            pltpu.VMEM((T, 4 * H), jnp.float32),   # hoisted x @ W01 + folded bias
            pltpu.VMEM((T, H), jnp.float32),       # h1_t history (deferred loss)
            pltpu.VMEM((T, H), jnp.float32),       # h2_t history (deferred loss)
        ],
    )(*args)
    return out[0, 0]


def init_params(key, H, C):
    """Deterministic parameter init (PyTorch-style uniform ranges, transposed weights)."""
    ks = jax.random.split(key, 16)

    def u(k, fan_in, shape):
        bound = 1.0 / np.sqrt(fan_in)
        return jax.random.uniform(k, shape, jnp.float32, -bound, bound)

    p = {}
    # err_units[0].W : Linear(C -> H)
    p["w0t"], p["b0"] = u(ks[0], C, (C, H)), u(ks[1], C, (1, H))
    # st_units[1].LSTM_ : input 2H, hidden H
    p["wih1t"], p["whh1t"] = u(ks[2], H, (2 * H, 4 * H)), u(ks[3], H, (H, 4 * H))
    p["bih1"], p["bhh1"] = u(ks[4], H, (1, 4 * H)), u(ks[5], H, (1, 4 * H))
    # st_units[1].V : Linear(H -> C)
    p["v1t"], p["bv1"] = u(ks[6], H, (H, C)), u(ks[7], H, (1, C))
    # err_units[1].W : Linear(H -> H)
    p["w1t"], p["b1"] = u(ks[8], H, (H, H)), u(ks[9], H, (1, H))
    # st_units[2].LSTM_ (top) : input H, hidden H
    p["wih2t"], p["whh2t"] = u(ks[10], H, (H, 4 * H)), u(ks[11], H, (H, 4 * H))
    p["bih2"], p["bhh2"] = u(ks[12], H, (1, 4 * H)), u(ks[13], H, (1, 4 * H))
    # st_units[2].V : Linear(H -> H)
    p["v2t"], p["bv2"] = u(ks[14], H, (H, H)), u(ks[15], H, (1, H))
    # TODO(synk): layer-0 StateUnit (V, LSTM) and the top-layer ErrorUnit.W exist in the
    # PyTorch module but never influence the returned loss; they are not instantiated.
    return p


def reference_forward(x, p, iternumber):
    """Pure-JAX reference mirroring PredCells.forward for correctness checking."""
    lam = 0.0001 if iternumber <= 1000 else 0.01
    T, C = x.shape
    H = p["w0t"].shape[1]
    sig = lambda z: 1.0 / (1.0 + jnp.exp(-z))
    h1 = c1 = td1 = h2 = c2 = recon2 = jnp.zeros((1, H), jnp.float32)
    recon1 = jnp.zeros((1, C), jnp.float32)
    loss = jnp.float32(0.0)
    for t in range(T):
        xt = x[t:t + 1]
        td0 = xt - recon1
        bu0 = td0 @ p["w0t"] + p["b0"]
        inp1 = jnp.concatenate([bu0, td1], axis=1)
        g1 = inp1 @ p["wih1t"] + p["bih1"] + h1 @ p["whh1t"] + p["bhh1"]
        i1, f1 = sig(g1[:, :H]), sig(g1[:, H:2 * H])
        gg1, o1 = jnp.tanh(g1[:, 2 * H:3 * H]), sig(g1[:, 3 * H:])
        c1 = f1 * c1 + i1 * gg1
        h1 = o1 * jnp.tanh(c1)
        recon1 = h1 @ p["v1t"] + p["bv1"]
        td1 = h1 - recon2
        bu1 = td1 @ p["w1t"] + p["b1"]
        g2 = bu1 @ p["wih2t"] + p["bih2"] + h2 @ p["whh2t"] + p["bhh2"]
        i2, f2 = sig(g2[:, :H]), sig(g2[:, H:2 * H])
        gg2, o2 = jnp.tanh(g2[:, 2 * H:3 * H]), sig(g2[:, 3 * H:])
        c2 = f2 * c2 + i2 * gg2
        h2 = o2 * jnp.tanh(c2)
        recon2 = h2 @ p["v2t"] + p["bv2"]
        loss = loss + jnp.sum(jnp.abs(td0)) + lam * jnp.sum(jnp.abs(td1))
    return loss


if __name__ == "__main__":
    # Small shapes implied by the module: num_layers=3, seq=8, hidden=32, numchars=16.
    T, H, C = 8, 32, 16
    iternumber = 500  # <= 1000 -> lambda1 = 1e-4

    key = jax.random.PRNGKey(0)
    kx, kp = jax.random.split(key)
    x = jax.random.normal(kx, (T, C), dtype=jnp.float32)   # input_sentence stand-in
    params = init_params(kp, H, C)

    loss = predcells_forward(x, params, iternumber)
    loss = jax.block_until_ready(loss)

    ref = reference_forward(x, params, iternumber)
    np.testing.assert_allclose(float(loss), float(ref), rtol=1e-2, atol=1e-2)

    print("KERNEL_OK")
</pallas_src>

<mosaic_0001>
module attributes {stable_mosaic.version = 11 : i64} {
  func.func @predcells_kernel(%arg0: memref<1xf32, #tpu.memory_space<smem>>, %arg1: memref<8x16xf32, #tpu.memory_space<vmem>>, %arg2: memref<16x32xf32, #tpu.memory_space<vmem>>, %arg3: memref<1x32xf32, #tpu.memory_space<vmem>>, %arg4: memref<64x128xf32, #tpu.memory_space<vmem>>, %arg5: memref<32x128xf32, #tpu.memory_space<vmem>>, %arg6: memref<1x128xf32, #tpu.memory_space<vmem>>, %arg7: memref<1x128xf32, #tpu.memory_space<vmem>>, %arg8: memref<32x16xf32, #tpu.memory_space<vmem>>, %arg9: memref<1x16xf32, #tpu.memory_space<vmem>>, %arg10: memref<32x32xf32, #tpu.memory_space<vmem>>, %arg11: memref<1x32xf32, #tpu.memory_space<vmem>>, %arg12: memref<32x128xf32, #tpu.memory_space<vmem>>, %arg13: memref<32x128xf32, #tpu.memory_space<vmem>>, %arg14: memref<1x128xf32, #tpu.memory_space<vmem>>, %arg15: memref<1x128xf32, #tpu.memory_space<vmem>>, %arg16: memref<32x32xf32, #tpu.memory_space<vmem>>, %arg17: memref<1x32xf32, #tpu.memory_space<vmem>>, %arg18: memref<1x1xf32, #tpu.memory_space<vmem>>, %arg19: memref<8x128xf32, #tpu.memory_space<vmem>>, %arg20: memref<8x32xf32, #tpu.memory_space<vmem>>, %arg21: memref<8x32xf32, #tpu.memory_space<vmem>>) attributes {dimension_semantics = [], scalar_prefetch = 0 : i64, scratch_operands = 3 : i64, tpu.core_type = #tpu.core_type<tc>} {
    %c0 = arith.constant 0 : index
    %c0_0 = arith.constant 0 : index
    %0 = vector.load %arg4[%c0, %c0_0] : memref<64x128xf32, #tpu.memory_space<vmem>>, vector<64x128xf32>
    %1 = vector.extract_strided_slice %0 {offsets = [0, 0], sizes = [32, 128], strides = [1, 1]} : vector<64x128xf32> to vector<32x128xf32>
    %2 = vector.extract_strided_slice %0 {offsets = [32, 0], sizes = [32, 128], strides = [1, 1]} : vector<64x128xf32> to vector<32x128xf32>
    %c0_1 = arith.constant 0 : index
    %c0_2 = arith.constant 0 : index
    %3 = vector.load %arg12[%c0_1, %c0_2] : memref<32x128xf32, #tpu.memory_space<vmem>>, vector<32x128xf32>
    %c0_3 = arith.constant 0 : index
    %c0_4 = arith.constant 0 : index
    %4 = vector.load %arg8[%c0_3, %c0_4] : memref<32x16xf32, #tpu.memory_space<vmem>>, vector<32x16xf32>
    %c0_5 = arith.constant 0 : index
    %c0_6 = arith.constant 0 : index
    %5 = vector.load %arg16[%c0_5, %c0_6] : memref<32x32xf32, #tpu.memory_space<vmem>>, vector<32x32xf32>
    %c0_7 = arith.constant 0 : index
    %c0_8 = arith.constant 0 : index
    %6 = vector.load %arg9[%c0_7, %c0_8] : memref<1x16xf32, #tpu.memory_space<vmem>>, vector<1x16xf32>
    %c0_9 = arith.constant 0 : index
    %c0_10 = arith.constant 0 : index
    %7 = vector.load %arg17[%c0_9, %c0_10] : memref<1x32xf32, #tpu.memory_space<vmem>>, vector<1x32xf32>
    %c0_11 = arith.constant 0 : index
    %c0_12 = arith.constant 0 : index
    %8 = vector.load %arg2[%c0_11, %c0_12] : memref<16x32xf32, #tpu.memory_space<vmem>>, vector<16x32xf32>
    %cst = arith.constant dense<0.000000e+00> : vector<16x128xf32>
    %9 = tpu.matmul %8, %1, %cst {dimension_numbers = #tpu.dot_dimension_numbers<[1], [0], [0], [1], [0, 0, 1, 1], [], []>} : vector<16x32xf32>, vector<32x128xf32>, vector<16x128xf32> -> vector<16x128xf32>
    %c0_13 = arith.constant 0 : index
    %c0_14 = arith.constant 0 : index
    %10 = vector.load %arg10[%c0_13, %c0_14] : memref<32x32xf32, #tpu.memory_space<vmem>>, vector<32x32xf32>
    %cst_15 = arith.constant dense<0.000000e+00> : vector<32x128xf32>
    %11 = tpu.matmul %10, %3, %cst_15 {dimension_numbers = #tpu.dot_dimension_numbers<[1], [0], [0], [1], [0, 0, 1, 1], [], []>} : vector<32x32xf32>, vector<32x128xf32>, vector<32x128xf32> -> vector<32x128xf32>
    %c0_16 = arith.constant 0 : index
    %c0_17 = arith.constant 0 : index
    %12 = vector.load %arg5[%c0_16, %c0_17] : memref<32x128xf32, #tpu.memory_space<vmem>>, vector<32x128xf32>
    %13 = arith.addf %12, %2 : vector<32x128xf32>
    %cst_18 = arith.constant dense<0.000000e+00> : vector<32x128xf32>
    %14 = tpu.matmul %4, %9, %cst_18 {dimension_numbers = #tpu.dot_dimension_numbers<[1], [0], [0], [1], [0, 0, 1, 1], [], []>} : vector<32x16xf32>, vector<16x128xf32>, vector<32x128xf32> -> vector<32x128xf32>
    %15 = arith.subf %13, %14 : vector<32x128xf32>
    %cst_19 = arith.constant dense<0.000000e+00> : vector<32x128xf32>
    %16 = tpu.matmul %5, %2, %cst_19 {dimension_numbers = #tpu.dot_dimension_numbers<[1], [0], [0], [1], [0, 0, 1, 1], [], []>} : vector<32x32xf32>, vector<32x128xf32>, vector<32x128xf32> -> vector<32x128xf32>
    %cst_20 = arith.constant 0.000000e+00 : f32
    %17 = vector.broadcast %cst_20 : f32 to vector<32x128xf32>
    %18 = arith.subf %17, %16 : vector<32x128xf32>
    %c0_21 = arith.constant 0 : index
    %c0_22 = arith.constant 0 : index
    %19 = vector.load %arg13[%c0_21, %c0_22] : memref<32x128xf32, #tpu.memory_space<vmem>>, vector<32x128xf32>
    %cst_23 = arith.constant dense<0.000000e+00> : vector<32x128xf32>
    %20 = tpu.matmul %5, %11, %cst_23 {dimension_numbers = #tpu.dot_dimension_numbers<[1], [0], [0], [1], [0, 0, 1, 1], [], []>} : vector<32x32xf32>, vector<32x128xf32>, vector<32x128xf32> -> vector<32x128xf32>
    %21 = arith.subf %19, %20 : vector<32x128xf32>
    %c0_24 = arith.constant 0 : index
    %c0_25 = arith.constant 0 : index
    %22 = vector.load %arg3[%c0_24, %c0_25] : memref<1x32xf32, #tpu.memory_space<vmem>>, vector<1x32xf32>
    %cst_26 = arith.constant dense<0.000000e+00> : vector<1x128xf32>
    %23 = tpu.matmul %22, %1, %cst_26 {dimension_numbers = #tpu.dot_dimension_numbers<[1], [0], [0], [1], [0, 0, 1, 1], [], []>} : vector<1x32xf32>, vector<32x128xf32>, vector<1x128xf32> -> vector<1x128xf32>
    %c0_27 = arith.constant 0 : index
    %c0_28 = arith.constant 0 : index
    %24 = vector.load %arg6[%c0_27, %c0_28] : memref<1x128xf32, #tpu.memory_space<vmem>>, vector<1x128xf32>
    %25 = arith.addf %23, %24 : vector<1x128xf32>
    %c0_29 = arith.constant 0 : index
    %c0_30 = arith.constant 0 : index
    %26 = vector.load %arg7[%c0_29, %c0_30] : memref<1x128xf32, #tpu.memory_space<vmem>>, vector<1x128xf32>
    %27 = arith.addf %25, %26 : vector<1x128xf32>
    %cst_31 = arith.constant dense<0.000000e+00> : vector<1x128xf32>
    %28 = tpu.matmul %6, %9, %cst_31 {dimension_numbers = #tpu.dot_dimension_numbers<[1], [0], [0], [1], [0, 0, 1, 1], [], []>} : vector<1x16xf32>, vector<16x128xf32>, vector<1x128xf32> -> vector<1x128xf32>
    %cst_32 = arith.constant dense<0.000000e+00> : vector<1x128xf32>
    %29 = tpu.matmul %7, %2, %cst_32 {dimension_numbers = #tpu.dot_dimension_numbers<[1], [0], [0], [1], [0, 0, 1, 1], [], []>} : vector<1x32xf32>, vector<32x128xf32>, vector<1x128xf32> -> vector<1x128xf32>
    %c0_33 = arith.constant 0 : index
    %c0_34 = arith.constant 0 : index
    %30 = vector.load %arg11[%c0_33, %c0_34] : memref<1x32xf32, #tpu.memory_space<vmem>>, vector<1x32xf32>
    %cst_35 = arith.constant dense<0.000000e+00> : vector<1x128xf32>
    %31 = tpu.matmul %30, %3, %cst_35 {dimension_numbers = #tpu.dot_dimension_numbers<[1], [0], [0], [1], [0, 0, 1, 1], [], []>} : vector<1x32xf32>, vector<32x128xf32>, vector<1x128xf32> -> vector<1x128xf32>
    %c0_36 = arith.constant 0 : index
    %c0_37 = arith.constant 0 : index
    %32 = vector.load %arg14[%c0_36, %c0_37] : memref<1x128xf32, #tpu.memory_space<vmem>>, vector<1x128xf32>
    %33 = arith.addf %31, %32 : vector<1x128xf32>
    %c0_38 = arith.constant 0 : index
    %c0_39 = arith.constant 0 : index
    %34 = vector.load %arg15[%c0_38, %c0_39] : memref<1x128xf32, #tpu.memory_space<vmem>>, vector<1x128xf32>
    %35 = arith.addf %33, %34 : vector<1x128xf32>
    %cst_40 = arith.constant dense<0.000000e+00> : vector<1x128xf32>
    %36 = tpu.matmul %7, %11, %cst_40 {dimension_numbers = #tpu.dot_dimension_numbers<[1], [0], [0], [1], [0, 0, 1, 1], [], []>} : vector<1x32xf32>, vector<32x128xf32>, vector<1x128xf32> -> vector<1x128xf32>
    %37 = arith.subf %35, %36 : vector<1x128xf32>
    %c0_41 = arith.constant 0 : index
    %c0_42 = arith.constant 0 : index
    %38 = vector.load %arg1[%c0_41, %c0_42] : memref<8x16xf32, #tpu.memory_space<vmem>>, vector<8x16xf32>
    %cst_43 = arith.constant dense<0.000000e+00> : vector<8x128xf32>
    %39 = tpu.matmul %38, %9, %cst_43 {dimension_numbers = #tpu.dot_dimension_numbers<[1], [0], [0], [1], [0, 0, 1, 1], [], []>} : vector<8x16xf32>, vector<16x128xf32>, vector<8x128xf32> -> vector<8x128xf32>
    %40 = arith.subf %27, %28 : vector<1x128xf32>
    %41 = arith.subf %40, %29 : vector<1x128xf32>
    %42 = vector.broadcast %41 : vector<1x128xf32> to vector<8x128xf32>
    %43 = arith.addf %39, %42 : vector<8x128xf32>
    %c0_44 = arith.constant 0 : index
    %c0_45 = arith.constant 0 : index
    %44 = vector.load %arg19[%c0_44, %c0_45] : memref<8x128xf32, #tpu.memory_space<vmem>>, vector<8x128xf32>
    tpu.vector_store %arg19[%c0_44, %c0_45], %43 {strides = array<i32>} : memref<8x128xf32, #tpu.memory_space<vmem>>, vector<8x128xf32>,
    %45 = arith.truncf %15 : vector<32x128xf32> to vector<32x128xbf16>
    %46 = arith.truncf %18 : vector<32x128xf32> to vector<32x128xbf16>
    %47 = arith.truncf %11 : vector<32x128xf32> to vector<32x128xbf16>
    %48 = arith.truncf %21 : vector<32x128xf32> to vector<32x128xbf16>
    %cst_46 = arith.constant 0.000000e+00 : f32
    %49 = vector.broadcast %cst_46 : f32 to vector<1x32xf32>
    %c0_47 = arith.constant 0 : index
    %c0_48 = arith.constant 0 : index
    %50 = vector.load %arg19[%c0_47, %c0_48] : memref<8x128xf32, #tpu.memory_space<vmem>>, vector<1x128xf32>
    %51 = arith.addf %50, %28 : vector<1x128xf32>
    %52 = arith.addf %51, %29 : vector<1x128xf32>
    %53 = arith.negf %52 : vector<1x128xf32>
    %54 = math.exp %53 : vector<1x128xf32>
    %cst_49 = arith.constant 1.000000e+00 : f32
    %55 = vector.broadcast %cst_49 : f32 to vector<1x128xf32>
    %56 = arith.addf %55, %54 : vector<1x128xf32>
    %57 = arith.divf %55, %56 : vector<1x128xf32>
    %58 = math.tanh %52 : vector<1x128xf32>
    %59 = vector.extract_strided_slice %57 {offsets = [0, 0], sizes = [1, 32], strides = [1, 1]} : vector<1x128xf32> to vector<1x32xf32>
    %60 = vector.extract_strided_slice %57 {offsets = [0, 32], sizes = [1, 32], strides = [1, 1]} : vector<1x128xf32> to vector<1x32xf32>
    %61 = vector.extract_strided_slice %58 {offsets = [0, 64], sizes = [1, 32], strides = [1, 1]} : vector<1x128xf32> to vector<1x32xf32>
    %62 = vector.extract_strided_slice %57 {offsets = [0, 96], sizes = [1, 32], strides = [1, 1]} : vector<1x128xf32> to vector<1x32xf32>
    %63 = arith.mulf %60, %49 : vector<1x32xf32>
    %64 = arith.mulf %59, %61 : vector<1x32xf32>
    %65 = arith.addf %63, %64 : vector<1x32xf32>
    %66 = math.tanh %65 : vector<1x32xf32>
    %67 = arith.mulf %62, %66 : vector<1x32xf32>
    %68 = arith.truncf %67 : vector<1x32xf32> to vector<1x32xbf16>
    %cst_50 = arith.constant dense<0.000000e+00> : vector<1x128xf32>
    %69 = tpu.matmul %68, %47, %cst_50 {dimension_numbers = #tpu.dot_dimension_numbers<[1], [0], [0], [1], [0, 0, 1, 1], [], []>} : vector<1x32xbf16>, vector<32x128xbf16>, vector<1x128xf32> -> vector<1x128xf32>
    %70 = arith.addf %35, %69 : vector<1x128xf32>
    %71 = arith.negf %70 : vector<1x128xf32>
    %72 = math.exp %71 : vector<1x128xf32>
    %cst_51 = arith.constant 1.000000e+00 : f32
    %73 = vector.broadcast %cst_51 : f32 to vector<1x128xf32>
    %74 = arith.addf %73, %72 : vector<1x128xf32>
    %75 = arith.divf %73, %74 : vector<1x128xf32>
    %76 = math.tanh %70 : vector<1x128xf32>
    %77 = vector.extract_strided_slice %75 {offsets = [0, 0], sizes = [1, 32], strides = [1, 1]} : vector<1x128xf32> to vector<1x32xf32>
    %78 = vector.extract_strided_slice %75 {offsets = [0, 32], sizes = [1, 32], strides = [1, 1]} : vector<1x128xf32> to vector<1x32xf32>
    %79 = vector.extract_strided_slice %76 {offsets = [0, 64], sizes = [1, 32], strides = [1, 1]} : vector<1x128xf32> to vector<1x32xf32>
    %80 = vector.extract_strided_slice %75 {offsets = [0, 96], sizes = [1, 32], strides = [1, 1]} : vector<1x128xf32> to vector<1x32xf32>
    %81 = arith.mulf %78, %49 : vector<1x32xf32>
    %82 = arith.mulf %77, %79 : vector<1x32xf32>
    %83 = arith.addf %81, %82 : vector<1x32xf32>
    %84 = math.tanh %83 : vector<1x32xf32>
    %85 = arith.mulf %80, %84 : vector<1x32xf32>
    %c0_52 = arith.constant 0 : index
    %c0_53 = arith.constant 0 : index
    %86 = vector.load %arg20[%c0_52, %c0_53] : memref<8x32xf32, #tpu.memory_space<vmem>>, vector<1x32xf32>
    tpu.vector_store %arg20[%c0_52, %c0_53], %67 {strides = array<i32>} : memref<8x32xf32, #tpu.memory_space<vmem>>, vector<1x32xf32>,
    %c0_54 = arith.constant 0 : index
    %c0_55 = arith.constant 0 : index
    %87 = vector.load %arg21[%c0_54, %c0_55] : memref<8x32xf32, #tpu.memory_space<vmem>>, vector<1x32xf32>
    tpu.vector_store %arg21[%c0_54, %c0_55], %85 {strides = array<i32>} : memref<8x32xf32, #tpu.memory_space<vmem>>, vector<1x32xf32>,
    %c1 = arith.constant 1 : index
    %c0_56 = arith.constant 0 : index
    %88 = vector.load %arg19[%c1, %c0_56] : memref<8x128xf32, #tpu.memory_space<vmem>>, vector<1x128xf32>
    %89 = arith.addf %88, %29 : vector<1x128xf32>
    %90 = arith.truncf %67 : vector<1x32xf32> to vector<1x32xbf16>
    %cst_57 = arith.constant dense<0.000000e+00> : vector<1x128xf32>
    %91 = tpu.matmul %90, %45, %cst_57 {dimension_numbers = #tpu.dot_dimension_numbers<[1], [0], [0], [1], [0, 0, 1, 1], [], []>} : vector<1x32xbf16>, vector<32x128xbf16>, vector<1x128xf32> -> vector<1x128xf32>
    %92 = arith.addf %89, %91 : vector<1x128xf32>
    %93 = arith.negf %92 : vector<1x128xf32>
    %94 = math.exp %93 : vector<1x128xf32>
    %cst_58 = arith.constant 1.000000e+00 : f32
    %95 = vector.broadcast %cst_58 : f32 to vector<1x128xf32>
    %96 = arith.addf %95, %94 : vector<1x128xf32>
    %97 = arith.divf %95, %96 : vector<1x128xf32>
    %98 = math.tanh %92 : vector<1x128xf32>
    %99 = vector.extract_strided_slice %97 {offsets = [0, 0], sizes = [1, 32], strides = [1, 1]} : vector<1x128xf32> to vector<1x32xf32>
    %100 = vector.extract_strided_slice %97 {offsets = [0, 32], sizes = [1, 32], strides = [1, 1]} : vector<1x128xf32> to vector<1x32xf32>
    %101 = vector.extract_strided_slice %98 {offsets = [0, 64], sizes = [1, 32], strides = [1, 1]} : vector<1x128xf32> to vector<1x32xf32>
    %102 = vector.extract_strided_slice %97 {offsets = [0, 96], sizes = [1, 32], strides = [1, 1]} : vector<1x128xf32> to vector<1x32xf32>
    %103 = arith.mulf %100, %65 : vector<1x32xf32>
    %104 = arith.mulf %99, %101 : vector<1x32xf32>
    %105 = arith.addf %103, %104 : vector<1x32xf32>
    %106 = math.tanh %105 : vector<1x32xf32>
    %107 = arith.mulf %102, %106 : vector<1x32xf32>
    %108 = arith.truncf %107 : vector<1x32xf32> to vector<1x32xbf16>
    %cst_59 = arith.constant dense<0.000000e+00> : vector<1x128xf32>
    %109 = tpu.matmul %108, %47, %cst_59 {dimension_numbers = #tpu.dot_dimension_numbers<[1], [0], [0], [1], [0, 0, 1, 1], [], []>} : vector<1x32xbf16>, vector<32x128xbf16>, vector<1x128xf32> -> vector<1x128xf32>
    %110 = arith.addf %37, %109 : vector<1x128xf32>
    %111 = arith.truncf %85 : vector<1x32xf32> to vector<1x32xbf16>
    %cst_60 = arith.constant dense<0.000000e+00> : vector<1x128xf32>
    %112 = tpu.matmul %111, %48, %cst_60 {dimension_numbers = #tpu.dot_dimension_numbers<[1], [0], [0], [1], [0, 0, 1, 1], [], []>} : vector<1x32xbf16>, vector<32x128xbf16>, vector<1x128xf32> -> vector<1x128xf32>
    %113 = arith.addf %110, %112 : vector<1x128xf32>
    %114 = arith.negf %113 : vector<1x128xf32>
    %115 = math.exp %114 : vector<1x128xf32>
    %cst_61 = arith.constant 1.000000e+00 : f32
    %116 = vector.broadcast %cst_61 : f32 to vector<1x128xf32>
    %117 = arith.addf %116, %115 : vector<1x128xf32>
    %118 = arith.divf %116, %117 : vector<1x128xf32>
    %119 = math.tanh %113 : vector<1x128xf32>
    %120 = vector.extract_strided_slice %118 {offsets = [0, 0], sizes = [1, 32], strides = [1, 1]} : vector<1x128xf32> to vector<1x32xf32>
    %121 = vector.extract_strided_slice %118 {offsets = [0, 32], sizes = [1, 32], strides = [1, 1]} : vector<1x128xf32> to vector<1x32xf32>
    %122 = vector.extract_strided_slice %119 {offsets = [0, 64], sizes = [1, 32], strides = [1, 1]} : vector<1x128xf32> to vector<1x32xf32>
    %123 = vector.extract_strided_slice %118 {offsets = [0, 96], sizes = [1, 32], strides = [1, 1]} : vector<1x128xf32> to vector<1x32xf32>
    %124 = arith.mulf %121, %83 : vector<1x32xf32>
    %125 = arith.mulf %120, %122 : vector<1x32xf32>
    %126 = arith.addf %124, %125 : vector<1x32xf32>
    %127 = math.tanh %126 : vector<1x32xf32>
    %128 = arith.mulf %123, %127 : vector<1x32xf32>
    %c1_62 = arith.constant 1 : index
    %c0_63 = arith.constant 0 : index
    %129 = vector.load %arg20[%c1_62, %c0_63] : memref<8x32xf32, #tpu.memory_space<vmem>>, vector<1x32xf32>
    tpu.vector_store %arg20[%c1_62, %c0_63], %107 {strides = array<i32>} : memref<8x32xf32, #tpu.memory_space<vmem>>, vector<1x32xf32>,
    %c1_64 = arith.constant 1 : index
    %c0_65 = arith.constant 0 : index
    %130 = vector.load %arg21[%c1_64, %c0_65] : memref<8x32xf32, #tpu.memory_space<vmem>>, vector<1x32xf32>
    tpu.vector_store %arg21[%c1_64, %c0_65], %128 {strides = array<i32>} : memref<8x32xf32, #tpu.memory_space<vmem>>, vector<1x32xf32>,
    %c2 = arith.constant 2 : index
    %c0_66 = arith.constant 0 : index
    %131 = vector.load %arg19[%c2, %c0_66] : memref<8x128xf32, #tpu.memory_space<vmem>>, vector<1x128xf32>
    %132 = arith.truncf %107 : vector<1x32xf32> to vector<1x32xbf16>
    %cst_67 = arith.constant dense<0.000000e+00> : vector<1x128xf32>
    %133 = tpu.matmul %132, %45, %cst_67 {dimension_numbers = #tpu.dot_dimension_numbers<[1], [0], [0], [1], [0, 0, 1, 1], [], []>} : vector<1x32xbf16>, vector<32x128xbf16>, vector<1x128xf32> -> vector<1x128xf32>
    %134 = arith.addf %131, %133 : vector<1x128xf32>
    %135 = arith.truncf %85 : vector<1x32xf32> to vector<1x32xbf16>
    %cst_68 = arith.constant dense<0.000000e+00> : vector<1x128xf32>
    %136 = tpu.matmul %135, %46, %cst_68 {dimension_numbers = #tpu.dot_dimension_numbers<[1], [0], [0], [1], [0, 0, 1, 1], [], []>} : vector<1x32xbf16>, vector<32x128xbf16>, vector<1x128xf32> -> vector<1x128xf32>
    %137 = arith.addf %134, %136 : vector<1x128xf32>
    %138 = arith.negf %137 : vector<1x128xf32>
    %139 = math.exp %138 : vector<1x128xf32>
    %cst_69 = arith.constant 1.000000e+00 : f32
    %140 = vector.broadcast %cst_69 : f32 to vector<1x128xf32>
    %141 = arith.addf %140, %139 : vector<1x128xf32>
    %142 = arith.divf %140, %141 : vector<1x128xf32>
    %143 = math.tanh %137 : vector<1x128xf32>
    %144 = vector.extract_strided_slice %142 {offsets = [0, 0], sizes = [1, 32], strides = [1, 1]} : vector<1x128xf32> to vector<1x32xf32>
    %145 = vector.extract_strided_slice %142 {offsets = [0, 32], sizes = [1, 32], strides = [1, 1]} : vector<1x128xf32> to vector<1x32xf32>
    %146 = vector.extract_strided_slice %143 {offsets = [0, 64], sizes = [1, 32], strides = [1, 1]} : vector<1x128xf32> to vector<1x32xf32>
    %147 = vector.extract_strided_slice %142 {offsets = [0, 96], sizes = [1, 32], strides = [1, 1]} : vector<1x128xf32> to vector<1x32xf32>
    %148 = arith.mulf %145, %105 : vector<1x32xf32>
    %149 = arith.mulf %144, %146 : vector<1x32xf32>
    %150 = arith.addf %148, %149 : vector<1x32xf32>
    %151 = math.tanh %150 : vector<1x32xf32>
    %152 = arith.mulf %147, %151 : vector<1x32xf32>
    %153 = arith.truncf %152 : vector<1x32xf32> to vector<1x32xbf16>
    %cst_70 = arith.constant dense<0.000000e+00> : vector<1x128xf32>
    %154 = tpu.matmul %153, %47, %cst_70 {dimension_numbers = #tpu.dot_dimension_numbers<[1], [0], [0], [1], [0, 0, 1, 1], [], []>} : vector<1x32xbf16>, vector<32x128xbf16>, vector<1x128xf32> -> vector<1x128xf32>
    %155 = arith.addf %37, %154 : vector<1x128xf32>
    %156 = arith.truncf %128 : vector<1x32xf32> to vector<1x32xbf16>
    %cst_71 = arith.constant dense<0.000000e+00> : vector<1x128xf32>
    %157 = tpu.matmul %156, %48, %cst_71 {dimension_numbers = #tpu.dot_dimension_numbers<[1], [0], [0], [1], [0, 0, 1, 1], [], []>} : vector<1x32xbf16>, vector<32x128xbf16>, vector<1x128xf32> -> vector<1x128xf32>
    %158 = arith.addf %155, %157 : vector<1x128xf32>
    %159 = arith.negf %158 : vector<1x128xf32>
    %160 = math.exp %159 : vector<1x128xf32>
    %cst_72 = arith.constant 1.000000e+00 : f32
    %161 = vector.broadcast %cst_72 : f32 to vector<1x128xf32>
    %162 = arith.addf %161, %160 : vector<1x128xf32>
    %163 = arith.divf %161, %162 : vector<1x128xf32>
    %164 = math.tanh %158 : vector<1x128xf32>
    %165 = vector.extract_strided_slice %163 {offsets = [0, 0], sizes = [1, 32], strides = [1, 1]} : vector<1x128xf32> to vector<1x32xf32>
    %166 = vector.extract_strided_slice %163 {offsets = [0, 32], sizes = [1, 32], strides = [1, 1]} : vector<1x128xf32> to vector<1x32xf32>
    %167 = vector.extract_strided_slice %164 {offsets = [0, 64], sizes = [1, 32], strides = [1, 1]} : vector<1x128xf32> to vector<1x32xf32>
    %168 = vector.extract_strided_slice %163 {offsets = [0, 96], sizes = [1, 32], strides = [1, 1]} : vector<1x128xf32> to vector<1x32xf32>
    %169 = arith.mulf %166, %126 : vector<1x32xf32>
    %170 = arith.mulf %165, %167 : vector<1x32xf32>
    %171 = arith.addf %169, %170 : vector<1x32xf32>
    %172 = math.tanh %171 : vector<1x32xf32>
    %173 = arith.mulf %168, %172 : vector<1x32xf32>
    %c2_73 = arith.constant 2 : index
    %c0_74 = arith.constant 0 : index
    %174 = vector.load %arg20[%c2_73, %c0_74] : memref<8x32xf32, #tpu.memory_space<vmem>>, vector<1x32xf32>
    tpu.vector_store %arg20[%c2_73, %c0_74], %152 {strides = array<i32>} : memref<8x32xf32, #tpu.memory_space<vmem>>, vector<1x32xf32>,
    %c2_75 = arith.constant 2 : index
    %c0_76 = arith.constant 0 : index
    %175 = vector.load %arg21[%c2_75, %c0_76] : memref<8x32xf32, #tpu.memory_space<vmem>>, vector<1x32xf32>
    tpu.vector_store %arg21[%c2_75, %c0_76], %173 {strides = array<i32>} : memref<8x32xf32, #tpu.memory_space<vmem>>, vector<1x32xf32>,
    %c3 = arith.constant 3 : index
    %c0_77 = arith.constant 0 : index
    %176 = vector.load %arg19[%c3, %c0_77] : memref<8x128xf32, #tpu.memory_space<vmem>>, vector<1x128xf32>
    %177 = arith.truncf %152 : vector<1x32xf32> to vector<1x32xbf16>
    %cst_78 = arith.constant dense<0.000000e+00> : vector<1x128xf32>
    %178 = tpu.matmul %177, %45, %cst_78 {dimension_numbers = #tpu.dot_dimension_numbers<[1], [0], [0], [1], [0, 0, 1, 1], [], []>} : vector<1x32xbf16>, vector<32x128xbf16>, vector<1x128xf32> -> vector<1x128xf32>
    %179 = arith.addf %176, %178 : vector<1x128xf32>
    %180 = arith.truncf %128 : vector<1x32xf32> to vector<1x32xbf16>
    %cst_79 = arith.constant dense<0.000000e+00> : vector<1x128xf32>
    %181 = tpu.matmul %180, %46, %cst_79 {dimension_numbers = #tpu.dot_dimension_numbers<[1], [0], [0], [1], [0, 0, 1, 1], [], []>} : vector<1x32xbf16>, vector<32x128xbf16>, vector<1x128xf32> -> vector<1x128xf32>
    %182 = arith.addf %179, %181 : vector<1x128xf32>
    %183 = arith.negf %182 : vector<1x128xf32>
    %184 = math.exp %183 : vector<1x128xf32>
    %cst_80 = arith.constant 1.000000e+00 : f32
    %185 = vector.broadcast %cst_80 : f32 to vector<1x128xf32>
    %186 = arith.addf %185, %184 : vector<1x128xf32>
    %187 = arith.divf %185, %186 : vector<1x128xf32>
    %188 = math.tanh %182 : vector<1x128xf32>
    %189 = vector.extract_strided_slice %187 {offsets = [0, 0], sizes = [1, 32], strides = [1, 1]} : vector<1x128xf32> to vector<1x32xf32>
    %190 = vector.extract_strided_slice %187 {offsets = [0, 32], sizes = [1, 32], strides = [1, 1]} : vector<1x128xf32> to vector<1x32xf32>
    %191 = vector.extract_strided_slice %188 {offsets = [0, 64], sizes = [1, 32], strides = [1, 1]} : vector<1x128xf32> to vector<1x32xf32>
    %192 = vector.extract_strided_slice %187 {offsets = [0, 96], sizes = [1, 32], strides = [1, 1]} : vector<1x128xf32> to vector<1x32xf32>
    %193 = arith.mulf %190, %150 : vector<1x32xf32>
    %194 = arith.mulf %189, %191 : vector<1x32xf32>
    %195 = arith.addf %193, %194 : vector<1x32xf32>
    %196 = math.tanh %195 : vector<1x32xf32>
    %197 = arith.mulf %192, %196 : vector<1x32xf32>
    %198 = arith.truncf %197 : vector<1x32xf32> to vector<1x32xbf16>
    %cst_81 = arith.constant dense<0.000000e+00> : vector<1x128xf32>
    %199 = tpu.matmul %198, %47, %cst_81 {dimension_numbers = #tpu.dot_dimension_numbers<[1], [0], [0], [1], [0, 0, 1, 1], [], []>} : vector<1x32xbf16>, vector<32x128xbf16>, vector<1x128xf32> -> vector<1x128xf32>
    %200 = arith.addf %37, %199 : vector<1x128xf32>
    %201 = arith.truncf %173 : vector<1x32xf32> to vector<1x32xbf16>
    %cst_82 = arith.constant dense<0.000000e+00> : vector<1x128xf32>
    %202 = tpu.matmul %201, %48, %cst_82 {dimension_numbers = #tpu.dot_dimension_numbers<[1], [0], [0], [1], [0, 0, 1, 1], [], []>} : vector<1x32xbf16>, vector<32x128xbf16>, vector<1x128xf32> -> vector<1x128xf32>
    %203 = arith.addf %200, %202 : vector<1x128xf32>
    %204 = arith.negf %203 : vector<1x128xf32>
    %205 = math.exp %204 : vector<1x128xf32>
    %cst_83 = arith.constant 1.000000e+00 : f32
    %206 = vector.broadcast %cst_83 : f32 to vector<1x128xf32>
    %207 = arith.addf %206, %205 : vector<1x128xf32>
    %208 = arith.divf %206, %207 : vector<1x128xf32>
    %209 = math.tanh %203 : vector<1x128xf32>
    %210 = vector.extract_strided_slice %208 {offsets = [0, 0], sizes = [1, 32], strides = [1, 1]} : vector<1x128xf32> to vector<1x32xf32>
    %211 = vector.extract_strided_slice %208 {offsets = [0, 32], sizes = [1, 32], strides = [1, 1]} : vector<1x128xf32> to vector<1x32xf32>
    %212 = vector.extract_strided_slice %209 {offsets = [0, 64], sizes = [1, 32], strides = [1, 1]} : vector<1x128xf32> to vector<1x32xf32>
    %213 = vector.extract_strided_slice %208 {offsets = [0, 96], sizes = [1, 32], strides = [1, 1]} : vector<1x128xf32> to vector<1x32xf32>
    %214 = arith.mulf %211, %171 : vector<1x32xf32>
    %215 = arith.mulf %210, %212 : vector<1x32xf32>
    %216 = arith.addf %214, %215 : vector<1x32xf32>
    %217 = math.tanh %216 : vector<1x32xf32>
    %218 = arith.mulf %213, %217 : vector<1x32xf32>
    %c3_84 = arith.constant 3 : index
    %c0_85 = arith.constant 0 : index
    %219 = vector.load %arg20[%c3_84, %c0_85] : memref<8x32xf32, #tpu.memory_space<vmem>>, vector<1x32xf32>
    tpu.vector_store %arg20[%c3_84, %c0_85], %197 {strides = array<i32>} : memref<8x32xf32, #tpu.memory_space<vmem>>, vector<1x32xf32>,
    %c3_86 = arith.constant 3 : index
    %c0_87 = arith.constant 0 : index
    %220 = vector.load %arg21[%c3_86, %c0_87] : memref<8x32xf32, #tpu.memory_space<vmem>>, vector<1x32xf32>
    tpu.vector_store %arg21[%c3_86, %c0_87], %218 {strides = array<i32>} : memref<8x32xf32, #tpu.memory_space<vmem>>, vector<1x32xf32>,
    %c4 = arith.constant 4 : index
    %c0_88 = arith.constant 0 : index
    %221 = vector.load %arg19[%c4, %c0_88] : memref<8x128xf32, #tpu.memory_space<vmem>>, vector<1x128xf32>
    %222 = arith.truncf %197 : vector<1x32xf32> to vector<1x32xbf16>
    %cst_89 = arith.constant dense<0.000000e+00> : vector<1x128xf32>
    %223 = tpu.matmul %222, %45, %cst_89 {dimension_numbers = #tpu.dot_dimension_numbers<[1], [0], [0], [1], [0, 0, 1, 1], [], []>} : vector<1x32xbf16>, vector<32x128xbf16>, vector<1x128xf32> -> vector<1x128xf32>
    %224 = arith.addf %221, %223 : vector<1x128xf32>
    %225 = arith.truncf %173 : vector<1x32xf32> to vector<1x32xbf16>
    %cst_90 = arith.constant dense<0.000000e+00> : vector<1x128xf32>
    %226 = tpu.matmul %225, %46, %cst_90 {dimension_numbers = #tpu.dot_dimension_numbers<[1], [0], [0], [1], [0, 0, 1, 1], [], []>} : vector<1x32xbf16>, vector<32x128xbf16>, vector<1x128xf32> -> vector<1x128xf32>
    %227 = arith.addf %224, %226 : vector<1x128xf32>
    %228 = arith.negf %227 : vector<1x128xf32>
    %229 = math.exp %228 : vector<1x128xf32>
    %cst_91 = arith.constant 1.000000e+00 : f32
    %230 = vector.broadcast %cst_91 : f32 to vector<1x128xf32>
    %231 = arith.addf %230, %229 : vector<1x128xf32>
    %232 = arith.divf %230, %231 : vector<1x128xf32>
    %233 = math.tanh %227 : vector<1x128xf32>
    %234 = vector.extract_strided_slice %232 {offsets = [0, 0], sizes = [1, 32], strides = [1, 1]} : vector<1x128xf32> to vector<1x32xf32>
    %235 = vector.extract_strided_slice %232 {offsets = [0, 32], sizes = [1, 32], strides = [1, 1]} : vector<1x128xf32> to vector<1x32xf32>
    %236 = vector.extract_strided_slice %233 {offsets = [0, 64], sizes = [1, 32], strides = [1, 1]} : vector<1x128xf32> to vector<1x32xf32>
    %237 = vector.extract_strided_slice %232 {offsets = [0, 96], sizes = [1, 32], strides = [1, 1]} : vector<1x128xf32> to vector<1x32xf32>
    %238 = arith.mulf %235, %195 : vector<1x32xf32>
    %239 = arith.mulf %234, %236 : vector<1x32xf32>
    %240 = arith.addf %238, %239 : vector<1x32xf32>
    %241 = math.tanh %240 : vector<1x32xf32>
    %242 = arith.mulf %237, %241 : vector<1x32xf32>
    %243 = arith.truncf %242 : vector<1x32xf32> to vector<1x32xbf16>
    %cst_92 = arith.constant dense<0.000000e+00> : vector<1x128xf32>
    %244 = tpu.matmul %243, %47, %cst_92 {dimension_numbers = #tpu.dot_dimension_numbers<[1], [0], [0], [1], [0, 0, 1, 1], [], []>} : vector<1x32xbf16>, vector<32x128xbf16>, vector<1x128xf32> -> vector<1x128xf32>
    %245 = arith.addf %37, %244 : vector<1x128xf32>
    %246 = arith.truncf %218 : vector<1x32xf32> to vector<1x32xbf16>
    %cst_93 = arith.constant dense<0.000000e+00> : vector<1x128xf32>
    %247 = tpu.matmul %246, %48, %cst_93 {dimension_numbers = #tpu.dot_dimension_numbers<[1], [0], [0], [1], [0, 0, 1, 1], [], []>} : vector<1x32xbf16>, vector<32x128xbf16>, vector<1x128xf32> -> vector<1x128xf32>
    %248 = arith.addf %245, %247 : vector<1x128xf32>
    %249 = arith.negf %248 : vector<1x128xf32>
    %250 = math.exp %249 : vector<1x128xf32>
    %cst_94 = arith.constant 1.000000e+00 : f32
    %251 = vector.broadcast %cst_94 : f32 to vector<1x128xf32>
    %252 = arith.addf %251, %250 : vector<1x128xf32>
    %253 = arith.divf %251, %252 : vector<1x128xf32>
    %254 = math.tanh %248 : vector<1x128xf32>
    %255 = vector.extract_strided_slice %253 {offsets = [0, 0], sizes = [1, 32], strides = [1, 1]} : vector<1x128xf32> to vector<1x32xf32>
    %256 = vector.extract_strided_slice %253 {offsets = [0, 32], sizes = [1, 32], strides = [1, 1]} : vector<1x128xf32> to vector<1x32xf32>
    %257 = vector.extract_strided_slice %254 {offsets = [0, 64], sizes = [1, 32], strides = [1, 1]} : vector<1x128xf32> to vector<1x32xf32>
    %258 = vector.extract_strided_slice %253 {offsets = [0, 96], sizes = [1, 32], strides = [1, 1]} : vector<1x128xf32> to vector<1x32xf32>
    %259 = arith.mulf %256, %216 : vector<1x32xf32>
    %260 = arith.mulf %255, %257 : vector<1x32xf32>
    %261 = arith.addf %259, %260 : vector<1x32xf32>
    %262 = math.tanh %261 : vector<1x32xf32>
    %263 = arith.mulf %258, %262 : vector<1x32xf32>
    %c4_95 = arith.constant 4 : index
    %c0_96 = arith.constant 0 : index
    %264 = vector.load %arg20[%c4_95, %c0_96] : memref<8x32xf32, #tpu.memory_space<vmem>>, vector<1x32xf32>
    tpu.vector_store %arg20[%c4_95, %c0_96], %242 {strides = array<i32>} : memref<8x32xf32, #tpu.memory_space<vmem>>, vector<1x32xf32>,
    %c4_97 = arith.constant 4 : index
    %c0_98 = arith.constant 0 : index
    %265 = vector.load %arg21[%c4_97, %c0_98] : memref<8x32xf32, #tpu.memory_space<vmem>>, vector<1x32xf32>
    tpu.vector_store %arg21[%c4_97, %c0_98], %263 {strides = array<i32>} : memref<8x32xf32, #tpu.memory_space<vmem>>, vector<1x32xf32>,
    %c5 = arith.constant 5 : index
    %c0_99 = arith.constant 0 : index
    %266 = vector.load %arg19[%c5, %c0_99] : memref<8x128xf32, #tpu.memory_space<vmem>>, vector<1x128xf32>
    %267 = arith.truncf %242 : vector<1x32xf32> to vector<1x32xbf16>
    %cst_100 = arith.constant dense<0.000000e+00> : vector<1x128xf32>
    %268 = tpu.matmul %267, %45, %cst_100 {dimension_numbers = #tpu.dot_dimension_numbers<[1], [0], [0], [1], [0, 0, 1, 1], [], []>} : vector<1x32xbf16>, vector<32x128xbf16>, vector<1x128xf32> -> vector<1x128xf32>
    %269 = arith.addf %266, %268 : vector<1x128xf32>
    %270 = arith.truncf %218 : vector<1x32xf32> to vector<1x32xbf16>
    %cst_101 = arith.constant dense<0.000000e+00> : vector<1x128xf32>
    %271 = tpu.matmul %270, %46, %cst_101 {dimension_numbers = #tpu.dot_dimension_numbers<[1], [0], [0], [1], [0, 0, 1, 1], [], []>} : vector<1x32xbf16>, vector<32x128xbf16>, vector<1x128xf32> -> vector<1x128xf32>
    %272 = arith.addf %269, %271 : vector<1x128xf32>
    %273 = arith.negf %272 : vector<1x128xf32>
    %274 = math.exp %273 : vector<1x128xf32>
    %cst_102 = arith.constant 1.000000e+00 : f32
    %275 = vector.broadcast %cst_102 : f32 to vector<1x128xf32>
    %276 = arith.addf %275, %274 : vector<1x128xf32>
    %277 = arith.divf %275, %276 : vector<1x128xf32>
    %278 = math.tanh %272 : vector<1x128xf32>
    %279 = vector.extract_strided_slice %277 {offsets = [0, 0], sizes = [1, 32], strides = [1, 1]} : vector<1x128xf32> to vector<1x32xf32>
    %280 = vector.extract_strided_slice %277 {offsets = [0, 32], sizes = [1, 32], strides = [1, 1]} : vector<1x128xf32> to vector<1x32xf32>
    %281 = vector.extract_strided_slice %278 {offsets = [0, 64], sizes = [1, 32], strides = [1, 1]} : vector<1x128xf32> to vector<1x32xf32>
    %282 = vector.extract_strided_slice %277 {offsets = [0, 96], sizes = [1, 32], strides = [1, 1]} : vector<1x128xf32> to vector<1x32xf32>
    %283 = arith.mulf %280, %240 : vector<1x32xf32>
    %284 = arith.mulf %279, %281 : vector<1x32xf32>
    %285 = arith.addf %283, %284 : vector<1x32xf32>
    %286 = math.tanh %285 : vector<1x32xf32>
    %287 = arith.mulf %282, %286 : vector<1x32xf32>
    %288 = arith.truncf %287 : vector<1x32xf32> to vector<1x32xbf16>
    %cst_103 = arith.constant dense<0.000000e+00> : vector<1x128xf32>
    %289 = tpu.matmul %288, %47, %cst_103 {dimension_numbers = #tpu.dot_dimension_numbers<[1], [0], [0], [1], [0, 0, 1, 1], [], []>} : vector<1x32xbf16>, vector<32x128xbf16>, vector<1x128xf32> -> vector<1x128xf32>
    %290 = arith.addf %37, %289 : vector<1x128xf32>
    %291 = arith.truncf %263 : vector<1x32xf32> to vector<1x32xbf16>
    %cst_104 = arith.constant dense<0.000000e+00> : vector<1x128xf32>
    %292 = tpu.matmul %291, %48, %cst_104 {dimension_numbers = #tpu.dot_dimension_numbers<[1], [0], [0], [1], [0, 0, 1, 1], [], []>} : vector<1x32xbf16>, vector<32x128xbf16>, vector<1x128xf32> -> vector<1x128xf32>
    %293 = arith.addf %290, %292 : vector<1x128xf32>
    %294 = arith.negf %293 : vector<1x128xf32>
    %295 = math.exp %294 : vector<1x128xf32>
    %cst_105 = arith.constant 1.000000e+00 : f32
    %296 = vector.broadcast %cst_105 : f32 to vector<1x128xf32>
    %297 = arith.addf %296, %295 : vector<1x128xf32>
    %298 = arith.divf %296, %297 : vector<1x128xf32>
    %299 = math.tanh %293 : vector<1x128xf32>
    %300 = vector.extract_strided_slice %298 {offsets = [0, 0], sizes = [1, 32], strides = [1, 1]} : vector<1x128xf32> to vector<1x32xf32>
    %301 = vector.extract_strided_slice %298 {offsets = [0, 32], sizes = [1, 32], strides = [1, 1]} : vector<1x128xf32> to vector<1x32xf32>
    %302 = vector.extract_strided_slice %299 {offsets = [0, 64], sizes = [1, 32], strides = [1, 1]} : vector<1x128xf32> to vector<1x32xf32>
    %303 = vector.extract_strided_slice %298 {offsets = [0, 96], sizes = [1, 32], strides = [1, 1]} : vector<1x128xf32> to vector<1x32xf32>
    %304 = arith.mulf %301, %261 : vector<1x32xf32>
    %305 = arith.mulf %300, %302 : vector<1x32xf32>
    %306 = arith.addf %304, %305 : vector<1x32xf32>
    %307 = math.tanh %306 : vector<1x32xf32>
    %308 = arith.mulf %303, %307 : vector<1x32xf32>
    %c5_106 = arith.constant 5 : index
    %c0_107 = arith.constant 0 : index
    %309 = vector.load %arg20[%c5_106, %c0_107] : memref<8x32xf32, #tpu.memory_space<vmem>>, vector<1x32xf32>
    tpu.vector_store %arg20[%c5_106, %c0_107], %287 {strides = array<i32>} : memref<8x32xf32, #tpu.memory_space<vmem>>, vector<1x32xf32>,
    %c5_108 = arith.constant 5 : index
    %c0_109 = arith.constant 0 : index
    %310 = vector.load %arg21[%c5_108, %c0_109] : memref<8x32xf32, #tpu.memory_space<vmem>>, vector<1x32xf32>
    tpu.vector_store %arg21[%c5_108, %c0_109], %308 {strides = array<i32>} : memref<8x32xf32, #tpu.memory_space<vmem>>, vector<1x32xf32>,
    %c6 = arith.constant 6 : index
    %c0_110 = arith.constant 0 : index
    %311 = vector.load %arg19[%c6, %c0_110] : memref<8x128xf32, #tpu.memory_space<vmem>>, vector<1x128xf32>
    %312 = arith.truncf %287 : vector<1x32xf32> to vector<1x32xbf16>
    %cst_111 = arith.constant dense<0.000000e+00> : vector<1x128xf32>
    %313 = tpu.matmul %312, %45, %cst_111 {dimension_numbers = #tpu.dot_dimension_numbers<[1], [0], [0], [1], [0, 0, 1, 1], [], []>} : vector<1x32xbf16>, vector<32x128xbf16>, vector<1x128xf32> -> vector<1x128xf32>
    %314 = arith.addf %311, %313 : vector<1x128xf32>
    %315 = arith.truncf %263 : vector<1x32xf32> to vector<1x32xbf16>
    %cst_112 = arith.constant dense<0.000000e+00> : vector<1x128xf32>
    %316 = tpu.matmul %315, %46, %cst_112 {dimension_numbers = #tpu.dot_dimension_numbers<[1], [0], [0], [1], [0, 0, 1, 1], [], []>} : vector<1x32xbf16>, vector<32x128xbf16>, vector<1x128xf32> -> vector<1x128xf32>
    %317 = arith.addf %314, %316 : vector<1x128xf32>
    %318 = arith.negf %317 : vector<1x128xf32>
    %319 = math.exp %318 : vector<1x128xf32>
    %cst_113 = arith.constant 1.000000e+00 : f32
    %320 = vector.broadcast %cst_113 : f32 to vector<1x128xf32>
    %321 = arith.addf %320, %319 : vector<1x128xf32>
    %322 = arith.divf %320, %321 : vector<1x128xf32>
    %323 = math.tanh %317 : vector<1x128xf32>
    %324 = vector.extract_strided_slice %322 {offsets = [0, 0], sizes = [1, 32], strides = [1, 1]} : vector<1x128xf32> to vector<1x32xf32>
    %325 = vector.extract_strided_slice %322 {offsets = [0, 32], sizes = [1, 32], strides = [1, 1]} : vector<1x128xf32> to vector<1x32xf32>
    %326 = vector.extract_strided_slice %323 {offsets = [0, 64], sizes = [1, 32], strides = [1, 1]} : vector<1x128xf32> to vector<1x32xf32>
    %327 = vector.extract_strided_slice %322 {offsets = [0, 96], sizes = [1, 32], strides = [1, 1]} : vector<1x128xf32> to vector<1x32xf32>
    %328 = arith.mulf %325, %285 : vector<1x32xf32>
    %329 = arith.mulf %324, %326 : vector<1x32xf32>
    %330 = arith.addf %328, %329 : vector<1x32xf32>
    %331 = math.tanh %330 : vector<1x32xf32>
    %332 = arith.mulf %327, %331 : vector<1x32xf32>
    %333 = arith.truncf %332 : vector<1x32xf32> to vector<1x32xbf16>
    %cst_114 = arith.constant dense<0.000000e+00> : vector<1x128xf32>
    %334 = tpu.matmul %333, %47, %cst_114 {dimension_numbers = #tpu.dot_dimension_numbers<[1], [0], [0], [1], [0, 0, 1, 1], [], []>} : vector<1x32xbf16>, vector<32x128xbf16>, vector<1x128xf32> -> vector<1x128xf32>
    %335 = arith.addf %37, %334 : vector<1x128xf32>
    %336 = arith.truncf %308 : vector<1x32xf32> to vector<1x32xbf16>
    %cst_115 = arith.constant dense<0.000000e+00> : vector<1x128xf32>
    %337 = tpu.matmul %336, %48, %cst_115 {dimension_numbers = #tpu.dot_dimension_numbers<[1], [0], [0], [1], [0, 0, 1, 1], [], []>} : vector<1x32xbf16>, vector<32x128xbf16>, vector<1x128xf32> -> vector<1x128xf32>
    %338 = arith.addf %335, %337 : vector<1x128xf32>
    %339 = arith.negf %338 : vector<1x128xf32>
    %340 = math.exp %339 : vector<1x128xf32>
    %cst_116 = arith.constant 1.000000e+00 : f32
    %341 = vector.broadcast %cst_116 : f32 to vector<1x128xf32>
    %342 = arith.addf %341, %340 : vector<1x128xf32>
    %343 = arith.divf %341, %342 : vector<1x128xf32>
    %344 = math.tanh %338 : vector<1x128xf32>
    %345 = vector.extract_strided_slice %343 {offsets = [0, 0], sizes = [1, 32], strides = [1, 1]} : vector<1x128xf32> to vector<1x32xf32>
    %346 = vector.extract_strided_slice %343 {offsets = [0, 32], sizes = [1, 32], strides = [1, 1]} : vector<1x128xf32> to vector<1x32xf32>
    %347 = vector.extract_strided_slice %344 {offsets = [0, 64], sizes = [1, 32], strides = [1, 1]} : vector<1x128xf32> to vector<1x32xf32>
    %348 = vector.extract_strided_slice %343 {offsets = [0, 96], sizes = [1, 32], strides = [1, 1]} : vector<1x128xf32> to vector<1x32xf32>
    %349 = arith.mulf %346, %306 : vector<1x32xf32>
    %350 = arith.mulf %345, %347 : vector<1x32xf32>
    %351 = arith.addf %349, %350 : vector<1x32xf32>
    %352 = math.tanh %351 : vector<1x32xf32>
    %353 = arith.mulf %348, %352 : vector<1x32xf32>
    %c6_117 = arith.constant 6 : index
    %c0_118 = arith.constant 0 : index
    %354 = vector.load %arg20[%c6_117, %c0_118] : memref<8x32xf32, #tpu.memory_space<vmem>>, vector<1x32xf32>
    tpu.vector_store %arg20[%c6_117, %c0_118], %332 {strides = array<i32>} : memref<8x32xf32, #tpu.memory_space<vmem>>, vector<1x32xf32>,
    %c6_119 = arith.constant 6 : index
    %c0_120 = arith.constant 0 : index
    %355 = vector.load %arg21[%c6_119, %c0_120] : memref<8x32xf32, #tpu.memory_space<vmem>>, vector<1x32xf32>
    tpu.vector_store %arg21[%c6_119, %c0_120], %353 {strides = array<i32>} : memref<8x32xf32, #tpu.memory_space<vmem>>, vector<1x32xf32>,
    %c7 = arith.constant 7 : index
    %c0_121 = arith.constant 0 : index
    %356 = vector.load %arg19[%c7, %c0_121] : memref<8x128xf32, #tpu.memory_space<vmem>>, vector<1x128xf32>
    %357 = arith.truncf %332 : vector<1x32xf32> to vector<1x32xbf16>
    %cst_122 = arith.constant dense<0.000000e+00> : vector<1x128xf32>
    %358 = tpu.matmul %357, %45, %cst_122 {dimension_numbers = #tpu.dot_dimension_numbers<[1], [0], [0], [1], [0, 0, 1, 1], [], []>} : vector<1x32xbf16>, vector<32x128xbf16>, vector<1x128xf32> -> vector<1x128xf32>
    %359 = arith.addf %356, %358 : vector<1x128xf32>
    %360 = arith.truncf %308 : vector<1x32xf32> to vector<1x32xbf16>
    %cst_123 = arith.constant dense<0.000000e+00> : vector<1x128xf32>
    %361 = tpu.matmul %360, %46, %cst_123 {dimension_numbers = #tpu.dot_dimension_numbers<[1], [0], [0], [1], [0, 0, 1, 1], [], []>} : vector<1x32xbf16>, vector<32x128xbf16>, vector<1x128xf32> -> vector<1x128xf32>
    %362 = arith.addf %359, %361 : vector<1x128xf32>
    %363 = arith.negf %362 : vector<1x128xf32>
    %364 = math.exp %363 : vector<1x128xf32>
    %cst_124 = arith.constant 1.000000e+00 : f32
    %365 = vector.broadcast %cst_124 : f32 to vector<1x128xf32>
    %366 = arith.addf %365, %364 : vector<1x128xf32>
    %367 = arith.divf %365, %366 : vector<1x128xf32>
    %368 = math.tanh %362 : vector<1x128xf32>
    %369 = vector.extract_strided_slice %367 {offsets = [0, 0], sizes = [1, 32], strides = [1, 1]} : vector<1x128xf32> to vector<1x32xf32>
    %370 = vector.extract_strided_slice %367 {offsets = [0, 32], sizes = [1, 32], strides = [1, 1]} : vector<1x128xf32> to vector<1x32xf32>
    %371 = vector.extract_strided_slice %368 {offsets = [0, 64], sizes = [1, 32], strides = [1, 1]} : vector<1x128xf32> to vector<1x32xf32>
    %372 = vector.extract_strided_slice %367 {offsets = [0, 96], sizes = [1, 32], strides = [1, 1]} : vector<1x128xf32> to vector<1x32xf32>
    %373 = arith.mulf %370, %330 : vector<1x32xf32>
    %374 = arith.mulf %369, %371 : vector<1x32xf32>
    %375 = arith.addf %373, %374 : vector<1x32xf32>
    %376 = math.tanh %375 : vector<1x32xf32>
    %377 = arith.mulf %372, %376 : vector<1x32xf32>
    %378 = arith.truncf %377 : vector<1x32xf32> to vector<1x32xbf16>
    %cst_125 = arith.constant dense<0.000000e+00> : vector<1x128xf32>
    %379 = tpu.matmul %378, %47, %cst_125 {dimension_numbers = #tpu.dot_dimension_numbers<[1], [0], [0], [1], [0, 0, 1, 1], [], []>} : vector<1x32xbf16>, vector<32x128xbf16>, vector<1x128xf32> -> vector<1x128xf32>
    %380 = arith.addf %37, %379 : vector<1x128xf32>
    %381 = arith.truncf %353 : vector<1x32xf32> to vector<1x32xbf16>
    %cst_126 = arith.constant dense<0.000000e+00> : vector<1x128xf32>
    %382 = tpu.matmul %381, %48, %cst_126 {dimension_numbers = #tpu.dot_dimension_numbers<[1], [0], [0], [1], [0, 0, 1, 1], [], []>} : vector<1x32xbf16>, vector<32x128xbf16>, vector<1x128xf32> -> vector<1x128xf32>
    %383 = arith.addf %380, %382 : vector<1x128xf32>
    %384 = arith.negf %383 : vector<1x128xf32>
    %385 = math.exp %384 : vector<1x128xf32>
    %cst_127 = arith.constant 1.000000e+00 : f32
    %386 = vector.broadcast %cst_127 : f32 to vector<1x128xf32>
    %387 = arith.addf %386, %385 : vector<1x128xf32>
    %388 = arith.divf %386, %387 : vector<1x128xf32>
    %389 = math.tanh %383 : vector<1x128xf32>
    %390 = vector.extract_strided_slice %388 {offsets = [0, 0], sizes = [1, 32], strides = [1, 1]} : vector<1x128xf32> to vector<1x32xf32>
    %391 = vector.extract_strided_slice %388 {offsets = [0, 32], sizes = [1, 32], strides = [1, 1]} : vector<1x128xf32> to vector<1x32xf32>
    %392 = vector.extract_strided_slice %389 {offsets = [0, 64], sizes = [1, 32], strides = [1, 1]} : vector<1x128xf32> to vector<1x32xf32>
    %393 = vector.extract_strided_slice %388 {offsets = [0, 96], sizes = [1, 32], strides = [1, 1]} : vector<1x128xf32> to vector<1x32xf32>
    %394 = arith.mulf %391, %351 : vector<1x32xf32>
    %395 = arith.mulf %390, %392 : vector<1x32xf32>
    %396 = arith.addf %394, %395 : vector<1x32xf32>
    %397 = math.tanh %396 : vector<1x32xf32>
    %398 = arith.mulf %393, %397 : vector<1x32xf32>
    %c7_128 = arith.constant 7 : index
    %c0_129 = arith.constant 0 : index
    %399 = vector.load %arg20[%c7_128, %c0_129] : memref<8x32xf32, #tpu.memory_space<vmem>>, vector<1x32xf32>
    tpu.vector_store %arg20[%c7_128, %c0_129], %377 {strides = array<i32>} : memref<8x32xf32, #tpu.memory_space<vmem>>, vector<1x32xf32>,
    %c7_130 = arith.constant 7 : index
    %c0_131 = arith.constant 0 : index
    %400 = vector.load %arg21[%c7_130, %c0_131] : memref<8x32xf32, #tpu.memory_space<vmem>>, vector<1x32xf32>
    tpu.vector_store %arg21[%c7_130, %c0_131], %398 {strides = array<i32>} : memref<8x32xf32, #tpu.memory_space<vmem>>, vector<1x32xf32>,
    %c0_132 = arith.constant 0 : index
    %c0_133 = arith.constant 0 : index
    %401 = vector.load %arg1[%c0_132, %c0_133] : memref<8x16xf32, #tpu.memory_space<vmem>>, vector<8x16xf32>
    %c0_134 = arith.constant 0 : index
    %c0_135 = arith.constant 0 : index
    %402 = vector.load %arg20[%c0_134, %c0_135] : memref<8x32xf32, #tpu.memory_space<vmem>>, vector<8x32xf32>
    %c0_136 = arith.constant 0 : index
    %c0_137 = arith.constant 0 : index
    %403 = vector.load %arg21[%c0_136, %c0_137] : memref<8x32xf32, #tpu.memory_space<vmem>>, vector<8x32xf32>
    %cst_138 = arith.constant dense<0.000000e+00> : vector<8x16xf32>
    %404 = tpu.matmul %402, %4, %cst_138 {dimension_numbers = #tpu.dot_dimension_numbers<[1], [0], [0], [1], [0, 0, 1, 1], [], []>} : vector<8x32xf32>, vector<32x16xf32>, vector<8x16xf32> -> vector<8x16xf32>
    %405 = vector.broadcast %6 : vector<1x16xf32> to vector<8x16xf32>
    %406 = arith.addf %404, %405 : vector<8x16xf32>
    %cst_139 = arith.constant dense<0.000000e+00> : vector<8x32xf32>
    %407 = tpu.matmul %403, %5, %cst_139 {dimension_numbers = #tpu.dot_dimension_numbers<[1], [0], [0], [1], [0, 0, 1, 1], [], []>} : vector<8x32xf32>, vector<32x32xf32>, vector<8x32xf32> -> vector<8x32xf32>
    %408 = vector.broadcast %7 : vector<1x32xf32> to vector<8x32xf32>
    %409 = arith.addf %407, %408 : vector<8x32xf32>
    %410 = vector.extract_strided_slice %401 {offsets = [0, 0], sizes = [1, 16], strides = [1, 1]} : vector<8x16xf32> to vector<1x16xf32>
    %411 = math.absf %410 : vector<1x16xf32>
    %412 = vector.shape_cast %411 : vector<1x16xf32> to vector<1x1x16xf32>
    %cst_140 = arith.constant dense<0.000000e+00> : vector<1xf32>
    %413 = vector.multi_reduction <add>, %412, %cst_140 [1, 2] : vector<1x1x16xf32> to vector<1xf32>
    %414 = vector.shape_cast %413 : vector<1xf32> to vector<1x1x1xf32>
    %415 = vector.extract %414[0, 0, 0] : f32 from vector<1x1x1xf32>
    %416 = vector.broadcast %415 : f32 to vector<1x1xf32>
    %417 = vector.extract_strided_slice %402 {offsets = [0, 0], sizes = [1, 32], strides = [1, 1]} : vector<8x32xf32> to vector<1x32xf32>
    %418 = math.absf %417 : vector<1x32xf32>
    %419 = vector.shape_cast %418 : vector<1x32xf32> to vector<1x1x32xf32>
    %cst_141 = arith.constant dense<0.000000e+00> : vector<1xf32>
    %420 = vector.multi_reduction <add>, %419, %cst_141 [1, 2] : vector<1x1x32xf32> to vector<1xf32>
    %421 = vector.shape_cast %420 : vector<1xf32> to vector<1x1x1xf32>
    %422 = vector.extract %421[0, 0, 0] : f32 from vector<1x1x1xf32>
    %423 = vector.broadcast %422 : f32 to vector<1x1xf32>
    %424 = vector.extract_strided_slice %401 {offsets = [1, 0], sizes = [7, 16], strides = [1, 1]} : vector<8x16xf32> to vector<7x16xf32>
    %425 = vector.extract_strided_slice %406 {offsets = [0, 0], sizes = [7, 16], strides = [1, 1]} : vector<8x16xf32> to vector<7x16xf32>
    %426 = arith.subf %424, %425 : vector<7x16xf32>
    %427 = math.absf %426 : vector<7x16xf32>
    %428 = vector.shape_cast %427 : vector<7x16xf32> to vector<1x7x16xf32>
    %cst_142 = arith.constant dense<0.000000e+00> : vector<1xf32>
    %429 = vector.multi_reduction <add>, %428, %cst_142 [1, 2] : vector<1x7x16xf32> to vector<1xf32>
    %430 = vector.shape_cast %429 : vector<1xf32> to vector<1x1x1xf32>
    %431 = vector.extract %430[0, 0, 0] : f32 from vector<1x1x1xf32>
    %432 = vector.broadcast %431 : f32 to vector<1x1xf32>
    %433 = arith.addf %416, %432 : vector<1x1xf32>
    %434 = vector.extract_strided_slice %402 {offsets = [1, 0], sizes = [7, 32], strides = [1, 1]} : vector<8x32xf32> to vector<7x32xf32>
    %435 = vector.extract_strided_slice %409 {offsets = [0, 0], sizes = [7, 32], strides = [1, 1]} : vector<8x32xf32> to vector<7x32xf32>
    %436 = arith.subf %434, %435 : vector<7x32xf32>
    %437 = math.absf %436 : vector<7x32xf32>
    %438 = vector.shape_cast %437 : vector<7x32xf32> to vector<1x7x32xf32>
    %cst_143 = arith.constant dense<0.000000e+00> : vector<1xf32>
    %439 = vector.multi_reduction <add>, %438, %cst_143 [1, 2] : vector<1x7x32xf32> to vector<1xf32>
    %440 = vector.shape_cast %439 : vector<1xf32> to vector<1x1x1xf32>
    %441 = vector.extract %440[0, 0, 0] : f32 from vector<1x1x1xf32>
    %442 = vector.broadcast %441 : f32 to vector<1x1xf32>
    %443 = arith.addf %423, %442 : vector<1x1xf32>
    %c0_144 = arith.constant 0 : index
    %444 = memref.load %arg0[%c0_144] : memref<1xf32, #tpu.memory_space<smem>>
    %445 = vector.broadcast %444 : f32 to vector<1x1xf32>
    %446 = arith.mulf %445, %443 : vector<1x1xf32>
    %447 = arith.addf %433, %446 : vector<1x1xf32>
    %c0_145 = arith.constant 0 : index
    %c0_146 = arith.constant 0 : index
    %448 = vector.load %arg18[%c0_145, %c0_146] : memref<1x1xf32, #tpu.memory_space<vmem>>, vector<1x1xf32>
    tpu.vector_store %arg18[%c0_145, %c0_146], %447 {strides = array<i32>} : memref<1x1xf32, #tpu.memory_space<vmem>>, vector<1x1xf32>,
    return
  }
}

</mosaic_0001>

<llo_original>
// kernel: tpu_custom_call.1
$region0: #{tpu_custom_call.1}
  #allocation0 [shape = 'u32[]', space=smem, size = 0x4, offset = 0x4, fixed_abs, tag = 'smem constant byte address 0x4 - core index']
  #allocation1 [shape = 'u32[144,128]{1,0:T(1,128)}', space=vmem, size = 0x12000, scoped, tag = 'internal scratch']
  #allocation2 [shape = 'f32[8,128]{1,0:T(8,128)}', space=vmem, size = 0x1000, scoped, tag = 'scratch operand']
  #allocation3 [shape = 'f32[8,32]{1,0:T(8,128)}', space=vmem, size = 0x1000, scoped, tag = 'scratch operand']
  #allocation4 [shape = 'f32[8,32]{1,0:T(8,128)}', space=vmem, size = 0x1000, scoped, tag = 'scratch operand']
  #allocation5 [shape = 'f32[1]{0:T(128)S(6)}', space=smem, size = 0x200, scoped, tag = 'scoped memory for tpu_custom_call.1']
  %s0 = inlined_call_operand.<no memory space> [shape: f32[1], index: 0, kind: input, shape index: {}]
  %s1 = inlined_call_operand.hbm [shape: f32[8,16], index: 1, kind: input, shape index: {}]
  %s2 = inlined_call_operand.hbm [shape: f32[16,32], index: 2, kind: input, shape index: {}]
  %s3 = inlined_call_operand.hbm [shape: f32[1,32], index: 3, kind: input, shape index: {}]
  %s4 = inlined_call_operand.hbm [shape: f32[64,128], index: 4, kind: input, shape index: {}]
  %s5 = inlined_call_operand.vmem [shape: f32[32,128], index: 5, kind: input, shape index: {}]
  %s6 = inlined_call_operand.hbm [shape: f32[1,128], index: 6, kind: input, shape index: {}]
  %s7 = inlined_call_operand.hbm [shape: f32[1,128], index: 7, kind: input, shape index: {}]
  %s8 = inlined_call_operand.vmem [shape: f32[32,16], index: 8, kind: input, shape index: {}]
  %s9 = inlined_call_operand.hbm [shape: f32[1,16], index: 9, kind: input, shape index: {}]
  %s10 = inlined_call_operand.vmem [shape: f32[32,32], index: 10, kind: input, shape index: {}]
  %s11 = inlined_call_operand.vmem [shape: f32[1,32], index: 11, kind: input, shape index: {}]
  %s12 = inlined_call_operand.hbm [shape: f32[32,128], index: 12, kind: input, shape index: {}]
  %s13 = inlined_call_operand.hbm [shape: f32[32,128], index: 13, kind: input, shape index: {}]
  %s14 = inlined_call_operand.vmem [shape: f32[1,128], index: 14, kind: input, shape index: {}]
  %s15 = inlined_call_operand.vmem [shape: f32[1,128], index: 15, kind: input, shape index: {}]
  %s16 = inlined_call_operand.hbm [shape: f32[32,32], index: 16, kind: input, shape index: {}]
  %s17 = inlined_call_operand.vmem [shape: f32[1,32], index: 17, kind: input, shape index: {}]
  %s18 = inlined_call_operand.hbm [shape: f32[1,1], index: 18, kind: output, shape index: {}]
  %s19 = sld [smem:[#allocation0]]
  $region122: #{tpu_custom_call.1} parent=0
    _
  %s21 = ssub.s32 1, %s19
  %s22 = scalar_select 0, %s21, %s19
  %23 = sst [smem:[#allocation5]] %s0
  $region1: #{tpu_custom_call.1} parent=0
    #allocation6 [shape = 'u8[4096]{0}', space=vmem, size = 0x1000, scoped, tag = 'input window, operand 1, single buffered']
    #allocation7 [shape = 's32[1]{0}', space=sflag, size = 0x4, scoped, tag = 'scoped memory for tpu_custom_call.1']
    #allocation8 [shape = 's32[1]{0}', space=sflag, size = 0x4, scoped, tag = 'scoped memory for tpu_custom_call.1']
    #allocation9 [shape = 'u8[8192]{0}', space=vmem, size = 0x2000, scoped, tag = 'input window, operand 2, single buffered']
    #allocation10 [shape = 's32[1]{0}', space=sflag, size = 0x4, scoped, tag = 'scoped memory for tpu_custom_call.1']
    #allocation11 [shape = 'u8[512]{0}', space=vmem, size = 0x400, scoped, tag = 'input window, operand 3, single buffered']
    #allocation12 [shape = 'u8[32768]{0}', space=vmem, size = 0x8000, scoped, tag = 'input window, operand 4, single buffered']
    #allocation13 [shape = 's32[1]{0}', space=sflag, size = 0x4, scoped, tag = 'scoped memory for tpu_custom_call.1']
    #allocation14 [shape = 'u8[512]{0}', space=vmem, size = 0x400, scoped, tag = 'input window, operand 6, single buffered']
    #allocation15 [shape = 'u8[512]{0}', space=vmem, size = 0x400, scoped, tag = 'input window, operand 7, single buffered']
    #allocation16 [shape = 's32[1]{0}', space=sflag, size = 0x4, scoped, tag = 'scoped memory for tpu_custom_call.1']
    #allocation17 [shape = 'u8[512]{0}', space=vmem, size = 0x400, scoped, tag = 'input window, operand 9, single buffered']
    #allocation18 [shape = 'u8[16384]{0}', space=vmem, size = 0x4000, scoped, tag = 'input window, operand 12, single buffered']
    #allocation19 [shape = 's32[1]{0}', space=sflag, size = 0x4, scoped, tag = 'scoped memory for tpu_custom_call.1']
    #allocation20 [shape = 'u8[16384]{0}', space=vmem, size = 0x4000, scoped, tag = 'input window, operand 13, single buffered']
    #allocation21 [shape = 'u8[16384]{0}', space=vmem, size = 0x4000, scoped, tag = 'input window, operand 16, single buffered']
    #allocation22 [shape = 's32[1]{0}', space=sflag, size = 0x4, scoped, tag = 'scoped memory for tpu_custom_call.1']
    #allocation23 [shape = 'u8[512]{0}', space=vmem, size = 0x400, scoped, tag = 'output window, operand 0, single buffered']
    %24 = vsyncpa [#allocation7], 0
    %25 = vsyncpa [#allocation10], 0
    %26 = vsyncpa [#allocation13], 0
    %27 = vsyncpa [#allocation16], 0
    %28 = vsyncpa [#allocation19], 0
    %29 = vsyncpa [#allocation22], 0
    %30 = vsyncpa [#allocation8], 0
    // Predicated region
    $region2: #{tpu_custom_call.1} parent=1 // pred_check
      _
    $region3: #{tpu_custom_call.1} parent=1 // pred_check_branch
      %32 = sbr.rel (0) target = $region5
    $region4: #{tpu_custom_call.1} parent=1 // pred_region
      _
    $region5: #{tpu_custom_call.1} parent=1 // pred_fallthru
      _
    // Predicated region
    $region6: #{tpu_custom_call.1} parent=1 // pred_check
      _
    $region7: #{tpu_custom_call.1} parent=1 // pred_check_branch
      %34 = sbr.rel (0) target = $region9
    $region8: #{tpu_custom_call.1} parent=1 // pred_region
      %s36 = ssub.s32 128, 128
      %37 = vsyncadd [#allocation7], %s36
      %s39 = sshll.u32 [#allocation6], 4
      %s40 = int_to_ptr.vmem [resolvable:$true] %s39
      %42 = dma.hbm_to_vmem [thread:$0]  %s1, 128, %s40, [#allocation7]
    $region9: #{tpu_custom_call.1} parent=1 // pred_fallthru
      _
    // Predicated region
    $region10: #{tpu_custom_call.1} parent=1 // pred_check
      _
    $region11: #{tpu_custom_call.1} parent=1 // pred_check_branch
      %44 = sbr.rel (0) target = $region13
    $region12: #{tpu_custom_call.1} parent=1 // pred_region
      %s46 = ssub.s32 256, 256
      %47 = vsyncadd [#allocation10], %s46
      %s48 = sshll.u32 [#allocation9], 4
      %s49 = int_to_ptr.vmem [resolvable:$true] %s48
      %54 = dma.hbm_to_vmem [thread:$0]  %s2, 256, %s49, [#allocation10], 128, 128, 8
    $region13: #{tpu_custom_call.1} parent=1 // pred_fallthru
      _
    // Predicated region
    $region14: #{tpu_custom_call.1} parent=1 // pred_check
      _
    $region15: #{tpu_custom_call.1} parent=1 // pred_check_branch
      %56 = sbr.rel (0) target = $region17
    $region16: #{tpu_custom_call.1} parent=1 // pred_region
      %s58 = ssub.s32 16, 16
      %59 = vsyncadd [#allocation10], %s58
      %s61 = sshll.u32 [#allocation11], 4
      %s62 = int_to_ptr.vmem [resolvable:$true] %s61
      %64 = dma.hbm_to_vmem [thread:$0]  %s3, 16, %s62, [#allocation10]
    $region17: #{tpu_custom_call.1} parent=1 // pred_fallthru
      _
    // Predicated region
    $region18: #{tpu_custom_call.1} parent=1 // pred_check
      _
    $region19: #{tpu_custom_call.1} parent=1 // pred_check_branch
      %66 = sbr.rel (0) target = $region21
    $region20: #{tpu_custom_call.1} parent=1 // pred_region
      %s68 = ssub.s32 1024, 1024
      %69 = vsyncadd [#allocation13], %s68
      %s70 = sshll.u32 [#allocation12], 4
      %s71 = int_to_ptr.vmem [resolvable:$true] %s70
      %76 = dma.hbm_to_vmem [thread:$0]  %s4, 1024, %s71, [#allocation13], 128, 128, 8
    $region21: #{tpu_custom_call.1} parent=1 // pred_fallthru
      _
    // Predicated region
    $region22: #{tpu_custom_call.1} parent=1 // pred_check
      _
    $region23: #{tpu_custom_call.1} parent=1 // pred_check_branch
      %78 = sbr.rel (0) target = $region25
    $region24: #{tpu_custom_call.1} parent=1 // pred_region
      _
    $region25: #{tpu_custom_call.1} parent=1 // pred_fallthru
      _
    // Predicated region
    $region26: #{tpu_custom_call.1} parent=1 // pred_check
      _
    $region27: #{tpu_custom_call.1} parent=1 // pred_check_branch
      %80 = sbr.rel (0) target = $region29
    $region28: #{tpu_custom_call.1} parent=1 // pred_region
      %s82 = ssub.s32 16, 16
      %83 = vsyncadd [#allocation13], %s82
      %s85 = sshll.u32 [#allocation14], 4
      %s86 = int_to_ptr.vmem [resolvable:$true] %s85
      %88 = dma.hbm_to_vmem [thread:$0]  %s6, 16, %s86, [#allocation13]
    $region29: #{tpu_custom_call.1} parent=1 // pred_fallthru
      _
    // Predicated region
    $region30: #{tpu_custom_call.1} parent=1 // pred_check
      _
    $region31: #{tpu_custom_call.1} parent=1 // pred_check_branch
      %90 = sbr.rel (0) target = $region33
    $region32: #{tpu_custom_call.1} parent=1 // pred_region
      %s92 = ssub.s32 16, 16
      %93 = vsyncadd [#allocation16], %s92
      %s95 = sshll.u32 [#allocation15], 4
      %s96 = int_to_ptr.vmem [resolvable:$true] %s95
      %98 = dma.hbm_to_vmem [thread:$0]  %s7, 16, %s96, [#allocation16]
    $region33: #{tpu_custom_call.1} parent=1 // pred_fallthru
      _
    // Predicated region
    $region34: #{tpu_custom_call.1} parent=1 // pred_check
      _
    $region35: #{tpu_custom_call.1} parent=1 // pred_check_branch
      %100 = sbr.rel (0) target = $region37
    $region36: #{tpu_custom_call.1} parent=1 // pred_region
      _
    $region37: #{tpu_custom_call.1} parent=1 // pred_fallthru
      _
    // Predicated region
    $region38: #{tpu_custom_call.1} parent=1 // pred_check
      _
    $region39: #{tpu_custom_call.1} parent=1 // pred_check_branch
      %102 = sbr.rel (0) target = $region41
    $region40: #{tpu_custom_call.1} parent=1 // pred_region
      %s104 = ssub.s32 16, 16
      %105 = vsyncadd [#allocation16], %s104
      %s107 = sshll.u32 [#allocation17], 4
      %s108 = int_to_ptr.vmem [resolvable:$true] %s107
      %110 = dma.hbm_to_vmem [thread:$0]  %s9, 16, %s108, [#allocation16]
    $region41: #{tpu_custom_call.1} parent=1 // pred_fallthru
      _
    // Predicated region
    $region42: #{tpu_custom_call.1} parent=1 // pred_check
      _
    $region43: #{tpu_custom_call.1} parent=1 // pred_check_branch
      %112 = sbr.rel (0) target = $region45
    $region44: #{tpu_custom_call.1} parent=1 // pred_region
      _
    $region45: #{tpu_custom_call.1} parent=1 // pred_fallthru
      _
    // Predicated region
    $region46: #{tpu_custom_call.1} parent=1 // pred_check
      _
    $region47: #{tpu_custom_call.1} parent=1 // pred_check_branch
      %114 = sbr.rel (0) target = $region49
    $region48: #{tpu_custom_call.1} parent=1 // pred_region
      _
    $region49: #{tpu_custom_call.1} parent=1 // pred_fallthru
      _
    // Predicated region
    $region50: #{tpu_custom_call.1} parent=1 // pred_check
      _
    $region51: #{tpu_custom_call.1} parent=1 // pred_check_branch
      %116 = sbr.rel (0) target = $region53
    $region52: #{tpu_custom_call.1} parent=1 // pred_region
      %s118 = ssub.s32 512, 512
      %119 = vsyncadd [#allocation19], %s118
      %s120 = sshll.u32 [#allocation18], 4
      %s121 = int_to_ptr.vmem [resolvable:$true] %s120
      %126 = dma.hbm_to_vmem [thread:$0]  %s12, 512, %s121, [#allocation19], 128, 128, 8
    $region53: #{tpu_custom_call.1} parent=1 // pred_fallthru
      _
    // Predicated region
    $region54: #{tpu_custom_call.1} parent=1 // pred_check
      _
    $region55: #{tpu_custom_call.1} parent=1 // pred_check_branch
      %128 = sbr.rel (0) target = $region57
    $region56: #{tpu_custom_call.1} parent=1 // pred_region
      %s130 = ssub.s32 512, 512
      %131 = vsyncadd [#allocation19], %s130
      %s132 = sshll.u32 [#allocation20], 4
      %s133 = int_to_ptr.vmem [resolvable:$true] %s132
      %138 = dma.hbm_to_vmem [thread:$0]  %s13, 512, %s133, [#allocation19], 128, 128, 8
    $region57: #{tpu_custom_call.1} parent=1 // pred_fallthru
      _
    // Predicated region
    $region58: #{tpu_custom_call.1} parent=1 // pred_check
      _
    $region59: #{tpu_custom_call.1} parent=1 // pred_check_branch
      %140 = sbr.rel (0) target = $region61
    $region60: #{tpu_custom_call.1} parent=1 // pred_region
      _
    $region61: #{tpu_custom_call.1} parent=1 // pred_fallthru
      _
    // Predicated region
    $region62: #{tpu_custom_call.1} parent=1 // pred_check
      _
    $region63: #{tpu_custom_call.1} parent=1 // pred_check_branch
      %142 = sbr.rel (0) target = $region65
    $region64: #{tpu_custom_call.1} parent=1 // pred_region
      _
    $region65: #{tpu_custom_call.1} parent=1 // pred_fallthru
      _
    // Predicated region
    $region66: #{tpu_custom_call.1} parent=1 // pred_check
      _
    $region67: #{tpu_custom_call.1} parent=1 // pred_check_branch
      %144 = sbr.rel (0) target = $region69
    $region68: #{tpu_custom_call.1} parent=1 // pred_region
      %s146 = ssub.s32 512, 512
      %147 = vsyncadd [#allocation22], %s146
      %s148 = sshll.u32 [#allocation21], 4
      %s149 = int_to_ptr.vmem [resolvable:$true] %s148
      %154 = dma.hbm_to_vmem [thread:$0]  %s16, 512, %s149, [#allocation22], 128, 128, 8
    $region69: #{tpu_custom_call.1} parent=1 // pred_fallthru
      _
    // Predicated region
    $region70: #{tpu_custom_call.1} parent=1 // pred_check
      _
    $region71: #{tpu_custom_call.1} parent=1 // pred_check_branch
      %156 = sbr.rel (0) target = $region73
    $region72: #{tpu_custom_call.1} parent=1 // pred_region
      _
    $region73: #{tpu_custom_call.1} parent=1 // pred_fallthru
      _
    // Predicated region
    $region74: #{tpu_custom_call.1} parent=1 // pred_check
      _
    $region75: #{tpu_custom_call.1} parent=1 // pred_check_branch
      %158 = sbr.rel (0) target = $region77
    $region76: #{tpu_custom_call.1} parent=1 // pred_region
      %159 = dma.done [#allocation7], 128
    $region77: #{tpu_custom_call.1} parent=1 // pred_fallthru
      _
    // Predicated region
    $region78: #{tpu_custom_call.1} parent=1 // pred_check
      _
    $region79: #{tpu_custom_call.1} parent=1 // pred_check_branch
      %161 = sbr.rel (0) target = $region81
    $region80: #{tpu_custom_call.1} parent=1 // pred_region
      %162 = dma.done [#allocation10], 256
    $region81: #{tpu_custom_call.1} parent=1 // pred_fallthru
      _
    // Predicated region
    $region82: #{tpu_custom_call.1} parent=1 // pred_check
      _
    $region83: #{tpu_custom_call.1} parent=1 // pred_check_branch
      %164 = sbr.rel (0) target = $region85
    $region84: #{tpu_custom_call.1} parent=1 // pred_region
      %165 = dma.done [#allocation10], 16
    $region85: #{tpu_custom_call.1} parent=1 // pred_fallthru
      _
    // Predicated region
    $region86: #{tpu_custom_call.1} parent=1 // pred_check
      _
    $region87: #{tpu_custom_call.1} parent=1 // pred_check_branch
      %167 = sbr.rel (0) target = $region89
    $region88: #{tpu_custom_call.1} parent=1 // pred_region
      %168 = dma.done [#allocation13], 1024
    $region89: #{tpu_custom_call.1} parent=1 // pred_fallthru
      _
    // Predicated region
    $region90: #{tpu_custom_call.1} parent=1 // pred_check
      _
    $region91: #{tpu_custom_call.1} parent=1 // pred_check_branch
      %170 = sbr.rel (0) target = $region93
    $region92: #{tpu_custom_call.1} parent=1 // pred_region
      %171 = dma.done [#allocation13], 16
    $region93: #{tpu_custom_call.1} parent=1 // pred_fallthru
      _
    // Predicated region
    $region94: #{tpu_custom_call.1} parent=1 // pred_check
      _
    $region95: #{tpu_custom_call.1} parent=1 // pred_check_branch
      %173 = sbr.rel (0) target = $region97
    $region96: #{tpu_custom_call.1} parent=1 // pred_region
      %174 = dma.done [#allocation16], 16
    $region97: #{tpu_custom_call.1} parent=1 // pred_fallthru
      _
    // Predicated region
    $region98: #{tpu_custom_call.1} parent=1 // pred_check
      _
    $region99: #{tpu_custom_call.1} parent=1 // pred_check_branch
      %176 = sbr.rel (0) target = $region101
    $region100: #{tpu_custom_call.1} parent=1 // pred_region
      %177 = dma.done [#allocation16], 16
    $region101: #{tpu_custom_call.1} parent=1 // pred_fallthru
      _
    // Predicated region
    $region102: #{tpu_custom_call.1} parent=1 // pred_check
      _
    $region103: #{tpu_custom_call.1} parent=1 // pred_check_branch
      %179 = sbr.rel (0) target = $region105
    $region104: #{tpu_custom_call.1} parent=1 // pred_region
      %180 = dma.done [#allocation19], 512
    $region105: #{tpu_custom_call.1} parent=1 // pred_fallthru
      _
    // Predicated region
    $region106: #{tpu_custom_call.1} parent=1 // pred_check
      _
    $region107: #{tpu_custom_call.1} parent=1 // pred_check_branch
      %182 = sbr.rel (0) target = $region109
    $region108: #{tpu_custom_call.1} parent=1 // pred_region
      %183 = dma.done [#allocation19], 512
    $region109: #{tpu_custom_call.1} parent=1 // pred_fallthru
      _
    // Predicated region
    $region110: #{tpu_custom_call.1} parent=1 // pred_check
      _
    $region111: #{tpu_custom_call.1} parent=1 // pred_check_branch
      %185 = sbr.rel (0) target = $region113
    $region112: #{tpu_custom_call.1} parent=1 // pred_region
      %186 = dma.done [#allocation22], 512
    $region113: #{tpu_custom_call.1} parent=1 // pred_fallthru
      _
    %v188 = vld [vmem:[#allocation12] sm:$0xff]
    %v189 = vld [vmem:[#allocation12 + $0x8] sm:$0xff]
    %v190 = vld [vmem:[#allocation12 + $0x10] sm:$0xff]
    %v191 = vld [vmem:[#allocation12 + $0x18] sm:$0xff]
    %v192 = vld [vmem:[#allocation12 + $0x20] sm:$0xff]
    %v193 = vld [vmem:[#allocation12 + $0x28] sm:$0xff]
    %v194 = vld [vmem:[#allocation12 + $0x30] sm:$0xff]
    %v195 = vld [vmem:[#allocation12 + $0x38] sm:$0xff]
    %v196 = vld [vmem:[#allocation18] sm:$0xff]
    %v197 = vld [vmem:[#allocation18 + $0x8] sm:$0xff]
    %v198 = vld [vmem:[#allocation18 + $0x10] sm:$0xff]
    %v199 = vld [vmem:[#allocation18 + $0x18] sm:$0xff]
    %v200 = vld [vmem:[%s8] sm:$0xff]
    %v201 = vld [vmem:[%s8 + $0x8] sm:$0xff]
    %v202 = vld [vmem:[%s8 + $0x10] sm:$0xff]
    %v203 = vld [vmem:[%s8 + $0x18] sm:$0xff]
    %v204 = vld [vmem:[#allocation21] sm:$0xff]
    %v205 = vld [vmem:[#allocation21 + $0x8] sm:$0xff]
    %v206 = vld [vmem:[#allocation21 + $0x10] sm:$0xff]
    %v207 = vld [vmem:[#allocation21 + $0x18] sm:$0xff]
    %v208 = vld [vmem:[#allocation17] sm:$0x1]
    %v209 = vld [vmem:[%s17] sm:$0x1]
    %v210 = vld [vmem:[#allocation9] sm:$0xff]
    %v211 = vld [vmem:[#allocation9 + $0x8] sm:$0xff]
    %vm212 = vcmask 261120
    %v214 = vsel %vm212, %v210, 0
    %v217 = vsel %vm212, %v211, 0
    %219 = vmatprep.subr.mxu0 0.0
    %220 = vmatpush1.msra.mxu0 0.0
    %221 = vmatprep.subr.mxu0 0.0
    %222 = vmatpush1.msra.mxu0 0.0
    %223 = vmatprep.subr.mxu0 0.0
    %224 = vmatpush1.msra.mxu0 0.0
    %225 = vmatprep.subr.mxu0 0.0
    %226 = vmatpush1.msra.mxu0 0.0
    %227 = vmatprep.subr.mxu0 0.0
    %228 = vmatpush1.msra.mxu0 0.0
    %229 = vmatprep.subr.mxu0 0.0
    %230 = vmatpush1.msra.mxu0 0.0
    %231 = vmatprep.subr.mxu0 0.0
    %232 = vmatpush1.msra.mxu0 0.0
    %233 = vmatprep.subr.mxu0 0.0
    %234 = vmatpush1.msra.mxu0 0.0
    %235 = vmatprep.subr.mxu0 0.0
    %236 = vmatpush1.msra.mxu0 0.0
    %237 = vmatprep.subr.mxu0 0.0
    %238 = vmatpush1.msra.mxu0 0.0
    %239 = vmatprep.subr.mxu0 0.0
    %240 = vmatpush1.msra.mxu0 0.0
    %241 = vmatprep.subr.mxu0 0.0
    %242 = vmatpush1.msra.mxu0 0.0
    %243 = vmatprep.subr.mxu0 0.0
    %244 = vmatpush1.msra.mxu0 %v191
    %245 = vmatprep.subr.mxu0 0.0
    %246 = vmatpush1.msra.mxu0 %v190
    %247 = vmatprep.subr.mxu0 0.0
    %248 = vmatpush1.msra.mxu0 %v189
    %249 = vmatprep.subr.mxu0 0.0
    %250 = vmatpush1.msra.mxu0 %v188
    %251 = vmatprep.subr.mxu0 0.0
    %252 = vmatpush2.msra.mxu0 0.0
    %253 = vmatprep.subr.mxu0 0.0
    %254 = vmatpush2.msra.mxu0 0.0
    %255 = vmatprep.subr.mxu0 0.0
    %256 = vmatpush2.msra.mxu0 0.0
    %257 = vmatprep.subr.mxu0 0.0
    %258 = vmatpush2.msra.mxu0 0.0
    %259 = vmatprep.subr.mxu0 0.0
    %260 = vmatpush2.msra.mxu0 0.0
    %261 = vmatprep.subr.mxu0 0.0
    %262 = vmatpush2.msra.mxu0 0.0
    %263 = vmatprep.subr.mxu0 0.0
    %264 = vmatpush2.msra.mxu0 0.0
    %265 = vmatprep.subr.mxu0 0.0
    %266 = vmatpush2.msra.mxu0 0.0
    %267 = vmatprep.subr.mxu0 0.0
    %268 = vmatpush2.msra.mxu0 0.0
    %269 = vmatprep.subr.mxu0 0.0
    %270 = vmatpush2.msra.mxu0 0.0
    %271 = vmatprep.subr.mxu0 0.0
    %272 = vmatpush2.msra.mxu0 0.0
    %273 = vmatprep.subr.mxu0 0.0
    %274 = vmatpush2.msra.mxu0 0.0
    %275 = vmatprep.subr.mxu0 0.0
    %276 = vmatpush2.msra.mxu0 0.0
    %277 = vmatprep.subr.mxu0 0.0
    %278 = vmatpush2.msra.mxu0 0.0
    %279 = vmatprep.subr.mxu0 0.0
    %280 = vmatpush2.msra.mxu0 0.0
    %281 = vmatprep.subr.mxu0 0.0
    %282 = vmatpush2.msra.mxu0 0.0
    %283 = vmatprep.mubr.f32.mxu0 0.0
    %284 = vmatmul.mubr.f32.gmra.mxu0 %v214
    %v285 = vpop.f32.mrf.mxu0
    %v286 = vadd.f32 0.0, %v285
    %v287 = vpop.f32.mrf.mxu0
    %288 = vmatprep.mubr.f32.mxu0 0.0
    %289 = vmatmul.mubr.f32.gmra.mxu0 %v217
    %v290 = vpop.f32.mrf.mxu0
    %v291 = vadd.f32 0.0, %v290
    %v292 = vpop.f32.mrf.mxu0
    %293 = vdwg.mxu0
    %v294 = vld [vmem:[%s10] sm:$0xff]
    %v295 = vld [vmem:[%s10 + $0x8] sm:$0xff]
    %v296 = vld [vmem:[%s10 + $0x10] sm:$0xff]
    %v297 = vld [vmem:[%s10 + $0x18] sm:$0xff]
    %v299 = vsel %vm212, %v294, 0
    %v302 = vsel %vm212, %v295, 0
    %v305 = vsel %vm212, %v296, 0
    %v308 = vsel %vm212, %v297, 0
    %310 = vmatprep.subr.mxu0 0.0
    %311 = vmatpush1.msra.mxu0 0.0
    %312 = vmatprep.subr.mxu0 0.0
    %313 = vmatpush1.msra.mxu0 0.0
    %314 = vmatprep.subr.mxu0 0.0
    %315 = vmatpush1.msra.mxu0 0.0
    %316 = vmatprep.subr.mxu0 0.0
    %317 = vmatpush1.msra.mxu0 0.0
    %318 = vmatprep.subr.mxu0 0.0
    %319 = vmatpush1.msra.mxu0 0.0
    %320 = vmatprep.subr.mxu0 0.0
    %321 = vmatpush1.msra.mxu0 0.0
    %322 = vmatprep.subr.mxu0 0.0
    %323 = vmatpush1.msra.mxu0 0.0
    %324 = vmatprep.subr.mxu0 0.0
    %325 = vmatpush1.msra.mxu0 0.0
    %326 = vmatprep.subr.mxu0 0.0
    %327 = vmatpush1.msra.mxu0 0.0
    %328 = vmatprep.subr.mxu0 0.0
    %329 = vmatpush1.msra.mxu0 0.0
    %330 = vmatprep.subr.mxu0 0.0
    %331 = vmatpush1.msra.mxu0 0.0
    %332 = vmatprep.subr.mxu0 0.0
    %333 = vmatpush1.msra.mxu0 0.0
    %334 = vmatprep.subr.mxu0 0.0
    %335 = vmatpush1.msra.mxu0 %v199
    %336 = vmatprep.subr.mxu0 0.0
    %337 = vmatpush1.msra.mxu0 %v198
    %338 = vmatprep.subr.mxu0 0.0
    %339 = vmatpush1.msra.mxu0 %v197
    %340 = vmatprep.subr.mxu0 0.0
    %341 = vmatpush1.msra.mxu0 %v196
    %342 = vmatprep.subr.mxu0 0.0
    %343 = vmatpush2.msra.mxu0 0.0
    %344 = vmatprep.subr.mxu0 0.0
    %345 = vmatpush2.msra.mxu0 0.0
    %346 = vmatprep.subr.mxu0 0.0
    %347 = vmatpush2.msra.mxu0 0.0
    %348 = vmatprep.subr.mxu0 0.0
    %349 = vmatpush2.msra.mxu0 0.0
    %350 = vmatprep.subr.mxu0 0.0
    %351 = vmatpush2.msra.mxu0 0.0
    %352 = vmatprep.subr.mxu0 0.0
    %353 = vmatpush2.msra.mxu0 0.0
    %354 = vmatprep.subr.mxu0 0.0
    %355 = vmatpush2.msra.mxu0 0.0
    %356 = vmatprep.subr.mxu0 0.0
    %357 = vmatpush2.msra.mxu0 0.0
    %358 = vmatprep.subr.mxu0 0.0
    %359 = vmatpush2.msra.mxu0 0.0
    %360 = vmatprep.subr.mxu0 0.0
    %361 = vmatpush2.msra.mxu0 0.0
    %362 = vmatprep.subr.mxu0 0.0
    %363 = vmatpush2.msra.mxu0 0.0
    %364 = vmatprep.subr.mxu0 0.0
    %365 = vmatpush2.msra.mxu0 0.0
    %366 = vmatprep.subr.mxu0 0.0
    %367 = vmatpush2.msra.mxu0 0.0
    %368 = vmatprep.subr.mxu0 0.0
    %369 = vmatpush2.msra.mxu0 0.0
    %370 = vmatprep.subr.mxu0 0.0
    %371 = vmatpush2.msra.mxu0 0.0
    %372 = vmatprep.subr.mxu0 0.0
    %373 = vmatpush2.msra.mxu0 0.0
    %374 = vmatprep.mubr.f32.mxu0 0.0
    %375 = vmatmul.mubr.f32.gmra.mxu0 %v299
    %v376 = vpop.f32.mrf.mxu0
    %v377 = vadd.f32 0.0, %v376
    %v378 = vpop.f32.mrf.mxu0
    %379 = vmatprep.mubr.f32.mxu0 0.0
    %380 = vmatmul.mubr.f32.gmra.mxu0 %v302
    %v381 = vpop.f32.mrf.mxu0
    %v382 = vadd.f32 0.0, %v381
    %v383 = vpop.f32.mrf.mxu0
    %384 = vmatprep.mubr.f32.mxu0 0.0
    %385 = vmatmul.mubr.f32.gmra.mxu0 %v305
    %v386 = vpop.f32.mrf.mxu0
    %v387 = vadd.f32 0.0, %v386
    %v388 = vpop.f32.mrf.mxu0
    %389 = vmatprep.mubr.f32.mxu0 0.0
    %390 = vmatmul.mubr.f32.gmra.mxu0 %v308
    %v391 = vpop.f32.mrf.mxu0
    %v392 = vadd.f32 0.0, %v391
    %v393 = vpop.f32.mrf.mxu0
    %394 = vdwg.mxu0
    %v395 = vld [vmem:[%s5] sm:$0xff]
    %v396 = vld [vmem:[%s5 + $0x8] sm:$0xff]
    %v397 = vld [vmem:[%s5 + $0x10] sm:$0xff]
    %v398 = vld [vmem:[%s5 + $0x18] sm:$0xff]
    %v399 = vadd.f32 %v395, %v192
    %v400 = vadd.f32 %v396, %v193
    %v401 = vadd.f32 %v397, %v194
    %v402 = vadd.f32 %v398, %v195
    %vm403 = vcmask 130048
    %v405 = vsel %vm403, %v200, 0
    %v408 = vsel %vm403, %v201, 0
    %v411 = vsel %vm403, %v202, 0
    %v414 = vsel %vm403, %v203, 0
    %416 = vmatprep.subr.mxu0 0.0
    %417 = vmatpush1.msra.mxu0 0.0
    %418 = vmatprep.subr.mxu0 0.0
    %419 = vmatpush1.msra.mxu0 0.0
    %420 = vmatprep.subr.mxu0 0.0
    %421 = vmatpush1.msra.mxu0 0.0
    %422 = vmatprep.subr.mxu0 0.0
    %423 = vmatpush1.msra.mxu0 0.0
    %424 = vmatprep.subr.mxu0 0.0
    %425 = vmatpush1.msra.mxu0 0.0
    %426 = vmatprep.subr.mxu0 0.0
    %427 = vmatpush1.msra.mxu0 0.0
    %428 = vmatprep.subr.mxu0 0.0
    %429 = vmatpush1.msra.mxu0 0.0
    %430 = vmatprep.subr.mxu0 0.0
    %431 = vmatpush1.msra.mxu0 0.0
    %432 = vmatprep.subr.mxu0 0.0
    %433 = vmatpush1.msra.mxu0 0.0
    %434 = vmatprep.subr.mxu0 0.0
    %435 = vmatpush1.msra.mxu0 0.0
    %436 = vmatprep.subr.mxu0 0.0
    %437 = vmatpush1.msra.mxu0 0.0
    %438 = vmatprep.subr.mxu0 0.0
    %439 = vmatpush1.msra.mxu0 0.0
    %440 = vmatprep.subr.mxu0 0.0
    %441 = vmatpush1.msra.mxu0 0.0
    %442 = vmatprep.subr.mxu0 0.0
    %443 = vmatpush1.msra.mxu0 0.0
    %444 = vmatprep.subr.mxu0 0.0
    %445 = vmatpush1.msra.mxu0 %v291
    %446 = vmatprep.subr.mxu0 0.0
    %447 = vmatpush1.msra.mxu0 %v286
    %448 = vmatprep.subr.mxu0 0.0
    %449 = vmatpush2.msra.mxu0 0.0
    %450 = vmatprep.subr.mxu0 0.0
    %451 = vmatpush2.msra.mxu0 0.0
    %452 = vmatprep.subr.mxu0 0.0
    %453 = vmatpush2.msra.mxu0 0.0
    %454 = vmatprep.subr.mxu0 0.0
    %455 = vmatpush2.msra.mxu0 0.0
    %456 = vmatprep.subr.mxu0 0.0
    %457 = vmatpush2.msra.mxu0 0.0
    %458 = vmatprep.subr.mxu0 0.0
    %459 = vmatpush2.msra.mxu0 0.0
    %460 = vmatprep.subr.mxu0 0.0
    %461 = vmatpush2.msra.mxu0 0.0
    %462 = vmatprep.subr.mxu0 0.0
    %463 = vmatpush2.msra.mxu0 0.0
    %464 = vmatprep.subr.mxu0 0.0
    %465 = vmatpush2.msra.mxu0 0.0
    %466 = vmatprep.subr.mxu0 0.0
    %467 = vmatpush2.msra.mxu0 0.0
    %468 = vmatprep.subr.mxu0 0.0
    %469 = vmatpush2.msra.mxu0 0.0
    %470 = vmatprep.subr.mxu0 0.0
    %471 = vmatpush2.msra.mxu0 0.0
    %472 = vmatprep.subr.mxu0 0.0
    %473 = vmatpush2.msra.mxu0 0.0
    %474 = vmatprep.subr.mxu0 0.0
    %475 = vmatpush2.msra.mxu0 0.0
    %476 = vmatprep.subr.mxu0 0.0
    %477 = vmatpush2.msra.mxu0 0.0
    %478 = vmatprep.subr.mxu0 0.0
    %479 = vmatpush2.msra.mxu0 0.0
    %480 = vmatprep.mubr.f32.mxu0 0.0
    %481 = vmatmul.mubr.f32.gmra.mxu0 %v405
    %v482 = vpop.f32.mrf.mxu0
    %v483 = vadd.f32 0.0, %v482
    %v484 = vpop.f32.mrf.mxu0
    %485 = vmatprep.mubr.f32.mxu0 0.0
    %486 = vmatmul.mubr.f32.gmra.mxu0 %v408
    %v487 = vpop.f32.mrf.mxu0
    %v488 = vadd.f32 0.0, %v487
    %v489 = vpop.f32.mrf.mxu0
    %490 = vmatprep.mubr.f32.mxu0 0.0
    %491 = vmatmul.mubr.f32.gmra.mxu0 %v411
    %v492 = vpop.f32.mrf.mxu0
    %v493 = vadd.f32 0.0, %v492
    %v494 = vpop.f32.mrf.mxu0
    %495 = vmatprep.mubr.f32.mxu0 0.0
    %496 = vmatmul.mubr.f32.gmra.mxu0 %v414
    %v497 = vpop.f32.mrf.mxu0
    %v498 = vadd.f32 0.0, %v497
    %v499 = vpop.f32.mrf.mxu0
    %500 = vdwg.mxu0
    %v501 = vsub.f32 %v399, %v483
    %v502 = vsub.f32 %v400, %v488
    %v503 = vsub.f32 %v401, %v493
    %v504 = vsub.f32 %v402, %v498
    %v506 = vsel %vm212, %v204, 0
    %v509 = vsel %vm212, %v205, 0
    %v512 = vsel %vm212, %v206, 0
    %v515 = vsel %vm212, %v207, 0
    %517 = vmatprep.subr.mxu0 0.0
    %518 = vmatpush1.msra.mxu0 0.0
    %519 = vmatprep.subr.mxu0 0.0
    %520 = vmatpush1.msra.mxu0 0.0
    %521 = vmatprep.subr.mxu0 0.0
    %522 = vmatpush1.msra.mxu0 0.0
    %523 = vmatprep.subr.mxu0 0.0
    %524 = vmatpush1.msra.mxu0 0.0
    %525 = vmatprep.subr.mxu0 0.0
    %526 = vmatpush1.msra.mxu0 0.0
    %527 = vmatprep.subr.mxu0 0.0
    %528 = vmatpush1.msra.mxu0 0.0
    %529 = vmatprep.subr.mxu0 0.0
    %530 = vmatpush1.msra.mxu0 0.0
    %531 = vmatprep.subr.mxu0 0.0
    %532 = vmatpush1.msra.mxu0 0.0
    %533 = vmatprep.subr.mxu0 0.0
    %534 = vmatpush1.msra.mxu0 0.0
    %535 = vmatprep.subr.mxu0 0.0
    %536 = vmatpush1.msra.mxu0 0.0
    %537 = vmatprep.subr.mxu0 0.0
    %538 = vmatpush1.msra.mxu0 0.0
    %539 = vmatprep.subr.mxu0 0.0
    %540 = vmatpush1.msra.mxu0 0.0
    %541 = vmatprep.subr.mxu0 0.0
    %542 = vmatpush1.msra.mxu0 %v195
    %543 = vmatprep.subr.mxu0 0.0
    %544 = vmatpush1.msra.mxu0 %v194
    %545 = vmatprep.subr.mxu0 0.0
    %546 = vmatpush1.msra.mxu0 %v193
    %547 = vmatprep.subr.mxu0 0.0
    %548 = vmatpush1.msra.mxu0 %v192
    %549 = vmatprep.subr.mxu0 0.0
    %550 = vmatpush2.msra.mxu0 0.0
    %551 = vmatprep.subr.mxu0 0.0
    %552 = vmatpush2.msra.mxu0 0.0
    %553 = vmatprep.subr.mxu0 0.0
    %554 = vmatpush2.msra.mxu0 0.0
    %555 = vmatprep.subr.mxu0 0.0
    %556 = vmatpush2.msra.mxu0 0.0
    %557 = vmatprep.subr.mxu0 0.0
    %558 = vmatpush2.msra.mxu0 0.0
    %559 = vmatprep.subr.mxu0 0.0
    %560 = vmatpush2.msra.mxu0 0.0
    %561 = vmatprep.subr.mxu0 0.0
    %562 = vmatpush2.msra.mxu0 0.0
    %563 = vmatprep.subr.mxu0 0.0
    %564 = vmatpush2.msra.mxu0 0.0
    %565 = vmatprep.subr.mxu0 0.0
    %566 = vmatpush2.msra.mxu0 0.0
    %567 = vmatprep.subr.mxu0 0.0
    %568 = vmatpush2.msra.mxu0 0.0
    %569 = vmatprep.subr.mxu0 0.0
    %570 = vmatpush2.msra.mxu0 0.0
    %571 = vmatprep.subr.mxu0 0.0
    %572 = vmatpush2.msra.mxu0 0.0
    %573 = vmatprep.subr.mxu0 0.0
    %574 = vmatpush2.msra.mxu0 0.0
    %575 = vmatprep.subr.mxu0 0.0
    %576 = vmatpush2.msra.mxu0 0.0
    %577 = vmatprep.subr.mxu0 0.0
    %578 = vmatpush2.msra.mxu0 0.0
    %579 = vmatprep.subr.mxu0 0.0
    %580 = vmatpush2.msra.mxu0 0.0
    %581 = vmatprep.mubr.f32.mxu0 0.0
    %582 = vmatmul.mubr.f32.gmra.mxu0 %v506
    %v583 = vpop.f32.mrf.mxu0
    %v584 = vadd.f32 0.0, %v583
    %v585 = vpop.f32.mrf.mxu0
    %586 = vmatprep.mubr.f32.mxu0 0.0
    %587 = vmatmul.mubr.f32.gmra.mxu0 %v509
    %v588 = vpop.f32.mrf.mxu0
    %v589 = vadd.f32 0.0, %v588
    %v590 = vpop.f32.mrf.mxu0
    %591 = vmatprep.mubr.f32.mxu0 0.0
    %592 = vmatmul.mubr.f32.gmra.mxu0 %v512
    %v593 = vpop.f32.mrf.mxu0
    %v594 = vadd.f32 0.0, %v593
    %v595 = vpop.f32.mrf.mxu0
    %596 = vmatprep.mubr.f32.mxu0 0.0
    %597 = vmatmul.mubr.f32.gmra.mxu0 %v515
    %v598 = vpop.f32.mrf.mxu0
    %v599 = vadd.f32 0.0, %v598
    %v600 = vpop.f32.mrf.mxu0
    %601 = vdwg.mxu0
    %v602 = vsub.f32 0.0, %v584
    %v603 = vsub.f32 0.0, %v589
    %v604 = vsub.f32 0.0, %v594
    %v605 = vsub.f32 0.0, %v599
    %v606 = vld [vmem:[#allocation20] sm:$0xff]
    %v607 = vld [vmem:[#allocation20 + $0x8] sm:$0xff]
    %v608 = vld [vmem:[#allocation20 + $0x10] sm:$0xff]
    %v609 = vld [vmem:[#allocation20 + $0x18] sm:$0xff]
    %610 = vmatprep.subr.mxu0 0.0
    %611 = vmatpush1.msra.mxu0 0.0
    %612 = vmatprep.subr.mxu0 0.0
    %613 = vmatpush1.msra.mxu0 0.0
    %614 = vmatprep.subr.mxu0 0.0
    %615 = vmatpush1.msra.mxu0 0.0
    %616 = vmatprep.subr.mxu0 0.0
    %617 = vmatpush1.msra.mxu0 0.0
    %618 = vmatprep.subr.mxu0 0.0
    %619 = vmatpush1.msra.mxu0 0.0
    %620 = vmatprep.subr.mxu0 0.0
    %621 = vmatpush1.msra.mxu0 0.0
    %622 = vmatprep.subr.mxu0 0.0
    %623 = vmatpush1.msra.mxu0 0.0
    %624 = vmatprep.subr.mxu0 0.0
    %625 = vmatpush1.msra.mxu0 0.0
    %626 = vmatprep.subr.mxu0 0.0
    %627 = vmatpush1.msra.mxu0 0.0
    %628 = vmatprep.subr.mxu0 0.0
    %629 = vmatpush1.msra.mxu0 0.0
    %630 = vmatprep.subr.mxu0 0.0
    %631 = vmatpush1.msra.mxu0 0.0
    %632 = vmatprep.subr.mxu0 0.0
    %633 = vmatpush1.msra.mxu0 0.0
    %634 = vmatprep.subr.mxu0 0.0
    %635 = vmatpush1.msra.mxu0 %v392
    %636 = vmatprep.subr.mxu0 0.0
    %637 = vmatpush1.msra.mxu0 %v387
    %638 = vmatprep.subr.mxu0 0.0
    %639 = vmatpush1.msra.mxu0 %v382
    %640 = vmatprep.subr.mxu0 0.0
    %641 = vmatpush1.msra.mxu0 %v377
    %642 = vmatprep.subr.mxu0 0.0
    %643 = vmatpush2.msra.mxu0 0.0
    %644 = vmatprep.subr.mxu0 0.0
    %645 = vmatpush2.msra.mxu0 0.0
    %646 = vmatprep.subr.mxu0 0.0
    %647 = vmatpush2.msra.mxu0 0.0
    %648 = vmatprep.subr.mxu0 0.0
    %649 = vmatpush2.msra.mxu0 0.0
    %650 = vmatprep.subr.mxu0 0.0
    %651 = vmatpush2.msra.mxu0 0.0
    %652 = vmatprep.subr.mxu0 0.0
    %653 = vmatpush2.msra.mxu0 0.0
    %654 = vmatprep.subr.mxu0 0.0
    %655 = vmatpush2.msra.mxu0 0.0
    %656 = vmatprep.subr.mxu0 0.0
    %657 = vmatpush2.msra.mxu0 0.0
    %658 = vmatprep.subr.mxu0 0.0
    %659 = vmatpush2.msra.mxu0 0.0
    %660 = vmatprep.subr.mxu0 0.0
    %661 = vmatpush2.msra.mxu0 0.0
    %662 = vmatprep.subr.mxu0 0.0
    %663 = vmatpush2.msra.mxu0 0.0
    %664 = vmatprep.subr.mxu0 0.0
    %665 = vmatpush2.msra.mxu0 0.0
    %666 = vmatprep.subr.mxu0 0.0
    %667 = vmatpush2.msra.mxu0 0.0
    %668 = vmatprep.subr.mxu0 0.0
    %669 = vmatpush2.msra.mxu0 0.0
    %670 = vmatprep.subr.mxu0 0.0
    %671 = vmatpush2.msra.mxu0 0.0
    %672 = vmatprep.subr.mxu0 0.0
    %673 = vmatpush2.msra.mxu0 0.0
    %674 = vmatprep.mubr.f32.mxu0 0.0
    %675 = vmatmul.mubr.f32.gmra.mxu0 %v506
    %v676 = vpop.f32.mrf.mxu0
    %v677 = vadd.f32 0.0, %v676
    %v678 = vpop.f32.mrf.mxu0
    %679 = vmatprep.mubr.f32.mxu0 0.0
    %680 = vmatmul.mubr.f32.gmra.mxu0 %v509
    %v681 = vpop.f32.mrf.mxu0
    %v682 = vadd.f32 0.0, %v681
    %v683 = vpop.f32.mrf.mxu0
    %684 = vmatprep.mubr.f32.mxu0 0.0
    %685 = vmatmul.mubr.f32.gmra.mxu0 %v512
    %v686 = vpop.f32.mrf.mxu0
    %v687 = vadd.f32 0.0, %v686
    %v688 = vpop.f32.mrf.mxu0
    %689 = vmatprep.mubr.f32.mxu0 0.0
    %690 = vmatmul.mubr.f32.gmra.mxu0 %v515
    %v691 = vpop.f32.mrf.mxu0
    %v692 = vadd.f32 0.0, %v691
    %v693 = vpop.f32.mrf.mxu0
    %694 = vdwg.mxu0
    %v695 = vsub.f32 %v606, %v677
    %v696 = vsub.f32 %v607, %v682
    %v697 = vsub.f32 %v608, %v687
    %v698 = vsub.f32 %v609, %v692
    %v699 = vld [vmem:[#allocation11] sm:$0x1]
    %v700 = vld [vmem:[#allocation14] sm:$0x1]
    %v702 = vsel %vm212, %v699, 0
    %704 = vmatprep.subr.mxu0 0.0
    %705 = vmatpush1.msra.mxu0 0.0
    %706 = vmatprep.subr.mxu0 0.0
    %707 = vmatpush1.msra.mxu0 0.0
    %708 = vmatprep.subr.mxu0 0.0
    %709 = vmatpush1.msra.mxu0 0.0
    %710 = vmatprep.subr.mxu0 0.0
    %711 = vmatpush1.msra.mxu0 0.0
    %712 = vmatprep.subr.mxu0 0.0
    %713 = vmatpush1.msra.mxu0 0.0
    %714 = vmatprep.subr.mxu0 0.0
    %715 = vmatpush1.msra.mxu0 0.0
    %716 = vmatprep.subr.mxu0 0.0
    %717 = vmatpush1.msra.mxu0 0.0
    %718 = vmatprep.subr.mxu0 0.0
    %719 = vmatpush1.msra.mxu0 0.0
    %720 = vmatprep.subr.mxu0 0.0
    %721 = vmatpush1.msra.mxu0 0.0
    %722 = vmatprep.subr.mxu0 0.0
    %723 = vmatpush1.msra.mxu0 0.0
    %724 = vmatprep.subr.mxu0 0.0
    %725 = vmatpush1.msra.mxu0 0.0
    %726 = vmatprep.subr.mxu0 0.0
    %727 = vmatpush1.msra.mxu0 0.0
    %728 = vmatprep.subr.mxu0 0.0
    %729 = vmatpush1.msra.mxu0 %v191
    %730 = vmatprep.subr.mxu0 0.0
    %731 = vmatpush1.msra.mxu0 %v190
    %732 = vmatprep.subr.mxu0 0.0
    %733 = vmatpush1.msra.mxu0 %v189
    %734 = vmatprep.subr.mxu0 0.0
    %735 = vmatpush1.msra.mxu0 %v188
    %736 = vmatprep.subr.mxu0 0.0
    %737 = vmatpush2.msra.mxu0 0.0
    %738 = vmatprep.subr.mxu0 0.0
    %739 = vmatpush2.msra.mxu0 0.0
    %740 = vmatprep.subr.mxu0 0.0
    %741 = vmatpush2.msra.mxu0 0.0
    %742 = vmatprep.subr.mxu0 0.0
    %743 = vmatpush2.msra.mxu0 0.0
    %744 = vmatprep.subr.mxu0 0.0
    %745 = vmatpush2.msra.mxu0 0.0
    %746 = vmatprep.subr.mxu0 0.0
    %747 = vmatpush2.msra.mxu0 0.0
    %748 = vmatprep.subr.mxu0 0.0
    %749 = vmatpush2.msra.mxu0 0.0
    %750 = vmatprep.subr.mxu0 0.0
    %751 = vmatpush2.msra.mxu0 0.0
    %752 = vmatprep.subr.mxu0 0.0
    %753 = vmatpush2.msra.mxu0 0.0
    %754 = vmatprep.subr.mxu0 0.0
    %755 = vmatpush2.msra.mxu0 0.0
    %756 = vmatprep.subr.mxu0 0.0
    %757 = vmatpush2.msra.mxu0 0.0
    %758 = vmatprep.subr.mxu0 0.0
    %759 = vmatpush2.msra.mxu0 0.0
    %760 = vmatprep.subr.mxu0 0.0
    %761 = vmatpush2.msra.mxu0 0.0
    %762 = vmatprep.subr.mxu0 0.0
    %763 = vmatpush2.msra.mxu0 0.0
    %764 = vmatprep.subr.mxu0 0.0
    %765 = vmatpush2.msra.mxu0 0.0
    %766 = vmatprep.subr.mxu0 0.0
    %767 = vmatpush2.msra.mxu0 0.0
    %768 = vmatprep.mubr.f32.mxu0 0.0
    %769 = vmatmul.mubr.f32.gmra.mxu0 %v702
    %v770 = vpop.f32.mrf.mxu0
    %v771 = vadd.f32 %v700, %v770
    %v772 = vpop.f32.mrf.mxu0
    %773 = vdwg.mxu0
    %v774 = vld [vmem:[#allocation15] sm:$0x1]
    %v775 = vadd.f32 %v771, %v774
    %v777 = vsel %vm403, %v208, 0
    %779 = vmatprep.subr.mxu0 0.0
    %780 = vmatpush1.msra.mxu0 0.0
    %781 = vmatprep.subr.mxu0 0.0
    %782 = vmatpush1.msra.mxu0 0.0
    %783 = vmatprep.subr.mxu0 0.0
    %784 = vmatpush1.msra.mxu0 0.0
    %785 = vmatprep.subr.mxu0 0.0
    %786 = vmatpush1.msra.mxu0 0.0
    %787 = vmatprep.subr.mxu0 0.0
    %788 = vmatpush1.msra.mxu0 0.0
    %789 = vmatprep.subr.mxu0 0.0
    %790 = vmatpush1.msra.mxu0 0.0
    %791 = vmatprep.subr.mxu0 0.0
    %792 = vmatpush1.msra.mxu0 0.0
    %793 = vmatprep.subr.mxu0 0.0
    %794 = vmatpush1.msra.mxu0 0.0
    %795 = vmatprep.subr.mxu0 0.0
    %796 = vmatpush1.msra.mxu0 0.0
    %797 = vmatprep.subr.mxu0 0.0
    %798 = vmatpush1.msra.mxu0 0.0
    %799 = vmatprep.subr.mxu0 0.0
    %800 = vmatpush1.msra.mxu0 0.0
    %801 = vmatprep.subr.mxu0 0.0
    %802 = vmatpush1.msra.mxu0 0.0
    %803 = vmatprep.subr.mxu0 0.0
    %804 = vmatpush1.msra.mxu0 0.0
    %805 = vmatprep.subr.mxu0 0.0
    %806 = vmatpush1.msra.mxu0 0.0
    %807 = vmatprep.subr.mxu0 0.0
    %808 = vmatpush1.msra.mxu0 %v291
    %809 = vmatprep.subr.mxu0 0.0
    %810 = vmatpush1.msra.mxu0 %v286
    %811 = vmatprep.subr.mxu0 0.0
    %812 = vmatpush2.msra.mxu0 0.0
    %813 = vmatprep.subr.mxu0 0.0
    %814 = vmatpush2.msra.mxu0 0.0
    %815 = vmatprep.subr.mxu0 0.0
    %816 = vmatpush2.msra.mxu0 0.0
    %817 = vmatprep.subr.mxu0 0.0
    %818 = vmatpush2.msra.mxu0 0.0
    %819 = vmatprep.subr.mxu0 0.0
    %820 = vmatpush2.msra.mxu0 0.0
    %821 = vmatprep.subr.mxu0 0.0
    %822 = vmatpush2.msra.mxu0 0.0
    %823 = vmatprep.subr.mxu0 0.0
    %824 = vmatpush2.msra.mxu0 0.0
    %825 = vmatprep.subr.mxu0 0.0
    %826 = vmatpush2.msra.mxu0 0.0
    %827 = vmatprep.subr.mxu0 0.0
    %828 = vmatpush2.msra.mxu0 0.0
    %829 = vmatprep.subr.mxu0 0.0
    %830 = vmatpush2.msra.mxu0 0.0
    %831 = vmatprep.subr.mxu0 0.0
    %832 = vmatpush2.msra.mxu0 0.0
    %833 = vmatprep.subr.mxu0 0.0
    %834 = vmatpush2.msra.mxu0 0.0
    %835 = vmatprep.subr.mxu0 0.0
    %836 = vmatpush2.msra.mxu0 0.0
    %837 = vmatprep.subr.mxu0 0.0
    %838 = vmatpush2.msra.mxu0 0.0
    %839 = vmatprep.subr.mxu0 0.0
    %840 = vmatpush2.msra.mxu0 0.0
    %841 = vmatprep.subr.mxu0 0.0
    %842 = vmatpush2.msra.mxu0 0.0
    %843 = vmatprep.mubr.f32.mxu0 0.0
    %844 = vmatmul.mubr.f32.gmra.mxu0 %v777
    %v845 = vpop.f32.mrf.mxu0
    %v846 = vadd.f32 0.0, %v845
    %v847 = vpop.f32.mrf.mxu0
    %848 = vdwg.mxu0
    %v850 = vsel %vm212, %v209, 0
    %852 = vmatprep.subr.mxu0 0.0
    %853 = vmatpush1.msra.mxu0 0.0
    %854 = vmatprep.subr.mxu0 0.0
    %855 = vmatpush1.msra.mxu0 0.0
    %856 = vmatprep.subr.mxu0 0.0
    %857 = vmatpush1.msra.mxu0 0.0
    %858 = vmatprep.subr.mxu0 0.0
    %859 = vmatpush1.msra.mxu0 0.0
    %860 = vmatprep.subr.mxu0 0.0
    %861 = vmatpush1.msra.mxu0 0.0
    %862 = vmatprep.subr.mxu0 0.0
    %863 = vmatpush1.msra.mxu0 0.0
    %864 = vmatprep.subr.mxu0 0.0
    %865 = vmatpush1.msra.mxu0 0.0
    %866 = vmatprep.subr.mxu0 0.0
    %867 = vmatpush1.msra.mxu0 0.0
    %868 = vmatprep.subr.mxu0 0.0
    %869 = vmatpush1.msra.mxu0 0.0
    %870 = vmatprep.subr.mxu0 0.0
    %871 = vmatpush1.msra.mxu0 0.0
    %872 = vmatprep.subr.mxu0 0.0
    %873 = vmatpush1.msra.mxu0 0.0
    %874 = vmatprep.subr.mxu0 0.0
    %875 = vmatpush1.msra.mxu0 0.0
    %876 = vmatprep.subr.mxu0 0.0
    %877 = vmatpush1.msra.mxu0 %v195
    %878 = vmatprep.subr.mxu0 0.0
    %879 = vmatpush1.msra.mxu0 %v194
    %880 = vmatprep.subr.mxu0 0.0
    %881 = vmatpush1.msra.mxu0 %v193
    %882 = vmatprep.subr.mxu0 0.0
    %883 = vmatpush1.msra.mxu0 %v192
    %884 = vmatprep.subr.mxu0 0.0
    %885 = vmatpush2.msra.mxu0 0.0
    %886 = vmatprep.subr.mxu0 0.0
    %887 = vmatpush2.msra.mxu0 0.0
    %888 = vmatprep.subr.mxu0 0.0
    %889 = vmatpush2.msra.mxu0 0.0
    %890 = vmatprep.subr.mxu0 0.0
    %891 = vmatpush2.msra.mxu0 0.0
    %892 = vmatprep.subr.mxu0 0.0
    %893 = vmatpush2.msra.mxu0 0.0
    %894 = vmatprep.subr.mxu0 0.0
    %895 = vmatpush2.msra.mxu0 0.0
    %896 = vmatprep.subr.mxu0 0.0
    %897 = vmatpush2.msra.mxu0 0.0
    %898 = vmatprep.subr.mxu0 0.0
    %899 = vmatpush2.msra.mxu0 0.0
    %900 = vmatprep.subr.mxu0 0.0
    %901 = vmatpush2.msra.mxu0 0.0
    %902 = vmatprep.subr.mxu0 0.0
    %903 = vmatpush2.msra.mxu0 0.0
    %904 = vmatprep.subr.mxu0 0.0
    %905 = vmatpush2.msra.mxu0 0.0
    %906 = vmatprep.subr.mxu0 0.0
    %907 = vmatpush2.msra.mxu0 0.0
    %908 = vmatprep.subr.mxu0 0.0
    %909 = vmatpush2.msra.mxu0 0.0
    %910 = vmatprep.subr.mxu0 0.0
    %911 = vmatpush2.msra.mxu0 0.0
    %912 = vmatprep.subr.mxu0 0.0
    %913 = vmatpush2.msra.mxu0 0.0
    %914 = vmatprep.subr.mxu0 0.0
    %915 = vmatpush2.msra.mxu0 0.0
    %916 = vmatprep.mubr.f32.mxu0 0.0
    %917 = vmatmul.mubr.f32.gmra.mxu0 %v850
    %v918 = vpop.f32.mrf.mxu0
    %v919 = vadd.f32 0.0, %v918
    %v920 = vpop.f32.mrf.mxu0
    %921 = vdwg.mxu0
    %v922 = vld [vmem:[%s11] sm:$0x1]
    %v923 = vld [vmem:[%s14] sm:$0x1]
    %v925 = vsel %vm212, %v922, 0
    %927 = vmatprep.subr.mxu0 0.0
    %928 = vmatpush1.msra.mxu0 0.0
    %929 = vmatprep.subr.mxu0 0.0
    %930 = vmatpush1.msra.mxu0 0.0
    %931 = vmatprep.subr.mxu0 0.0
    %932 = vmatpush1.msra.mxu0 0.0
    %933 = vmatprep.subr.mxu0 0.0
    %934 = vmatpush1.msra.mxu0 0.0
    %935 = vmatprep.subr.mxu0 0.0
    %936 = vmatpush1.msra.mxu0 0.0
    %937 = vmatprep.subr.mxu0 0.0
    %938 = vmatpush1.msra.mxu0 0.0
    %939 = vmatprep.subr.mxu0 0.0
    %940 = vmatpush1.msra.mxu0 0.0
    %941 = vmatprep.subr.mxu0 0.0
    %942 = vmatpush1.msra.mxu0 0.0
    %943 = vmatprep.subr.mxu0 0.0
    %944 = vmatpush1.msra.mxu0 0.0
    %945 = vmatprep.subr.mxu0 0.0
    %946 = vmatpush1.msra.mxu0 0.0
    %947 = vmatprep.subr.mxu0 0.0
    %948 = vmatpush1.msra.mxu0 0.0
    %949 = vmatprep.subr.mxu0 0.0
    %950 = vmatpush1.msra.mxu0 0.0
    %951 = vmatprep.subr.mxu0 0.0
    %952 = vmatpush1.msra.mxu0 %v199
    %953 = vmatprep.subr.mxu0 0.0
    %954 = vmatpush1.msra.mxu0 %v198
    %955 = vmatprep.subr.mxu0 0.0
    %956 = vmatpush1.msra.mxu0 %v197
    %957 = vmatprep.subr.mxu0 0.0
    %958 = vmatpush1.msra.mxu0 %v196
    %959 = vmatprep.subr.mxu0 0.0
    %960 = vmatpush2.msra.mxu0 0.0
    %961 = vmatprep.subr.mxu0 0.0
    %962 = vmatpush2.msra.mxu0 0.0
    %963 = vmatprep.subr.mxu0 0.0
    %964 = vmatpush2.msra.mxu0 0.0
    %965 = vmatprep.subr.mxu0 0.0
    %966 = vmatpush2.msra.mxu0 0.0
    %967 = vmatprep.subr.mxu0 0.0
    %968 = vmatpush2.msra.mxu0 0.0
    %969 = vmatprep.subr.mxu0 0.0
    %970 = vmatpush2.msra.mxu0 0.0
    %971 = vmatprep.subr.mxu0 0.0
    %972 = vmatpush2.msra.mxu0 0.0
    %973 = vmatprep.subr.mxu0 0.0
    %974 = vmatpush2.msra.mxu0 0.0
    %975 = vmatprep.subr.mxu0 0.0
    %976 = vmatpush2.msra.mxu0 0.0
    %977 = vmatprep.subr.mxu0 0.0
    %978 = vmatpush2.msra.mxu0 0.0
    %979 = vmatprep.subr.mxu0 0.0
    %980 = vmatpush2.msra.mxu0 0.0
    %981 = vmatprep.subr.mxu0 0.0
    %982 = vmatpush2.msra.mxu0 0.0
    %983 = vmatprep.subr.mxu0 0.0
    %984 = vmatpush2.msra.mxu0 0.0
    %985 = vmatprep.subr.mxu0 0.0
    %986 = vmatpush2.msra.mxu0 0.0
    %987 = vmatprep.subr.mxu0 0.0
    %988 = vmatpush2.msra.mxu0 0.0
    %989 = vmatprep.subr.mxu0 0.0
    %990 = vmatpush2.msra.mxu0 0.0
    %991 = vmatprep.mubr.f32.mxu0 0.0
    %992 = vmatmul.mubr.f32.gmra.mxu0 %v925
    %v993 = vpop.f32.mrf.mxu0
    %v994 = vadd.f32 %v923, %v993
    %v995 = vpop.f32.mrf.mxu0
    %996 = vdwg.mxu0
    %v997 = vld [vmem:[%s15] sm:$0x1]
    %v998 = vadd.f32 %v994, %v997
    %999 = vmatprep.subr.mxu0 0.0
    %1000 = vmatpush1.msra.mxu0 0.0
    %1001 = vmatprep.subr.mxu0 0.0
    %1002 = vmatpush1.msra.mxu0 0.0
    %1003 = vmatprep.subr.mxu0 0.0
    %1004 = vmatpush1.msra.mxu0 0.0
    %1005 = vmatprep.subr.mxu0 0.0
    %1006 = vmatpush1.msra.mxu0 0.0
    %1007 = vmatprep.subr.mxu0 0.0
    %1008 = vmatpush1.msra.mxu0 0.0
    %1009 = vmatprep.subr.mxu0 0.0
    %1010 = vmatpush1.msra.mxu0 0.0
    %1011 = vmatprep.subr.mxu0 0.0
    %1012 = vmatpush1.msra.mxu0 0.0
    %1013 = vmatprep.subr.mxu0 0.0
    %1014 = vmatpush1.msra.mxu0 0.0
    %1015 = vmatprep.subr.mxu0 0.0
    %1016 = vmatpush1.msra.mxu0 0.0
    %1017 = vmatprep.subr.mxu0 0.0
    %1018 = vmatpush1.msra.mxu0 0.0
    %1019 = vmatprep.subr.mxu0 0.0
    %1020 = vmatpush1.msra.mxu0 0.0
    %1021 = vmatprep.subr.mxu0 0.0
    %1022 = vmatpush1.msra.mxu0 0.0
    %1023 = vmatprep.subr.mxu0 0.0
    %1024 = vmatpush1.msra.mxu0 %v392
    %1025 = vmatprep.subr.mxu0 0.0
    %1026 = vmatpush1.msra.mxu0 %v387
    %1027 = vmatprep.subr.mxu0 0.0
    %1028 = vmatpush1.msra.mxu0 %v382
    %1029 = vmatprep.subr.mxu0 0.0
    %1030 = vmatpush1.msra.mxu0 %v377
    %1031 = vmatprep.subr.mxu0 0.0
    %1032 = vmatpush2.msra.mxu0 0.0
    %1033 = vmatprep.subr.mxu0 0.0
    %1034 = vmatpush2.msra.mxu0 0.0
    %1035 = vmatprep.subr.mxu0 0.0
    %1036 = vmatpush2.msra.mxu0 0.0
    %1037 = vmatprep.subr.mxu0 0.0
    %1038 = vmatpush2.msra.mxu0 0.0
    %1039 = vmatprep.subr.mxu0 0.0
    %1040 = vmatpush2.msra.mxu0 0.0
    %1041 = vmatprep.subr.mxu0 0.0
    %1042 = vmatpush2.msra.mxu0 0.0
    %1043 = vmatprep.subr.mxu0 0.0
    %1044 = vmatpush2.msra.mxu0 0.0
    %1045 = vmatprep.subr.mxu0 0.0
    %1046 = vmatpush2.msra.mxu0 0.0
    %1047 = vmatprep.subr.mxu0 0.0
    %1048 = vmatpush2.msra.mxu0 0.0
    %1049 = vmatprep.subr.mxu0 0.0
    %1050 = vmatpush2.msra.mxu0 0.0
    %1051 = vmatprep.subr.mxu0 0.0
    %1052 = vmatpush2.msra.mxu0 0.0
    %1053 = vmatprep.subr.mxu0 0.0
    %1054 = vmatpush2.msra.mxu0 0.0
    %1055 = vmatprep.subr.mxu0 0.0
    %1056 = vmatpush2.msra.mxu0 0.0
    %1057 = vmatprep.subr.mxu0 0.0
    %1058 = vmatpush2.msra.mxu0 0.0
    %1059 = vmatprep.subr.mxu0 0.0
    %1060 = vmatpush2.msra.mxu0 0.0
    %1061 = vmatprep.subr.mxu0 0.0
    %1062 = vmatpush2.msra.mxu0 0.0
    %1063 = vmatprep.mubr.f32.mxu0 0.0
    %1064 = vmatmul.mubr.f32.gmra.mxu0 %v850
    %v1065 = vpop.f32.mrf.mxu0
    %v1066 = vadd.f32 0.0, %v1065
    %v1067 = vpop.f32.mrf.mxu0
    %1068 = vdwg.mxu0
    %v1069 = vsub.f32 %v998, %v1066
    %v1070 = vld [vmem:[#allocation6] sm:$0xff]
    %v1071 = vsub.f32 %v775, %v846
    %v1072 = vsub.f32 %v1071, %v919
    %v1073 = vlaneseq
    %v1074 = vshrl.u32 %v1073, 7
    %v1075 = vsub.s32 0, %v1074
    %v1076 = vrot.slane %v1072, %v1075
    %v1078 = vsel %vm403, %v1070, 0
    %1080 = vmatprep.subr.mxu0 0.0
    %1081 = vmatpush1.msra.mxu0 0.0
    %1082 = vmatprep.subr.mxu0 0.0
    %1083 = vmatpush1.msra.mxu0 0.0
    %1084 = vmatprep.subr.mxu0 0.0
    %1085 = vmatpush1.msra.mxu0 0.0
    %1086 = vmatprep.subr.mxu0 0.0
    %1087 = vmatpush1.msra.mxu0 0.0
    %1088 = vmatprep.subr.mxu0 0.0
    %1089 = vmatpush1.msra.mxu0 0.0
    %1090 = vmatprep.subr.mxu0 0.0
    %1091 = vmatpush1.msra.mxu0 0.0
    %1092 = vmatprep.subr.mxu0 0.0
    %1093 = vmatpush1.msra.mxu0 0.0
    %1094 = vmatprep.subr.mxu0 0.0
    %1095 = vmatpush1.msra.mxu0 0.0
    %1096 = vmatprep.subr.mxu0 0.0
    %1097 = vmatpush1.msra.mxu0 0.0
    %1098 = vmatprep.subr.mxu0 0.0
    %1099 = vmatpush1.msra.mxu0 0.0
    %1100 = vmatprep.subr.mxu0 0.0
    %1101 = vmatpush1.msra.mxu0 0.0
    %1102 = vmatprep.subr.mxu0 0.0
    %1103 = vmatpush1.msra.mxu0 0.0
    %1104 = vmatprep.subr.mxu0 0.0
    %1105 = vmatpush1.msra.mxu0 0.0
    %1106 = vmatprep.subr.mxu0 0.0
    %1107 = vmatpush1.msra.mxu0 0.0
    %1108 = vmatprep.subr.mxu0 0.0
    %1109 = vmatpush1.msra.mxu0 %v291
    %1110 = vmatprep.subr.mxu0 0.0
    %1111 = vmatpush1.msra.mxu0 %v286
    %1112 = vmatprep.subr.mxu0 0.0
    %1113 = vmatpush2.msra.mxu0 0.0
    %1114 = vmatprep.subr.mxu0 0.0
    %1115 = vmatpush2.msra.mxu0 0.0
    %1116 = vmatprep.subr.mxu0 0.0
    %1117 = vmatpush2.msra.mxu0 0.0
    %1118 = vmatprep.subr.mxu0 0.0
    %1119 = vmatpush2.msra.mxu0 0.0
    %1120 = vmatprep.subr.mxu0 0.0
    %1121 = vmatpush2.msra.mxu0 0.0
    %1122 = vmatprep.subr.mxu0 0.0
    %1123 = vmatpush2.msra.mxu0 0.0
    %1124 = vmatprep.subr.mxu0 0.0
    %1125 = vmatpush2.msra.mxu0 0.0
    %1126 = vmatprep.subr.mxu0 0.0
    %1127 = vmatpush2.msra.mxu0 0.0
    %1128 = vmatprep.subr.mxu0 0.0
    %1129 = vmatpush2.msra.mxu0 0.0
    %1130 = vmatprep.subr.mxu0 0.0
    %1131 = vmatpush2.msra.mxu0 0.0
    %1132 = vmatprep.subr.mxu0 0.0
    %1133 = vmatpush2.msra.mxu0 0.0
    %1134 = vmatprep.subr.mxu0 0.0
    %1135 = vmatpush2.msra.mxu0 0.0
    %1136 = vmatprep.subr.mxu0 0.0
    %1137 = vmatpush2.msra.mxu0 0.0
    %1138 = vmatprep.subr.mxu0 0.0
    %1139 = vmatpush2.msra.mxu0 0.0
    %1140 = vmatprep.subr.mxu0 0.0
    %1141 = vmatpush2.msra.mxu0 0.0
    %1142 = vmatprep.subr.mxu0 0.0
    %1143 = vmatpush2.msra.mxu0 0.0
    %1144 = vmatprep.mubr.f32.mxu0 0.0
    %1145 = vmatmul.mubr.f32.gmra.mxu0 %v1078
    %v1146 = vpop.f32.mrf.mxu0
    %v1147 = vadd.f32 %v1076, %v1146
    %v1148 = vpop.f32.mrf.mxu0
    %1149 = vdwg.mxu0
    %1150 = vst [vmem:[#allocation2] sm:$0xff] %v1147
    %v1151 = vpack.c.bf16 %v502, %v501
    %v1152 = vpack.c.bf16 %v504, %v503
    %v1153 = vpack.c.bf16 %v603, %v602
    %v1154 = vpack.c.bf16 %v605, %v604
    %v1155 = vpack.c.bf16 %v382, %v377
    %v1156 = vpack.c.bf16 %v392, %v387
    %v1157 = vpack.c.bf16 %v696, %v695
    %v1158 = vpack.c.bf16 %v698, %v697
    %v1159 = vld [vmem:[#allocation2] sm:$0x1]
    %v1160 = vadd.f32 %v1159, %v846
    %v1161 = vadd.f32 %v1160, %v919
    %v1162 = vxor.u32 %v1161, 2147483648
    %v1163 = vmul.f32 %v1162, 1.442695
    %v1164 = vpow.pop %v1163
    %v1165 = vadd.f32 %v1164, 1.0
    %v1166 = vrcp.pop %v1165
    %v1167 = vmul.f32 1.0, %v1166
    %v1168 = vtanh.pop %v1161
    %v1169 = vmul.f32 %v1167, 0.0
    %1171 = vrot.lane.b32.xlu0 %v1168, 64
    %v1172 = vpop.permute.xlu0 %1171
    %v1174 = vmul.f32 %v1167, %v1172
    %1176 = vrot.lane.b32.xlu0 %v1174, 32
    %v1177 = vpop.permute.xlu0 %1176
    %v1179 = vadd.f32 %v1169, %v1177
    %v1180 = vtanh.pop %v1179
    %1182 = vrot.lane.b32.xlu0 %v1180, 64
    %v1183 = vpop.permute.xlu0 %1182
    %v1185 = vmul.f32 %v1167, %v1183
    %v1186 = vpack.c.bf16 %v1185, %v1185
    %1188 = vrot.lane.b32.xlu0 %v1186, 32
    %v1189 = vpop.permute.xlu0 %1188
    %v1191 = vsel %vm212, %v1189, 0
    %1193 = vmatprep.subr.bf16.mxu0 0
    %1194 = vmatpush1.bf16.msra.mxu0 0
    %1195 = vmatprep.subr.bf16.mxu0 0
    %1196 = vmatpush1.bf16.msra.mxu0 0
    %1197 = vmatprep.subr.bf16.mxu0 0
    %1198 = vmatpush1.bf16.msra.mxu0 0
    %1199 = vmatprep.subr.bf16.mxu0 0
    %1200 = vmatpush1.bf16.msra.mxu0 0
    %1201 = vmatprep.subr.bf16.mxu0 0
    %1202 = vmatpush1.bf16.msra.mxu0 0
    %1203 = vmatprep.subr.bf16.mxu0 0
    %1204 = vmatpush1.bf16.msra.mxu0 0
    %1205 = vmatprep.subr.bf16.mxu0 0
    %1206 = vmatpush1.bf16.msra.mxu0 %v1156
    %1207 = vmatprep.subr.bf16.mxu0 0
    %1208 = vmatpush1.bf16.msra.mxu0 %v1155
    %1209 = vmatprep.subr.bf16.mxu0 0
    %1210 = vmatpush2.bf16.msra.mxu0 0
    %1211 = vmatprep.subr.bf16.mxu0 0
    %1212 = vmatpush2.bf16.msra.mxu0 0
    %1213 = vmatprep.subr.bf16.mxu0 0
    %1214 = vmatpush2.bf16.msra.mxu0 0
    %1215 = vmatprep.subr.bf16.mxu0 0
    %1216 = vmatpush2.bf16.msra.mxu0 0
    %1217 = vmatprep.subr.bf16.mxu0 0
    %1218 = vmatpush2.bf16.msra.mxu0 0
    %1219 = vmatprep.subr.bf16.mxu0 0
    %1220 = vmatpush2.bf16.msra.mxu0 0
    %1221 = vmatprep.subr.bf16.mxu0 0
    %1222 = vmatpush2.bf16.msra.mxu0 0
    %1223 = vmatprep.subr.bf16.mxu0 0
    %1224 = vmatpush2.bf16.msra.mxu0 0
    %1225 = vmatprep.mubr.bf16.mxu0 0
    %1226 = vmatmul.mubr.bf16.gmra.mxu0 %v1191
    %v1227 = vpop.f32.mrf.mxu0
    %v1228 = vadd.f32 0.0, %v1227
    %v1229 = vpop.f32.mrf.mxu0
    %v1230 = vpop.f32.mrf.mxu0
    %v1231 = vpop.f32.mrf.mxu0
    %1232 = vdwg.mxu0
    %v1233 = vadd.f32 %v998, %v1228
    %v1234 = vxor.u32 %v1233, 2147483648
    %v1235 = vmul.f32 %v1234, 1.442695
    %v1236 = vpow.pop %v1235
    %v1237 = vadd.f32 %v1236, 1.0
    %v1238 = vrcp.pop %v1237
    %v1239 = vmul.f32 1.0, %v1238
    %v1240 = vtanh.pop %v1233
    %v1241 = vmul.f32 %v1239, 0.0
    %1243 = vrot.lane.b32.xlu0 %v1240, 64
    %v1244 = vpop.permute.xlu0 %1243
    %v1246 = vmul.f32 %v1239, %v1244
    %1248 = vrot.lane.b32.xlu0 %v1246, 32
    %v1249 = vpop.permute.xlu0 %1248
    %v1251 = vadd.f32 %v1241, %v1249
    %v1252 = vtanh.pop %v1251
    %1254 = vrot.lane.b32.xlu0 %v1252, 64
    %v1255 = vpop.permute.xlu0 %1254
    %v1257 = vmul.f32 %v1239, %v1255
    %1259 = vrot.lane.b32.xlu0 %v1185, 32
    %v1260 = vpop.permute.xlu0 %1259
    %vm1262 = vcmask 253952
    %1263 = vst.msk [vmem:[#allocation3] sm:$0x1] %vm1262, %v1260
    %1265 = vrot.lane.b32.xlu0 %v1257, 32
    %v1266 = vpop.permute.xlu0 %1265
    %1268 = vst.msk [vmem:[#allocation4] sm:$0x1] %vm1262, %v1266
    %v1269 = vld [vmem:[#allocation2 + $0x1] sm:$0x1]
    %v1270 = vadd.f32 %v1269, %v919
    %1271 = vmatprep.subr.bf16.mxu0 0
    %1272 = vmatpush1.bf16.msra.mxu0 0
    %1273 = vmatprep.subr.bf16.mxu0 0
    %1274 = vmatpush1.bf16.msra.mxu0 0
    %1275 = vmatprep.subr.bf16.mxu0 0
    %1276 = vmatpush1.bf16.msra.mxu0 0
    %1277 = vmatprep.subr.bf16.mxu0 0
    %1278 = vmatpush1.bf16.msra.mxu0 0
    %1279 = vmatprep.subr.bf16.mxu0 0
    %1280 = vmatpush1.bf16.msra.mxu0 0
    %1281 = vmatprep.subr.bf16.mxu0 0
    %1282 = vmatpush1.bf16.msra.mxu0 0
    %1283 = vmatprep.subr.bf16.mxu0 0
    %1284 = vmatpush1.bf16.msra.mxu0 %v1152
    %1285 = vmatprep.subr.bf16.mxu0 0
    %1286 = vmatpush1.bf16.msra.mxu0 %v1151
    %1287 = vmatprep.subr.bf16.mxu0 0
    %1288 = vmatpush2.bf16.msra.mxu0 0
    %1289 = vmatprep.subr.bf16.mxu0 0
    %1290 = vmatpush2.bf16.msra.mxu0 0
    %1291 = vmatprep.subr.bf16.mxu0 0
    %1292 = vmatpush2.bf16.msra.mxu0 0
    %1293 = vmatprep.subr.bf16.mxu0 0
    %1294 = vmatpush2.bf16.msra.mxu0 0
    %1295 = vmatprep.subr.bf16.mxu0 0
    %1296 = vmatpush2.bf16.msra.mxu0 0
    %1297 = vmatprep.subr.bf16.mxu0 0
    %1298 = vmatpush2.bf16.msra.mxu0 0
    %1299 = vmatprep.subr.bf16.mxu0 0
    %1300 = vmatpush2.bf16.msra.mxu0 0
    %1301 = vmatprep.subr.bf16.mxu0 0
    %1302 = vmatpush2.bf16.msra.mxu0 0
    %1303 = vmatprep.mubr.bf16.mxu0 0
    %1304 = vmatmul.mubr.bf16.gmra.mxu0 %v1191
    %v1305 = vpop.f32.mrf.mxu0
    %v1306 = vadd.f32 0.0, %v1305
    %v1307 = vpop.f32.mrf.mxu0
    %v1308 = vpop.f32.mrf.mxu0
    %v1309 = vpop.f32.mrf.mxu0
    %1310 = vdwg.mxu0
    %v1311 = vadd.f32 %v1270, %v1306
    %v1312 = vxor.u32 %v1311, 2147483648
    %v1313 = vmul.f32 %v1312, 1.442695
    %v1314 = vpow.pop %v1313
    %v1315 = vadd.f32 %v1314, 1.0
    %v1316 = vrcp.pop %v1315
    %v1317 = vmul.f32 1.0, %v1316
    %v1318 = vtanh.pop %v1311
    %v1319 = vmul.f32 %v1317, %v1179
    %1321 = vrot.lane.b32.xlu0 %v1318, 64
    %v1322 = vpop.permute.xlu0 %1321
    %v1324 = vmul.f32 %v1317, %v1322
    %1326 = vrot.lane.b32.xlu0 %v1324, 32
    %v1327 = vpop.permute.xlu0 %1326
    %v1329 = vadd.f32 %v1319, %v1327
    %v1330 = vtanh.pop %v1329
    %1332 = vrot.lane.b32.xlu0 %v1330, 64
    %v1333 = vpop.permute.xlu0 %1332
    %v1335 = vmul.f32 %v1317, %v1333
    %v1336 = vpack.c.bf16 %v1335, %v1335
    %1338 = vrot.lane.b32.xlu0 %v1336, 32
    %v1339 = vpop.permute.xlu0 %1338
    %v1341 = vsel %vm212, %v1339, 0
    %1343 = vmatprep.subr.bf16.mxu0 0
    %1344 = vmatpush1.bf16.msra.mxu0 0
    %1345 = vmatprep.subr.bf16.mxu0 0
    %1346 = vmatpush1.bf16.msra.mxu0 0
    %1347 = vmatprep.subr.bf16.mxu0 0
    %1348 = vmatpush1.bf16.msra.mxu0 0
    %1349 = vmatprep.subr.bf16.mxu0 0
    %1350 = vmatpush1.bf16.msra.mxu0 0
    %1351 = vmatprep.subr.bf16.mxu0 0
    %1352 = vmatpush1.bf16.msra.mxu0 0
    %1353 = vmatprep.subr.bf16.mxu0 0
    %1354 = vmatpush1.bf16.msra.mxu0 0
    %1355 = vmatprep.subr.bf16.mxu0 0
    %1356 = vmatpush1.bf16.msra.mxu0 %v1156
    %1357 = vmatprep.subr.bf16.mxu0 0
    %1358 = vmatpush1.bf16.msra.mxu0 %v1155
    %1359 = vmatprep.subr.bf16.mxu0 0
    %1360 = vmatpush2.bf16.msra.mxu0 0
    %1361 = vmatprep.subr.bf16.mxu0 0
    %1362 = vmatpush2.bf16.msra.mxu0 0
    %1363 = vmatprep.subr.bf16.mxu0 0
    %1364 = vmatpush2.bf16.msra.mxu0 0
    %1365 = vmatprep.subr.bf16.mxu0 0
    %1366 = vmatpush2.bf16.msra.mxu0 0
    %1367 = vmatprep.subr.bf16.mxu0 0
    %1368 = vmatpush2.bf16.msra.mxu0 0
    %1369 = vmatprep.subr.bf16.mxu0 0
    %1370 = vmatpush2.bf16.msra.mxu0 0
    %1371 = vmatprep.subr.bf16.mxu0 0
    %1372 = vmatpush2.bf16.msra.mxu0 0
    %1373 = vmatprep.subr.bf16.mxu0 0
    %1374 = vmatpush2.bf16.msra.mxu0 0
    %1375 = vmatprep.mubr.bf16.mxu0 0
    %1376 = vmatmul.mubr.bf16.gmra.mxu0 %v1341
    %v1377 = vpop.f32.mrf.mxu0
    %v1378 = vadd.f32 0.0, %v1377
    %v1379 = vpop.f32.mrf.mxu0
    %v1380 = vpop.f32.mrf.mxu0
    %v1381 = vpop.f32.mrf.mxu0
    %1382 = vdwg.mxu0
    %v1383 = vadd.f32 %v1069, %v1378
    %v1384 = vpack.c.bf16 %v1257, %v1257
    %1386 = vrot.lane.b32.xlu0 %v1384, 32
    %v1387 = vpop.permute.xlu0 %1386
    %v1389 = vsel %vm212, %v1387, 0
    %1391 = vmatprep.subr.bf16.mxu0 0
    %1392 = vmatpush1.bf16.msra.mxu0 0
    %1393 = vmatprep.subr.bf16.mxu0 0
    %1394 = vmatpush1.bf16.msra.mxu0 0
    %1395 = vmatprep.subr.bf16.mxu0 0
    %1396 = vmatpush1.bf16.msra.mxu0 0
    %1397 = vmatprep.subr.bf16.mxu0 0
    %1398 = vmatpush1.bf16.msra.mxu0 0
    %1399 = vmatprep.subr.bf16.mxu0 0
    %1400 = vmatpush1.bf16.msra.mxu0 0
    %1401 = vmatprep.subr.bf16.mxu0 0
    %1402 = vmatpush1.bf16.msra.mxu0 0
    %1403 = vmatprep.subr.bf16.mxu0 0
    %1404 = vmatpush1.bf16.msra.mxu0 %v1158
    %1405 = vmatprep.subr.bf16.mxu0 0
    %1406 = vmatpush1.bf16.msra.mxu0 %v1157
    %1407 = vmatprep.subr.bf16.mxu0 0
    %1408 = vmatpush2.bf16.msra.mxu0 0
    %1409 = vmatprep.subr.bf16.mxu0 0
    %1410 = vmatpush2.bf16.msra.mxu0 0
    %1411 = vmatprep.subr.bf16.mxu0 0
    %1412 = vmatpush2.bf16.msra.mxu0 0
    %1413 = vmatprep.subr.bf16.mxu0 0
    %1414 = vmatpush2.bf16.msra.mxu0 0
    %1415 = vmatprep.subr.bf16.mxu0 0
    %1416 = vmatpush2.bf16.msra.mxu0 0
    %1417 = vmatprep.subr.bf16.mxu0 0
    %1418 = vmatpush2.bf16.msra.mxu0 0
    %1419 = vmatprep.subr.bf16.mxu0 0
    %1420 = vmatpush2.bf16.msra.mxu0 0
    %1421 = vmatprep.subr.bf16.mxu0 0
    %1422 = vmatpush2.bf16.msra.mxu0 0
    %1423 = vmatprep.mubr.bf16.mxu0 0
    %1424 = vmatmul.mubr.bf16.gmra.mxu0 %v1389
    %v1425 = vpop.f32.mrf.mxu0
    %v1426 = vadd.f32 0.0, %v1425
    %v1427 = vpop.f32.mrf.mxu0
    %v1428 = vpop.f32.mrf.mxu0
    %v1429 = vpop.f32.mrf.mxu0
    %1430 = vdwg.mxu0
    %v1431 = vadd.f32 %v1383, %v1426
    %v1432 = vxor.u32 %v1431, 2147483648
    %v1433 = vmul.f32 %v1432, 1.442695
    %v1434 = vpow.pop %v1433
    %v1435 = vadd.f32 %v1434, 1.0
    %v1436 = vrcp.pop %v1435
    %v1437 = vmul.f32 1.0, %v1436
    %v1438 = vtanh.pop %v1431
    %v1439 = vmul.f32 %v1437, %v1251
    %1441 = vrot.lane.b32.xlu0 %v1438, 64
    %v1442 = vpop.permute.xlu0 %1441
    %v1444 = vmul.f32 %v1437, %v1442
    %1446 = vrot.lane.b32.xlu0 %v1444, 32
    %v1447 = vpop.permute.xlu0 %1446
    %v1449 = vadd.f32 %v1439, %v1447
    %v1450 = vtanh.pop %v1449
    %1452 = vrot.lane.b32.xlu0 %v1450, 64
    %v1453 = vpop.permute.xlu0 %1452
    %v1455 = vmul.f32 %v1437, %v1453
    %1457 = vrot.lane.b32.xlu0 %v1335, 32
    %v1458 = vpop.permute.xlu0 %1457
    %1460 = vst.msk [vmem:[#allocation3 + $0x1] sm:$0x1] %vm1262, %v1458
    %1462 = vrot.lane.b32.xlu0 %v1455, 32
    %v1463 = vpop.permute.xlu0 %1462
    %1465 = vst.msk [vmem:[#allocation4 + $0x1] sm:$0x1] %vm1262, %v1463
    %v1466 = vld [vmem:[#allocation2 + $0x2] sm:$0x1]
    %1467 = vmatprep.subr.bf16.mxu0 0
    %1468 = vmatpush1.bf16.msra.mxu0 0
    %1469 = vmatprep.subr.bf16.mxu0 0
    %1470 = vmatpush1.bf16.msra.mxu0 0
    %1471 = vmatprep.subr.bf16.mxu0 0
    %1472 = vmatpush1.bf16.msra.mxu0 0
    %1473 = vmatprep.subr.bf16.mxu0 0
    %1474 = vmatpush1.bf16.msra.mxu0 0
    %1475 = vmatprep.subr.bf16.mxu0 0
    %1476 = vmatpush1.bf16.msra.mxu0 0
    %1477 = vmatprep.subr.bf16.mxu0 0
    %1478 = vmatpush1.bf16.msra.mxu0 0
    %1479 = vmatprep.subr.bf16.mxu0 0
    %1480 = vmatpush1.bf16.msra.mxu0 %v1152
    %1481 = vmatprep.subr.bf16.mxu0 0
    %1482 = vmatpush1.bf16.msra.mxu0 %v1151
    %1483 = vmatprep.subr.bf16.mxu0 0
    %1484 = vmatpush2.bf16.msra.mxu0 0
    %1485 = vmatprep.subr.bf16.mxu0 0
    %1486 = vmatpush2.bf16.msra.mxu0 0
    %1487 = vmatprep.subr.bf16.mxu0 0
    %1488 = vmatpush2.bf16.msra.mxu0 0
    %1489 = vmatprep.subr.bf16.mxu0 0
    %1490 = vmatpush2.bf16.msra.mxu0 0
    %1491 = vmatprep.subr.bf16.mxu0 0
    %1492 = vmatpush2.bf16.msra.mxu0 0
    %1493 = vmatprep.subr.bf16.mxu0 0
    %1494 = vmatpush2.bf16.msra.mxu0 0
    %1495 = vmatprep.subr.bf16.mxu0 0
    %1496 = vmatpush2.bf16.msra.mxu0 0
    %1497 = vmatprep.subr.bf16.mxu0 0
    %1498 = vmatpush2.bf16.msra.mxu0 0
    %1499 = vmatprep.mubr.bf16.mxu0 0
    %1500 = vmatmul.mubr.bf16.gmra.mxu0 %v1341
    %v1501 = vpop.f32.mrf.mxu0
    %v1502 = vadd.f32 0.0, %v1501
    %v1503 = vpop.f32.mrf.mxu0
    %v1504 = vpop.f32.mrf.mxu0
    %v1505 = vpop.f32.mrf.mxu0
    %1506 = vdwg.mxu0
    %v1507 = vadd.f32 %v1466, %v1502
    %1508 = vmatprep.subr.bf16.mxu0 0
    %1509 = vmatpush1.bf16.msra.mxu0 0
    %1510 = vmatprep.subr.bf16.mxu0 0
    %1511 = vmatpush1.bf16.msra.mxu0 0
    %1512 = vmatprep.subr.bf16.mxu0 0
    %1513 = vmatpush1.bf16.msra.mxu0 0
    %1514 = vmatprep.subr.bf16.mxu0 0
    %1515 = vmatpush1.bf16.msra.mxu0 0
    %1516 = vmatprep.subr.bf16.mxu0 0
    %1517 = vmatpush1.bf16.msra.mxu0 0
    %1518 = vmatprep.subr.bf16.mxu0 0
    %1519 = vmatpush1.bf16.msra.mxu0 0
    %1520 = vmatprep.subr.bf16.mxu0 0
    %1521 = vmatpush1.bf16.msra.mxu0 %v1154
    %1522 = vmatprep.subr.bf16.mxu0 0
    %1523 = vmatpush1.bf16.msra.mxu0 %v1153
    %1524 = vmatprep.subr.bf16.mxu0 0
    %1525 = vmatpush2.bf16.msra.mxu0 0
    %1526 = vmatprep.subr.bf16.mxu0 0
    %1527 = vmatpush2.bf16.msra.mxu0 0
    %1528 = vmatprep.subr.bf16.mxu0 0
    %1529 = vmatpush2.bf16.msra.mxu0 0
    %1530 = vmatprep.subr.bf16.mxu0 0
    %1531 = vmatpush2.bf16.msra.mxu0 0
    %1532 = vmatprep.subr.bf16.mxu0 0
    %1533 = vmatpush2.bf16.msra.mxu0 0
    %1534 = vmatprep.subr.bf16.mxu0 0
    %1535 = vmatpush2.bf16.msra.mxu0 0
    %1536 = vmatprep.subr.bf16.mxu0 0
    %1537 = vmatpush2.bf16.msra.mxu0 0
    %1538 = vmatprep.subr.bf16.mxu0 0
    %1539 = vmatpush2.bf16.msra.mxu0 0
    %1540 = vmatprep.mubr.bf16.mxu0 0
    %1541 = vmatmul.mubr.bf16.gmra.mxu0 %v1389
    %v1542 = vpop.f32.mrf.mxu0
    %v1543 = vadd.f32 0.0, %v1542
    %v1544 = vpop.f32.mrf.mxu0
    %v1545 = vpop.f32.mrf.mxu0
    %v1546 = vpop.f32.mrf.mxu0
    %1547 = vdwg.mxu0
    %v1548 = vadd.f32 %v1507, %v1543
    %v1549 = vxor.u32 %v1548, 2147483648
    %v1550 = vmul.f32 %v1549, 1.442695
    %v1551 = vpow.pop %v1550
    %v1552 = vadd.f32 %v1551, 1.0
    %v1553 = vrcp.pop %v1552
    %v1554 = vmul.f32 1.0, %v1553
    %v1555 = vtanh.pop %v1548
    %v1556 = vmul.f32 %v1554, %v1329
    %1558 = vrot.lane.b32.xlu0 %v1555, 64
    %v1559 = vpop.permute.xlu0 %1558
    %v1561 = vmul.f32 %v1554, %v1559
    %1563 = vrot.lane.b32.xlu0 %v1561, 32
    %v1564 = vpop.permute.xlu0 %1563
    %v1566 = vadd.f32 %v1556, %v1564
    %v1567 = vtanh.pop %v1566
    %1569 = vrot.lane.b32.xlu0 %v1567, 64
    %v1570 = vpop.permute.xlu0 %1569
    %v1572 = vmul.f32 %v1554, %v1570
    %v1573 = vpack.c.bf16 %v1572, %v1572
    %1575 = vrot.lane.b32.xlu0 %v1573, 32
    %v1576 = vpop.permute.xlu0 %1575
    %v1578 = vsel %vm212, %v1576, 0
    %1580 = vmatprep.subr.bf16.mxu0 0
    %1581 = vmatpush1.bf16.msra.mxu0 0
    %1582 = vmatprep.subr.bf16.mxu0 0
    %1583 = vmatpush1.bf16.msra.mxu0 0
    %1584 = vmatprep.subr.bf16.mxu0 0
    %1585 = vmatpush1.bf16.msra.mxu0 0
    %1586 = vmatprep.subr.bf16.mxu0 0
    %1587 = vmatpush1.bf16.msra.mxu0 0
    %1588 = vmatprep.subr.bf16.mxu0 0
    %1589 = vmatpush1.bf16.msra.mxu0 0
    %1590 = vmatprep.subr.bf16.mxu0 0
    %1591 = vmatpush1.bf16.msra.mxu0 0
    %1592 = vmatprep.subr.bf16.mxu0 0
    %1593 = vmatpush1.bf16.msra.mxu0 %v1156
    %1594 = vmatprep.subr.bf16.mxu0 0
    %1595 = vmatpush1.bf16.msra.mxu0 %v1155
    %1596 = vmatprep.subr.bf16.mxu0 0
    %1597 = vmatpush2.bf16.msra.mxu0 0
    %1598 = vmatprep.subr.bf16.mxu0 0
    %1599 = vmatpush2.bf16.msra.mxu0 0
    %1600 = vmatprep.subr.bf16.mxu0 0
    %1601 = vmatpush2.bf16.msra.mxu0 0
    %1602 = vmatprep.subr.bf16.mxu0 0
    %1603 = vmatpush2.bf16.msra.mxu0 0
    %1604 = vmatprep.subr.bf16.mxu0 0
    %1605 = vmatpush2.bf16.msra.mxu0 0
    %1606 = vmatprep.subr.bf16.mxu0 0
    %1607 = vmatpush2.bf16.msra.mxu0 0
    %1608 = vmatprep.subr.bf16.mxu0 0
    %1609 = vmatpush2.bf16.msra.mxu0 0
    %1610 = vmatprep.subr.bf16.mxu0 0
    %1611 = vmatpush2.bf16.msra.mxu0 0
    %1612 = vmatprep.mubr.bf16.mxu0 0
    %1613 = vmatmul.mubr.bf16.gmra.mxu0 %v1578
    %v1614 = vpop.f32.mrf.mxu0
    %v1615 = vadd.f32 0.0, %v1614
    %v1616 = vpop.f32.mrf.mxu0
    %v1617 = vpop.f32.mrf.mxu0
    %v1618 = vpop.f32.mrf.mxu0
    %1619 = vdwg.mxu0
    %v1620 = vadd.f32 %v1069, %v1615
    %v1621 = vpack.c.bf16 %v1455, %v1455
    %1623 = vrot.lane.b32.xlu0 %v1621, 32
    %v1624 = vpop.permute.xlu0 %1623
    %v1626 = vsel %vm212, %v1624, 0
    %1628 = vmatprep.subr.bf16.mxu0 0
    %1629 = vmatpush1.bf16.msra.mxu0 0
    %1630 = vmatprep.subr.bf16.mxu0 0
    %1631 = vmatpush1.bf16.msra.mxu0 0
    %1632 = vmatprep.subr.bf16.mxu0 0
    %1633 = vmatpush1.bf16.msra.mxu0 0
    %1634 = vmatprep.subr.bf16.mxu0 0
    %1635 = vmatpush1.bf16.msra.mxu0 0
    %1636 = vmatprep.subr.bf16.mxu0 0
    %1637 = vmatpush1.bf16.msra.mxu0 0
    %1638 = vmatprep.subr.bf16.mxu0 0
    %1639 = vmatpush1.bf16.msra.mxu0 0
    %1640 = vmatprep.subr.bf16.mxu0 0
    %1641 = vmatpush1.bf16.msra.mxu0 %v1158
    %1642 = vmatprep.subr.bf16.mxu0 0
    %1643 = vmatpush1.bf16.msra.mxu0 %v1157
    %1644 = vmatprep.subr.bf16.mxu0 0
    %1645 = vmatpush2.bf16.msra.mxu0 0
    %1646 = vmatprep.subr.bf16.mxu0 0
    %1647 = vmatpush2.bf16.msra.mxu0 0
    %1648 = vmatprep.subr.bf16.mxu0 0
    %1649 = vmatpush2.bf16.msra.mxu0 0
    %1650 = vmatprep.subr.bf16.mxu0 0
    %1651 = vmatpush2.bf16.msra.mxu0 0
    %1652 = vmatprep.subr.bf16.mxu0 0
    %1653 = vmatpush2.bf16.msra.mxu0 0
    %1654 = vmatprep.subr.bf16.mxu0 0
    %1655 = vmatpush2.bf16.msra.mxu0 0
    %1656 = vmatprep.subr.bf16.mxu0 0
    %1657 = vmatpush2.bf16.msra.mxu0 0
    %1658 = vmatprep.subr.bf16.mxu0 0
    %1659 = vmatpush2.bf16.msra.mxu0 0
    %1660 = vmatprep.mubr.bf16.mxu0 0
    %1661 = vmatmul.mubr.bf16.gmra.mxu0 %v1626
    %v1662 = vpop.f32.mrf.mxu0
    %v1663 = vadd.f32 0.0, %v1662
    %v1664 = vpop.f32.mrf.mxu0
    %v1665 = vpop.f32.mrf.mxu0
    %v1666 = vpop.f32.mrf.mxu0
    %1667 = vdwg.mxu0
    %v1668 = vadd.f32 %v1620, %v1663
    %v1669 = vxor.u32 %v1668, 2147483648
    %v1670 = vmul.f32 %v1669, 1.442695
    %v1671 = vpow.pop %v1670
    %v1672 = vadd.f32 %v1671, 1.0
    %v1673 = vrcp.pop %v1672
    %v1674 = vmul.f32 1.0, %v1673
    %v1675 = vtanh.pop %v1668
    %v1676 = vmul.f32 %v1674, %v1449
    %1678 = vrot.lane.b32.xlu0 %v1675, 64
    %v1679 = vpop.permute.xlu0 %1678
    %v1681 = vmul.f32 %v1674, %v1679
    %1683 = vrot.lane.b32.xlu0 %v1681, 32
    %v1684 = vpop.permute.xlu0 %1683
    %v1686 = vadd.f32 %v1676, %v1684
    %v1687 = vtanh.pop %v1686
    %1689 = vrot.lane.b32.xlu0 %v1687, 64
    %v1690 = vpop.permute.xlu0 %1689
    %v1692 = vmul.f32 %v1674, %v1690
    %1694 = vrot.lane.b32.xlu0 %v1572, 32
    %v1695 = vpop.permute.xlu0 %1694
    %1697 = vst.msk [vmem:[#allocation3 + $0x2] sm:$0x1] %vm1262, %v1695
    %1699 = vrot.lane.b32.xlu0 %v1692, 32
    %v1700 = vpop.permute.xlu0 %1699
    %1702 = vst.msk [vmem:[#allocation4 + $0x2] sm:$0x1] %vm1262, %v1700
    %v1703 = vld [vmem:[#allocation2 + $0x3] sm:$0x1]
    %1704 = vmatprep.subr.bf16.mxu0 0
    %1705 = vmatpush1.bf16.msra.mxu0 0
    %1706 = vmatprep.subr.bf16.mxu0 0
    %1707 = vmatpush1.bf16.msra.mxu0 0
    %1708 = vmatprep.subr.bf16.mxu0 0
    %1709 = vmatpush1.bf16.msra.mxu0 0
    %1710 = vmatprep.subr.bf16.mxu0 0
    %1711 = vmatpush1.bf16.msra.mxu0 0
    %1712 = vmatprep.subr.bf16.mxu0 0
    %1713 = vmatpush1.bf16.msra.mxu0 0
    %1714 = vmatprep.subr.bf16.mxu0 0
    %1715 = vmatpush1.bf16.msra.mxu0 0
    %1716 = vmatprep.subr.bf16.mxu0 0
    %1717 = vmatpush1.bf16.msra.mxu0 %v1152
    %1718 = vmatprep.subr.bf16.mxu0 0
    %1719 = vmatpush1.bf16.msra.mxu0 %v1151
    %1720 = vmatprep.subr.bf16.mxu0 0
    %1721 = vmatpush2.bf16.msra.mxu0 0
    %1722 = vmatprep.subr.bf16.mxu0 0
    %1723 = vmatpush2.bf16.msra.mxu0 0
    %1724 = vmatprep.subr.bf16.mxu0 0
    %1725 = vmatpush2.bf16.msra.mxu0 0
    %1726 = vmatprep.subr.bf16.mxu0 0
    %1727 = vmatpush2.bf16.msra.mxu0 0
    %1728 = vmatprep.subr.bf16.mxu0 0
    %1729 = vmatpush2.bf16.msra.mxu0 0
    %1730 = vmatprep.subr.bf16.mxu0 0
    %1731 = vmatpush2.bf16.msra.mxu0 0
    %1732 = vmatprep.subr.bf16.mxu0 0
    %1733 = vmatpush2.bf16.msra.mxu0 0
    %1734 = vmatprep.subr.bf16.mxu0 0
    %1735 = vmatpush2.bf16.msra.mxu0 0
    %1736 = vmatprep.mubr.bf16.mxu0 0
    %1737 = vmatmul.mubr.bf16.gmra.mxu0 %v1578
    %v1738 = vpop.f32.mrf.mxu0
    %v1739 = vadd.f32 0.0, %v1738
    %v1740 = vpop.f32.mrf.mxu0
    %v1741 = vpop.f32.mrf.mxu0
    %v1742 = vpop.f32.mrf.mxu0
    %1743 = vdwg.mxu0
    %v1744 = vadd.f32 %v1703, %v1739
    %1745 = vmatprep.subr.bf16.mxu0 0
    %1746 = vmatpush1.bf16.msra.mxu0 0
    %1747 = vmatprep.subr.bf16.mxu0 0
    %1748 = vmatpush1.bf16.msra.mxu0 0
    %1749 = vmatprep.subr.bf16.mxu0 0
    %1750 = vmatpush1.bf16.msra.mxu0 0
    %1751 = vmatprep.subr.bf16.mxu0 0
    %1752 = vmatpush1.bf16.msra.mxu0 0
    %1753 = vmatprep.subr.bf16.mxu0 0
    %1754 = vmatpush1.bf16.msra.mxu0 0
    %1755 = vmatprep.subr.bf16.mxu0 0
    %1756 = vmatpush1.bf16.msra.mxu0 0
    %1757 = vmatprep.subr.bf16.mxu0 0
    %1758 = vmatpush1.bf16.msra.mxu0 %v1154
    %1759 = vmatprep.subr.bf16.mxu0 0
    %1760 = vmatpush1.bf16.msra.mxu0 %v1153
    %1761 = vmatprep.subr.bf16.mxu0 0
    %1762 = vmatpush2.bf16.msra.mxu0 0
    %1763 = vmatprep.subr.bf16.mxu0 0
    %1764 = vmatpush2.bf16.msra.mxu0 0
    %1765 = vmatprep.subr.bf16.mxu0 0
    %1766 = vmatpush2.bf16.msra.mxu0 0
    %1767 = vmatprep.subr.bf16.mxu0 0
    %1768 = vmatpush2.bf16.msra.mxu0 0
    %1769 = vmatprep.subr.bf16.mxu0 0
    %1770 = vmatpush2.bf16.msra.mxu0 0
    %1771 = vmatprep.subr.bf16.mxu0 0
    %1772 = vmatpush2.bf16.msra.mxu0 0
    %1773 = vmatprep.subr.bf16.mxu0 0
    %1774 = vmatpush2.bf16.msra.mxu0 0
    %1775 = vmatprep.subr.bf16.mxu0 0
    %1776 = vmatpush2.bf16.msra.mxu0 0
    %1777 = vmatprep.mubr.bf16.mxu0 0
    %1778 = vmatmul.mubr.bf16.gmra.mxu0 %v1626
    %v1779 = vpop.f32.mrf.mxu0
    %v1780 = vadd.f32 0.0, %v1779
    %v1781 = vpop.f32.mrf.mxu0
    %v1782 = vpop.f32.mrf.mxu0
    %v1783 = vpop.f32.mrf.mxu0
    %1784 = vdwg.mxu0
    %v1785 = vadd.f32 %v1744, %v1780
    %v1786 = vxor.u32 %v1785, 2147483648
    %v1787 = vmul.f32 %v1786, 1.442695
    %v1788 = vpow.pop %v1787
    %v1789 = vadd.f32 %v1788, 1.0
    %v1790 = vrcp.pop %v1789
    %v1791 = vmul.f32 1.0, %v1790
    %v1792 = vtanh.pop %v1785
    %v1793 = vmul.f32 %v1791, %v1566
    %1795 = vrot.lane.b32.xlu0 %v1792, 64
    %v1796 = vpop.permute.xlu0 %1795
    %v1798 = vmul.f32 %v1791, %v1796
    %1800 = vrot.lane.b32.xlu0 %v1798, 32
    %v1801 = vpop.permute.xlu0 %1800
    %v1803 = vadd.f32 %v1793, %v1801
    %v1804 = vtanh.pop %v1803
    %1806 = vrot.lane.b32.xlu0 %v1804, 64
    %v1807 = vpop.permute.xlu0 %1806
    %v1809 = vmul.f32 %v1791, %v1807
    %v1810 = vpack.c.bf16 %v1809, %v1809
    %1812 = vrot.lane.b32.xlu0 %v1810, 32
    %v1813 = vpop.permute.xlu0 %1812
    %v1815 = vsel %vm212, %v1813, 0
    %1817 = vmatprep.subr.bf16.mxu0 0
    %1818 = vmatpush1.bf16.msra.mxu0 0
    %1819 = vmatprep.subr.bf16.mxu0 0
    %1820 = vmatpush1.bf16.msra.mxu0 0
    %1821 = vmatprep.subr.bf16.mxu0 0
    %1822 = vmatpush1.bf16.msra.mxu0 0
    %1823 = vmatprep.subr.bf16.mxu0 0
    %1824 = vmatpush1.bf16.msra.mxu0 0
    %1825 = vmatprep.subr.bf16.mxu0 0
    %1826 = vmatpush1.bf16.msra.mxu0 0
    %1827 = vmatprep.subr.bf16.mxu0 0
    %1828 = vmatpush1.bf16.msra.mxu0 0
    %1829 = vmatprep.subr.bf16.mxu0 0
    %1830 = vmatpush1.bf16.msra.mxu0 %v1156
    %1831 = vmatprep.subr.bf16.mxu0 0
    %1832 = vmatpush1.bf16.msra.mxu0 %v1155
    %1833 = vmatprep.subr.bf16.mxu0 0
    %1834 = vmatpush2.bf16.msra.mxu0 0
    %1835 = vmatprep.subr.bf16.mxu0 0
    %1836 = vmatpush2.bf16.msra.mxu0 0
    %1837 = vmatprep.subr.bf16.mxu0 0
    %1838 = vmatpush2.bf16.msra.mxu0 0
    %1839 = vmatprep.subr.bf16.mxu0 0
    %1840 = vmatpush2.bf16.msra.mxu0 0
    %1841 = vmatprep.subr.bf16.mxu0 0
    %1842 = vmatpush2.bf16.msra.mxu0 0
    %1843 = vmatprep.subr.bf16.mxu0 0
    %1844 = vmatpush2.bf16.msra.mxu0 0
    %1845 = vmatprep.subr.bf16.mxu0 0
    %1846 = vmatpush2.bf16.msra.mxu0 0
    %1847 = vmatprep.subr.bf16.mxu0 0
    %1848 = vmatpush2.bf16.msra.mxu0 0
    %1849 = vmatprep.mubr.bf16.mxu0 0
    %1850 = vmatmul.mubr.bf16.gmra.mxu0 %v1815
    %v1851 = vpop.f32.mrf.mxu0
    %v1852 = vadd.f32 0.0, %v1851
    %v1853 = vpop.f32.mrf.mxu0
    %v1854 = vpop.f32.mrf.mxu0
    %v1855 = vpop.f32.mrf.mxu0
    %1856 = vdwg.mxu0
    %v1857 = vadd.f32 %v1069, %v1852
    %v1858 = vpack.c.bf16 %v1692, %v1692
    %1860 = vrot.lane.b32.xlu0 %v1858, 32
    %v1861 = vpop.permute.xlu0 %1860
    %v1863 = vsel %vm212, %v1861, 0
    %1865 = vmatprep.subr.bf16.mxu0 0
    %1866 = vmatpush1.bf16.msra.mxu0 0
    %1867 = vmatprep.subr.bf16.mxu0 0
    %1868 = vmatpush1.bf16.msra.mxu0 0
    %1869 = vmatprep.subr.bf16.mxu0 0
    %1870 = vmatpush1.bf16.msra.mxu0 0
    %1871 = vmatprep.subr.bf16.mxu0 0
    %1872 = vmatpush1.bf16.msra.mxu0 0
    %1873 = vmatprep.subr.bf16.mxu0 0
    %1874 = vmatpush1.bf16.msra.mxu0 0
    %1875 = vmatprep.subr.bf16.mxu0 0
    %1876 = vmatpush1.bf16.msra.mxu0 0
    %1877 = vmatprep.subr.bf16.mxu0 0
    %1878 = vmatpush1.bf16.msra.mxu0 %v1158
    %1879 = vmatprep.subr.bf16.mxu0 0
    %1880 = vmatpush1.bf16.msra.mxu0 %v1157
    %1881 = vmatprep.subr.bf16.mxu0 0
    %1882 = vmatpush2.bf16.msra.mxu0 0
    %1883 = vmatprep.subr.bf16.mxu0 0
    %1884 = vmatpush2.bf16.msra.mxu0 0
    %1885 = vmatprep.subr.bf16.mxu0 0
    %1886 = vmatpush2.bf16.msra.mxu0 0
    %1887 = vmatprep.subr.bf16.mxu0 0
    %1888 = vmatpush2.bf16.msra.mxu0 0
    %1889 = vmatprep.subr.bf16.mxu0 0
    %1890 = vmatpush2.bf16.msra.mxu0 0
    %1891 = vmatprep.subr.bf16.mxu0 0
    %1892 = vmatpush2.bf16.msra.mxu0 0
    %1893 = vmatprep.subr.bf16.mxu0 0
    %1894 = vmatpush2.bf16.msra.mxu0 0
    %1895 = vmatprep.subr.bf16.mxu0 0
    %1896 = vmatpush2.bf16.msra.mxu0 0
    %1897 = vmatprep.mubr.bf16.mxu0 0
    %1898 = vmatmul.mubr.bf16.gmra.mxu0 %v1863
    %v1899 = vpop.f32.mrf.mxu0
    %v1900 = vadd.f32 0.0, %v1899
    %v1901 = vpop.f32.mrf.mxu0
    %v1902 = vpop.f32.mrf.mxu0
    %v1903 = vpop.f32.mrf.mxu0
    %1904 = vdwg.mxu0
    %v1905 = vadd.f32 %v1857, %v1900
    %v1906 = vxor.u32 %v1905, 2147483648
    %v1907 = vmul.f32 %v1906, 1.442695
    %v1908 = vpow.pop %v1907
    %v1909 = vadd.f32 %v1908, 1.0
    %v1910 = vrcp.pop %v1909
    %v1911 = vmul.f32 1.0, %v1910
    %v1912 = vtanh.pop %v1905
    %v1913 = vmul.f32 %v1911, %v1686
    %1915 = vrot.lane.b32.xlu0 %v1912, 64
    %v1916 = vpop.permute.xlu0 %1915
    %v1918 = vmul.f32 %v1911, %v1916
    %1920 = vrot.lane.b32.xlu0 %v1918, 32
    %v1921 = vpop.permute.xlu0 %1920
    %v1923 = vadd.f32 %v1913, %v1921
    %v1924 = vtanh.pop %v1923
    %1926 = vrot.lane.b32.xlu0 %v1924, 64
    %v1927 = vpop.permute.xlu0 %1926
    %v1929 = vmul.f32 %v1911, %v1927
    %1931 = vrot.lane.b32.xlu0 %v1809, 32
    %v1932 = vpop.permute.xlu0 %1931
    %1934 = vst.msk [vmem:[#allocation3 + $0x3] sm:$0x1] %vm1262, %v1932
    %1936 = vrot.lane.b32.xlu0 %v1929, 32
    %v1937 = vpop.permute.xlu0 %1936
    %1939 = vst.msk [vmem:[#allocation4 + $0x3] sm:$0x1] %vm1262, %v1937
    %v1940 = vld [vmem:[#allocation2 + $0x4] sm:$0x1]
    %1941 = vmatprep.subr.bf16.mxu0 0
    %1942 = vmatpush1.bf16.msra.mxu0 0
    %1943 = vmatprep.subr.bf16.mxu0 0
    %1944 = vmatpush1.bf16.msra.mxu0 0
    %1945 = vmatprep.subr.bf16.mxu0 0
    %1946 = vmatpush1.bf16.msra.mxu0 0
    %1947 = vmatprep.subr.bf16.mxu0 0
    %1948 = vmatpush1.bf16.msra.mxu0 0
    %1949 = vmatprep.subr.bf16.mxu0 0
    %1950 = vmatpush1.bf16.msra.mxu0 0
    %1951 = vmatprep.subr.bf16.mxu0 0
    %1952 = vmatpush1.bf16.msra.mxu0 0
    %1953 = vmatprep.subr.bf16.mxu0 0
    %1954 = vmatpush1.bf16.msra.mxu0 %v1152
    %1955 = vmatprep.subr.bf16.mxu0 0
    %1956 = vmatpush1.bf16.msra.mxu0 %v1151
    %1957 = vmatprep.subr.bf16.mxu0 0
    %1958 = vmatpush2.bf16.msra.mxu0 0
    %1959 = vmatprep.subr.bf16.mxu0 0
    %1960 = vmatpush2.bf16.msra.mxu0 0
    %1961 = vmatprep.subr.bf16.mxu0 0
    %1962 = vmatpush2.bf16.msra.mxu0 0
    %1963 = vmatprep.subr.bf16.mxu0 0
    %1964 = vmatpush2.bf16.msra.mxu0 0
    %1965 = vmatprep.subr.bf16.mxu0 0
    %1966 = vmatpush2.bf16.msra.mxu0 0
    %1967 = vmatprep.subr.bf16.mxu0 0
    %1968 = vmatpush2.bf16.msra.mxu0 0
    %1969 = vmatprep.subr.bf16.mxu0 0
    %1970 = vmatpush2.bf16.msra.mxu0 0
    %1971 = vmatprep.subr.bf16.mxu0 0
    %1972 = vmatpush2.bf16.msra.mxu0 0
    %1973 = vmatprep.mubr.bf16.mxu0 0
    %1974 = vmatmul.mubr.bf16.gmra.mxu0 %v1815
    %v1975 = vpop.f32.mrf.mxu0
    %v1976 = vadd.f32 0.0, %v1975
    %v1977 = vpop.f32.mrf.mxu0
    %v1978 = vpop.f32.mrf.mxu0
    %v1979 = vpop.f32.mrf.mxu0
    %1980 = vdwg.mxu0
    %v1981 = vadd.f32 %v1940, %v1976
    %1982 = vmatprep.subr.bf16.mxu0 0
    %1983 = vmatpush1.bf16.msra.mxu0 0
    %1984 = vmatprep.subr.bf16.mxu0 0
    %1985 = vmatpush1.bf16.msra.mxu0 0
    %1986 = vmatprep.subr.bf16.mxu0 0
    %1987 = vmatpush1.bf16.msra.mxu0 0
    %1988 = vmatprep.subr.bf16.mxu0 0
    %1989 = vmatpush1.bf16.msra.mxu0 0
    %1990 = vmatprep.subr.bf16.mxu0 0
    %1991 = vmatpush1.bf16.msra.mxu0 0
    %1992 = vmatprep.subr.bf16.mxu0 0
    %1993 = vmatpush1.bf16.msra.mxu0 0
    %1994 = vmatprep.subr.bf16.mxu0 0
    %1995 = vmatpush1.bf16.msra.mxu0 %v1154
    %1996 = vmatprep.subr.bf16.mxu0 0
    %1997 = vmatpush1.bf16.msra.mxu0 %v1153
    %1998 = vmatprep.subr.bf16.mxu0 0
    %1999 = vmatpush2.bf16.msra.mxu0 0
    %2000 = vmatprep.subr.bf16.mxu0 0
    %2001 = vmatpush2.bf16.msra.mxu0 0
    %2002 = vmatprep.subr.bf16.mxu0 0
    %2003 = vmatpush2.bf16.msra.mxu0 0
    %2004 = vmatprep.subr.bf16.mxu0 0
    %2005 = vmatpush2.bf16.msra.mxu0 0
    %2006 = vmatprep.subr.bf16.mxu0 0
    %2007 = vmatpush2.bf16.msra.mxu0 0
    %2008 = vmatprep.subr.bf16.mxu0 0
    %2009 = vmatpush2.bf16.msra.mxu0 0
    %2010 = vmatprep.subr.bf16.mxu0 0
    %2011 = vmatpush2.bf16.msra.mxu0 0
    %2012 = vmatprep.subr.bf16.mxu0 0
    %2013 = vmatpush2.bf16.msra.mxu0 0
    %2014 = vmatprep.mubr.bf16.mxu0 0
    %2015 = vmatmul.mubr.bf16.gmra.mxu0 %v1863
    %v2016 = vpop.f32.mrf.mxu0
    %v2017 = vadd.f32 0.0, %v2016
    %v2018 = vpop.f32.mrf.mxu0
    %v2019 = vpop.f32.mrf.mxu0
    %v2020 = vpop.f32.mrf.mxu0
    %2021 = vdwg.mxu0
    %v2022 = vadd.f32 %v1981, %v2017
    %v2023 = vxor.u32 %v2022, 2147483648
    %v2024 = vmul.f32 %v2023, 1.442695
    %v2025 = vpow.pop %v2024
    %v2026 = vadd.f32 %v2025, 1.0
    %v2027 = vrcp.pop %v2026
    %v2028 = vmul.f32 1.0, %v2027
    %v2029 = vtanh.pop %v2022
    %v2030 = vmul.f32 %v2028, %v1803
    %2032 = vrot.lane.b32.xlu0 %v2029, 64
    %v2033 = vpop.permute.xlu0 %2032
    %v2035 = vmul.f32 %v2028, %v2033
    %2037 = vrot.lane.b32.xlu0 %v2035, 32
    %v2038 = vpop.permute.xlu0 %2037
    %v2040 = vadd.f32 %v2030, %v2038
    %v2041 = vtanh.pop %v2040
    %2043 = vrot.lane.b32.xlu0 %v2041, 64
    %v2044 = vpop.permute.xlu0 %2043
    %v2046 = vmul.f32 %v2028, %v2044
    %v2047 = vpack.c.bf16 %v2046, %v2046
    %2049 = vrot.lane.b32.xlu0 %v2047, 32
    %v2050 = vpop.permute.xlu0 %2049
    %v2052 = vsel %vm212, %v2050, 0
    %2054 = vmatprep.subr.bf16.mxu0 0
    %2055 = vmatpush1.bf16.msra.mxu0 0
    %2056 = vmatprep.subr.bf16.mxu0 0
    %2057 = vmatpush1.bf16.msra.mxu0 0
    %2058 = vmatprep.subr.bf16.mxu0 0
    %2059 = vmatpush1.bf16.msra.mxu0 0
    %2060 = vmatprep.subr.bf16.mxu0 0
    %2061 = vmatpush1.bf16.msra.mxu0 0
    %2062 = vmatprep.subr.bf16.mxu0 0
    %2063 = vmatpush1.bf16.msra.mxu0 0
    %2064 = vmatprep.subr.bf16.mxu0 0
    %2065 = vmatpush1.bf16.msra.mxu0 0
    %2066 = vmatprep.subr.bf16.mxu0 0
    %2067 = vmatpush1.bf16.msra.mxu0 %v1156
    %2068 = vmatprep.subr.bf16.mxu0 0
    %2069 = vmatpush1.bf16.msra.mxu0 %v1155
    %2070 = vmatprep.subr.bf16.mxu0 0
    %2071 = vmatpush2.bf16.msra.mxu0 0
    %2072 = vmatprep.subr.bf16.mxu0 0
    %2073 = vmatpush2.bf16.msra.mxu0 0
    %2074 = vmatprep.subr.bf16.mxu0 0
    %2075 = vmatpush2.bf16.msra.mxu0 0
    %2076 = vmatprep.subr.bf16.mxu0 0
    %2077 = vmatpush2.bf16.msra.mxu0 0
    %2078 = vmatprep.subr.bf16.mxu0 0
    %2079 = vmatpush2.bf16.msra.mxu0 0
    %2080 = vmatprep.subr.bf16.mxu0 0
    %2081 = vmatpush2.bf16.msra.mxu0 0
    %2082 = vmatprep.subr.bf16.mxu0 0
    %2083 = vmatpush2.bf16.msra.mxu0 0
    %2084 = vmatprep.subr.bf16.mxu0 0
    %2085 = vmatpush2.bf16.msra.mxu0 0
    %2086 = vmatprep.mubr.bf16.mxu0 0
    %2087 = vmatmul.mubr.bf16.gmra.mxu0 %v2052
    %v2088 = vpop.f32.mrf.mxu0
    %v2089 = vadd.f32 0.0, %v2088
    %v2090 = vpop.f32.mrf.mxu0
    %v2091 = vpop.f32.mrf.mxu0
    %v2092 = vpop.f32.mrf.mxu0
    %2093 = vdwg.mxu0
    %v2094 = vadd.f32 %v1069, %v2089
    %v2095 = vpack.c.bf16 %v1929, %v1929
    %2097 = vrot.lane.b32.xlu0 %v2095, 32
    %v2098 = vpop.permute.xlu0 %2097
    %v2100 = vsel %vm212, %v2098, 0
    %2102 = vmatprep.subr.bf16.mxu0 0
    %2103 = vmatpush1.bf16.msra.mxu0 0
    %2104 = vmatprep.subr.bf16.mxu0 0
    %2105 = vmatpush1.bf16.msra.mxu0 0
    %2106 = vmatprep.subr.bf16.mxu0 0
    %2107 = vmatpush1.bf16.msra.mxu0 0
    %2108 = vmatprep.subr.bf16.mxu0 0
    %2109 = vmatpush1.bf16.msra.mxu0 0
    %2110 = vmatprep.subr.bf16.mxu0 0
    %2111 = vmatpush1.bf16.msra.mxu0 0
    %2112 = vmatprep.subr.bf16.mxu0 0
    %2113 = vmatpush1.bf16.msra.mxu0 0
    %2114 = vmatprep.subr.bf16.mxu0 0
    %2115 = vmatpush1.bf16.msra.mxu0 %v1158
    %2116 = vmatprep.subr.bf16.mxu0 0
    %2117 = vmatpush1.bf16.msra.mxu0 %v1157
    %2118 = vmatprep.subr.bf16.mxu0 0
    %2119 = vmatpush2.bf16.msra.mxu0 0
    %2120 = vmatprep.subr.bf16.mxu0 0
    %2121 = vmatpush2.bf16.msra.mxu0 0
    %2122 = vmatprep.subr.bf16.mxu0 0
    %2123 = vmatpush2.bf16.msra.mxu0 0
    %2124 = vmatprep.subr.bf16.mxu0 0
    %2125 = vmatpush2.bf16.msra.mxu0 0
    %2126 = vmatprep.subr.bf16.mxu0 0
    %2127 = vmatpush2.bf16.msra.mxu0 0
    %2128 = vmatprep.subr.bf16.mxu0 0
    %2129 = vmatpush2.bf16.msra.mxu0 0
    %2130 = vmatprep.subr.bf16.mxu0 0
    %2131 = vmatpush2.bf16.msra.mxu0 0
    %2132 = vmatprep.subr.bf16.mxu0 0
    %2133 = vmatpush2.bf16.msra.mxu0 0
    %2134 = vmatprep.mubr.bf16.mxu0 0
    %2135 = vmatmul.mubr.bf16.gmra.mxu0 %v2100
    %v2136 = vpop.f32.mrf.mxu0
    %v2137 = vadd.f32 0.0, %v2136
    %v2138 = vpop.f32.mrf.mxu0
    %v2139 = vpop.f32.mrf.mxu0
    %v2140 = vpop.f32.mrf.mxu0
    %2141 = vdwg.mxu0
    %v2142 = vadd.f32 %v2094, %v2137
    %v2143 = vxor.u32 %v2142, 2147483648
    %v2144 = vmul.f32 %v2143, 1.442695
    %v2145 = vpow.pop %v2144
    %v2146 = vadd.f32 %v2145, 1.0
    %v2147 = vrcp.pop %v2146
    %v2148 = vmul.f32 1.0, %v2147
    %v2149 = vtanh.pop %v2142
    %v2150 = vmul.f32 %v2148, %v1923
    %2152 = vrot.lane.b32.xlu0 %v2149, 64
    %v2153 = vpop.permute.xlu0 %2152
    %v2155 = vmul.f32 %v2148, %v2153
    %2157 = vrot.lane.b32.xlu0 %v2155, 32
    %v2158 = vpop.permute.xlu0 %2157
    %v2160 = vadd.f32 %v2150, %v2158
    %v2161 = vtanh.pop %v2160
    %2163 = vrot.lane.b32.xlu0 %v2161, 64
    %v2164 = vpop.permute.xlu0 %2163
    %v2166 = vmul.f32 %v2148, %v2164
    %2168 = vrot.lane.b32.xlu0 %v2046, 32
    %v2169 = vpop.permute.xlu0 %2168
    %2171 = vst.msk [vmem:[#allocation3 + $0x4] sm:$0x1] %vm1262, %v2169
    %2173 = vrot.lane.b32.xlu0 %v2166, 32
    %v2174 = vpop.permute.xlu0 %2173
    %2176 = vst.msk [vmem:[#allocation4 + $0x4] sm:$0x1] %vm1262, %v2174
    %v2177 = vld [vmem:[#allocation2 + $0x5] sm:$0x1]
    %2178 = vmatprep.subr.bf16.mxu0 0
    %2179 = vmatpush1.bf16.msra.mxu0 0
    %2180 = vmatprep.subr.bf16.mxu0 0
    %2181 = vmatpush1.bf16.msra.mxu0 0
    %2182 = vmatprep.subr.bf16.mxu0 0
    %2183 = vmatpush1.bf16.msra.mxu0 0
    %2184 = vmatprep.subr.bf16.mxu0 0
    %2185 = vmatpush1.bf16.msra.mxu0 0
    %2186 = vmatprep.subr.bf16.mxu0 0
    %2187 = vmatpush1.bf16.msra.mxu0 0
    %2188 = vmatprep.subr.bf16.mxu0 0
    %2189 = vmatpush1.bf16.msra.mxu0 0
    %2190 = vmatprep.subr.bf16.mxu0 0
    %2191 = vmatpush1.bf16.msra.mxu0 %v1152
    %2192 = vmatprep.subr.bf16.mxu0 0
    %2193 = vmatpush1.bf16.msra.mxu0 %v1151
    %2194 = vmatprep.subr.bf16.mxu0 0
    %2195 = vmatpush2.bf16.msra.mxu0 0
    %2196 = vmatprep.subr.bf16.mxu0 0
    %2197 = vmatpush2.bf16.msra.mxu0 0
    %2198 = vmatprep.subr.bf16.mxu0 0
    %2199 = vmatpush2.bf16.msra.mxu0 0
    %2200 = vmatprep.subr.bf16.mxu0 0
    %2201 = vmatpush2.bf16.msra.mxu0 0
    %2202 = vmatprep.subr.bf16.mxu0 0
    %2203 = vmatpush2.bf16.msra.mxu0 0
    %2204 = vmatprep.subr.bf16.mxu0 0
    %2205 = vmatpush2.bf16.msra.mxu0 0
    %2206 = vmatprep.subr.bf16.mxu0 0
    %2207 = vmatpush2.bf16.msra.mxu0 0
    %2208 = vmatprep.subr.bf16.mxu0 0
    %2209 = vmatpush2.bf16.msra.mxu0 0
    %2210 = vmatprep.mubr.bf16.mxu0 0
    %2211 = vmatmul.mubr.bf16.gmra.mxu0 %v2052
    %v2212 = vpop.f32.mrf.mxu0
    %v2213 = vadd.f32 0.0, %v2212
    %v2214 = vpop.f32.mrf.mxu0
    %v2215 = vpop.f32.mrf.mxu0
    %v2216 = vpop.f32.mrf.mxu0
    %2217 = vdwg.mxu0
    %v2218 = vadd.f32 %v2177, %v2213
    %2219 = vmatprep.subr.bf16.mxu0 0
    %2220 = vmatpush1.bf16.msra.mxu0 0
    %2221 = vmatprep.subr.bf16.mxu0 0
    %2222 = vmatpush1.bf16.msra.mxu0 0
    %2223 = vmatprep.subr.bf16.mxu0 0
    %2224 = vmatpush1.bf16.msra.mxu0 0
    %2225 = vmatprep.subr.bf16.mxu0 0
    %2226 = vmatpush1.bf16.msra.mxu0 0
    %2227 = vmatprep.subr.bf16.mxu0 0
    %2228 = vmatpush1.bf16.msra.mxu0 0
    %2229 = vmatprep.subr.bf16.mxu0 0
    %2230 = vmatpush1.bf16.msra.mxu0 0
    %2231 = vmatprep.subr.bf16.mxu0 0
    %2232 = vmatpush1.bf16.msra.mxu0 %v1154
    %2233 = vmatprep.subr.bf16.mxu0 0
    %2234 = vmatpush1.bf16.msra.mxu0 %v1153
    %2235 = vmatprep.subr.bf16.mxu0 0
    %2236 = vmatpush2.bf16.msra.mxu0 0
    %2237 = vmatprep.subr.bf16.mxu0 0
    %2238 = vmatpush2.bf16.msra.mxu0 0
    %2239 = vmatprep.subr.bf16.mxu0 0
    %2240 = vmatpush2.bf16.msra.mxu0 0
    %2241 = vmatprep.subr.bf16.mxu0 0
    %2242 = vmatpush2.bf16.msra.mxu0 0
    %2243 = vmatprep.subr.bf16.mxu0 0
    %2244 = vmatpush2.bf16.msra.mxu0 0
    %2245 = vmatprep.subr.bf16.mxu0 0
    %2246 = vmatpush2.bf16.msra.mxu0 0
    %2247 = vmatprep.subr.bf16.mxu0 0
    %2248 = vmatpush2.bf16.msra.mxu0 0
    %2249 = vmatprep.subr.bf16.mxu0 0
    %2250 = vmatpush2.bf16.msra.mxu0 0
    %2251 = vmatprep.mubr.bf16.mxu0 0
    %2252 = vmatmul.mubr.bf16.gmra.mxu0 %v2100
    %v2253 = vpop.f32.mrf.mxu0
    %v2254 = vadd.f32 0.0, %v2253
    %v2255 = vpop.f32.mrf.mxu0
    %v2256 = vpop.f32.mrf.mxu0
    %v2257 = vpop.f32.mrf.mxu0
    %2258 = vdwg.mxu0
    %v2259 = vadd.f32 %v2218, %v2254
    %v2260 = vxor.u32 %v2259, 2147483648
    %v2261 = vmul.f32 %v2260, 1.442695
    %v2262 = vpow.pop %v2261
    %v2263 = vadd.f32 %v2262, 1.0
    %v2264 = vrcp.pop %v2263
    %v2265 = vmul.f32 1.0, %v2264
    %v2266 = vtanh.pop %v2259
    %v2267 = vmul.f32 %v2265, %v2040
    %2269 = vrot.lane.b32.xlu0 %v2266, 64
    %v2270 = vpop.permute.xlu0 %2269
    %v2272 = vmul.f32 %v2265, %v2270
    %2274 = vrot.lane.b32.xlu0 %v2272, 32
    %v2275 = vpop.permute.xlu0 %2274
    %v2277 = vadd.f32 %v2267, %v2275
    %v2278 = vtanh.pop %v2277
    %2280 = vrot.lane.b32.xlu0 %v2278, 64
    %v2281 = vpop.permute.xlu0 %2280
    %v2283 = vmul.f32 %v2265, %v2281
    %v2284 = vpack.c.bf16 %v2283, %v2283
    %2286 = vrot.lane.b32.xlu0 %v2284, 32
    %v2287 = vpop.permute.xlu0 %2286
    %v2289 = vsel %vm212, %v2287, 0
    %2291 = vmatprep.subr.bf16.mxu0 0
    %2292 = vmatpush1.bf16.msra.mxu0 0
    %2293 = vmatprep.subr.bf16.mxu0 0
    %2294 = vmatpush1.bf16.msra.mxu0 0
    %2295 = vmatprep.subr.bf16.mxu0 0
    %2296 = vmatpush1.bf16.msra.mxu0 0
    %2297 = vmatprep.subr.bf16.mxu0 0
    %2298 = vmatpush1.bf16.msra.mxu0 0
    %2299 = vmatprep.subr.bf16.mxu0 0
    %2300 = vmatpush1.bf16.msra.mxu0 0
    %2301 = vmatprep.subr.bf16.mxu0 0
    %2302 = vmatpush1.bf16.msra.mxu0 0
    %2303 = vmatprep.subr.bf16.mxu0 0
    %2304 = vmatpush1.bf16.msra.mxu0 %v1156
    %2305 = vmatprep.subr.bf16.mxu0 0
    %2306 = vmatpush1.bf16.msra.mxu0 %v1155
    %2307 = vmatprep.subr.bf16.mxu0 0
    %2308 = vmatpush2.bf16.msra.mxu0 0
    %2309 = vmatprep.subr.bf16.mxu0 0
    %2310 = vmatpush2.bf16.msra.mxu0 0
    %2311 = vmatprep.subr.bf16.mxu0 0
    %2312 = vmatpush2.bf16.msra.mxu0 0
    %2313 = vmatprep.subr.bf16.mxu0 0
    %2314 = vmatpush2.bf16.msra.mxu0 0
    %2315 = vmatprep.subr.bf16.mxu0 0
    %2316 = vmatpush2.bf16.msra.mxu0 0
    %2317 = vmatprep.subr.bf16.mxu0 0
    %2318 = vmatpush2.bf16.msra.mxu0 0
    %2319 = vmatprep.subr.bf16.mxu0 0
    %2320 = vmatpush2.bf16.msra.mxu0 0
    %2321 = vmatprep.subr.bf16.mxu0 0
    %2322 = vmatpush2.bf16.msra.mxu0 0
    %2323 = vmatprep.mubr.bf16.mxu0 0
    %2324 = vmatmul.mubr.bf16.gmra.mxu0 %v2289
    %v2325 = vpop.f32.mrf.mxu0
    %v2326 = vadd.f32 0.0, %v2325
    %v2327 = vpop.f32.mrf.mxu0
    %v2328 = vpop.f32.mrf.mxu0
    %v2329 = vpop.f32.mrf.mxu0
    %2330 = vdwg.mxu0
    %v2331 = vadd.f32 %v1069, %v2326
    %v2332 = vpack.c.bf16 %v2166, %v2166
    %2334 = vrot.lane.b32.xlu0 %v2332, 32
    %v2335 = vpop.permute.xlu0 %2334
    %v2337 = vsel %vm212, %v2335, 0
    %2339 = vmatprep.subr.bf16.mxu0 0
    %2340 = vmatpush1.bf16.msra.mxu0 0
    %2341 = vmatprep.subr.bf16.mxu0 0
    %2342 = vmatpush1.bf16.msra.mxu0 0
    %2343 = vmatprep.subr.bf16.mxu0 0
    %2344 = vmatpush1.bf16.msra.mxu0 0
    %2345 = vmatprep.subr.bf16.mxu0 0
    %2346 = vmatpush1.bf16.msra.mxu0 0
    %2347 = vmatprep.subr.bf16.mxu0 0
    %2348 = vmatpush1.bf16.msra.mxu0 0
    %2349 = vmatprep.subr.bf16.mxu0 0
    %2350 = vmatpush1.bf16.msra.mxu0 0
    %2351 = vmatprep.subr.bf16.mxu0 0
    %2352 = vmatpush1.bf16.msra.mxu0 %v1158
    %2353 = vmatprep.subr.bf16.mxu0 0
    %2354 = vmatpush1.bf16.msra.mxu0 %v1157
    %2355 = vmatprep.subr.bf16.mxu0 0
    %2356 = vmatpush2.bf16.msra.mxu0 0
    %2357 = vmatprep.subr.bf16.mxu0 0
    %2358 = vmatpush2.bf16.msra.mxu0 0
    %2359 = vmatprep.subr.bf16.mxu0 0
    %2360 = vmatpush2.bf16.msra.mxu0 0
    %2361 = vmatprep.subr.bf16.mxu0 0
    %2362 = vmatpush2.bf16.msra.mxu0 0
    %2363 = vmatprep.subr.bf16.mxu0 0
    %2364 = vmatpush2.bf16.msra.mxu0 0
    %2365 = vmatprep.subr.bf16.mxu0 0
    %2366 = vmatpush2.bf16.msra.mxu0 0
    %2367 = vmatprep.subr.bf16.mxu0 0
    %2368 = vmatpush2.bf16.msra.mxu0 0
    %2369 = vmatprep.subr.bf16.mxu0 0
    %2370 = vmatpush2.bf16.msra.mxu0 0
    %2371 = vmatprep.mubr.bf16.mxu0 0
    %2372 = vmatmul.mubr.bf16.gmra.mxu0 %v2337
    %v2373 = vpop.f32.mrf.mxu0
    %v2374 = vadd.f32 0.0, %v2373
    %v2375 = vpop.f32.mrf.mxu0
    %v2376 = vpop.f32.mrf.mxu0
    %v2377 = vpop.f32.mrf.mxu0
    %2378 = vdwg.mxu0
    %v2379 = vadd.f32 %v2331, %v2374
    %v2380 = vxor.u32 %v2379, 2147483648
    %v2381 = vmul.f32 %v2380, 1.442695
    %v2382 = vpow.pop %v2381
    %v2383 = vadd.f32 %v2382, 1.0
    %v2384 = vrcp.pop %v2383
    %v2385 = vmul.f32 1.0, %v2384
    %v2386 = vtanh.pop %v2379
    %v2387 = vmul.f32 %v2385, %v2160
    %2389 = vrot.lane.b32.xlu0 %v2386, 64
    %v2390 = vpop.permute.xlu0 %2389
    %v2392 = vmul.f32 %v2385, %v2390
    %2394 = vrot.lane.b32.xlu0 %v2392, 32
    %v2395 = vpop.permute.xlu0 %2394
    %v2397 = vadd.f32 %v2387, %v2395
    %v2398 = vtanh.pop %v2397
    %2400 = vrot.lane.b32.xlu0 %v2398, 64
    %v2401 = vpop.permute.xlu0 %2400
    %v2403 = vmul.f32 %v2385, %v2401
    %2405 = vrot.lane.b32.xlu0 %v2283, 32
    %v2406 = vpop.permute.xlu0 %2405
    %2408 = vst.msk [vmem:[#allocation3 + $0x5] sm:$0x1] %vm1262, %v2406
    %2410 = vrot.lane.b32.xlu0 %v2403, 32
    %v2411 = vpop.permute.xlu0 %2410
    %2413 = vst.msk [vmem:[#allocation4 + $0x5] sm:$0x1] %vm1262, %v2411
    %v2414 = vld [vmem:[#allocation2 + $0x6] sm:$0x1]
    %2415 = vmatprep.subr.bf16.mxu0 0
    %2416 = vmatpush1.bf16.msra.mxu0 0
    %2417 = vmatprep.subr.bf16.mxu0 0
    %2418 = vmatpush1.bf16.msra.mxu0 0
    %2419 = vmatprep.subr.bf16.mxu0 0
    %2420 = vmatpush1.bf16.msra.mxu0 0
    %2421 = vmatprep.subr.bf16.mxu0 0
    %2422 = vmatpush1.bf16.msra.mxu0 0
    %2423 = vmatprep.subr.bf16.mxu0 0
    %2424 = vmatpush1.bf16.msra.mxu0 0
    %2425 = vmatprep.subr.bf16.mxu0 0
    %2426 = vmatpush1.bf16.msra.mxu0 0
    %2427 = vmatprep.subr.bf16.mxu0 0
    %2428 = vmatpush1.bf16.msra.mxu0 %v1152
    %2429 = vmatprep.subr.bf16.mxu0 0
    %2430 = vmatpush1.bf16.msra.mxu0 %v1151
    %2431 = vmatprep.subr.bf16.mxu0 0
    %2432 = vmatpush2.bf16.msra.mxu0 0
    %2433 = vmatprep.subr.bf16.mxu0 0
    %2434 = vmatpush2.bf16.msra.mxu0 0
    %2435 = vmatprep.subr.bf16.mxu0 0
    %2436 = vmatpush2.bf16.msra.mxu0 0
    %2437 = vmatprep.subr.bf16.mxu0 0
    %2438 = vmatpush2.bf16.msra.mxu0 0
    %2439 = vmatprep.subr.bf16.mxu0 0
    %2440 = vmatpush2.bf16.msra.mxu0 0
    %2441 = vmatprep.subr.bf16.mxu0 0
    %2442 = vmatpush2.bf16.msra.mxu0 0
    %2443 = vmatprep.subr.bf16.mxu0 0
    %2444 = vmatpush2.bf16.msra.mxu0 0
    %2445 = vmatprep.subr.bf16.mxu0 0
    %2446 = vmatpush2.bf16.msra.mxu0 0
    %2447 = vmatprep.mubr.bf16.mxu0 0
    %2448 = vmatmul.mubr.bf16.gmra.mxu0 %v2289
    %v2449 = vpop.f32.mrf.mxu0
    %v2450 = vadd.f32 0.0, %v2449
    %v2451 = vpop.f32.mrf.mxu0
    %v2452 = vpop.f32.mrf.mxu0
    %v2453 = vpop.f32.mrf.mxu0
    %2454 = vdwg.mxu0
    %v2455 = vadd.f32 %v2414, %v2450
    %2456 = vmatprep.subr.bf16.mxu0 0
    %2457 = vmatpush1.bf16.msra.mxu0 0
    %2458 = vmatprep.subr.bf16.mxu0 0
    %2459 = vmatpush1.bf16.msra.mxu0 0
    %2460 = vmatprep.subr.bf16.mxu0 0
    %2461 = vmatpush1.bf16.msra.mxu0 0
    %2462 = vmatprep.subr.bf16.mxu0 0
    %2463 = vmatpush1.bf16.msra.mxu0 0
    %2464 = vmatprep.subr.bf16.mxu0 0
    %2465 = vmatpush1.bf16.msra.mxu0 0
    %2466 = vmatprep.subr.bf16.mxu0 0
    %2467 = vmatpush1.bf16.msra.mxu0 0
    %2468 = vmatprep.subr.bf16.mxu0 0
    %2469 = vmatpush1.bf16.msra.mxu0 %v1154
    %2470 = vmatprep.subr.bf16.mxu0 0
    %2471 = vmatpush1.bf16.msra.mxu0 %v1153
    %2472 = vmatprep.subr.bf16.mxu0 0
    %2473 = vmatpush2.bf16.msra.mxu0 0
    %2474 = vmatprep.subr.bf16.mxu0 0
    %2475 = vmatpush2.bf16.msra.mxu0 0
    %2476 = vmatprep.subr.bf16.mxu0 0
    %2477 = vmatpush2.bf16.msra.mxu0 0
    %2478 = vmatprep.subr.bf16.mxu0 0
    %2479 = vmatpush2.bf16.msra.mxu0 0
    %2480 = vmatprep.subr.bf16.mxu0 0
    %2481 = vmatpush2.bf16.msra.mxu0 0
    %2482 = vmatprep.subr.bf16.mxu0 0
    %2483 = vmatpush2.bf16.msra.mxu0 0
    %2484 = vmatprep.subr.bf16.mxu0 0
    %2485 = vmatpush2.bf16.msra.mxu0 0
    %2486 = vmatprep.subr.bf16.mxu0 0
    %2487 = vmatpush2.bf16.msra.mxu0 0
    %2488 = vmatprep.mubr.bf16.mxu0 0
    %2489 = vmatmul.mubr.bf16.gmra.mxu0 %v2337
    %v2490 = vpop.f32.mrf.mxu0
    %v2491 = vadd.f32 0.0, %v2490
    %v2492 = vpop.f32.mrf.mxu0
    %v2493 = vpop.f32.mrf.mxu0
    %v2494 = vpop.f32.mrf.mxu0
    %2495 = vdwg.mxu0
    %v2496 = vadd.f32 %v2455, %v2491
    %v2497 = vxor.u32 %v2496, 2147483648
    %v2498 = vmul.f32 %v2497, 1.442695
    %v2499 = vpow.pop %v2498
    %v2500 = vadd.f32 %v2499, 1.0
    %v2501 = vrcp.pop %v2500
    %v2502 = vmul.f32 1.0, %v2501
    %v2503 = vtanh.pop %v2496
    %v2504 = vmul.f32 %v2502, %v2277
    %2506 = vrot.lane.b32.xlu0 %v2503, 64
    %v2507 = vpop.permute.xlu0 %2506
    %v2509 = vmul.f32 %v2502, %v2507
    %2511 = vrot.lane.b32.xlu0 %v2509, 32
    %v2512 = vpop.permute.xlu0 %2511
    %v2514 = vadd.f32 %v2504, %v2512
    %v2515 = vtanh.pop %v2514
    %2517 = vrot.lane.b32.xlu0 %v2515, 64
    %v2518 = vpop.permute.xlu0 %2517
    %v2520 = vmul.f32 %v2502, %v2518
    %v2521 = vpack.c.bf16 %v2520, %v2520
    %2523 = vrot.lane.b32.xlu0 %v2521, 32
    %v2524 = vpop.permute.xlu0 %2523
    %v2526 = vsel %vm212, %v2524, 0
    %2528 = vmatprep.subr.bf16.mxu0 0
    %2529 = vmatpush1.bf16.msra.mxu0 0
    %2530 = vmatprep.subr.bf16.mxu0 0
    %2531 = vmatpush1.bf16.msra.mxu0 0
    %2532 = vmatprep.subr.bf16.mxu0 0
    %2533 = vmatpush1.bf16.msra.mxu0 0
    %2534 = vmatprep.subr.bf16.mxu0 0
    %2535 = vmatpush1.bf16.msra.mxu0 0
    %2536 = vmatprep.subr.bf16.mxu0 0
    %2537 = vmatpush1.bf16.msra.mxu0 0
    %2538 = vmatprep.subr.bf16.mxu0 0
    %2539 = vmatpush1.bf16.msra.mxu0 0
    %2540 = vmatprep.subr.bf16.mxu0 0
    %2541 = vmatpush1.bf16.msra.mxu0 %v1156
    %2542 = vmatprep.subr.bf16.mxu0 0
    %2543 = vmatpush1.bf16.msra.mxu0 %v1155
    %2544 = vmatprep.subr.bf16.mxu0 0
    %2545 = vmatpush2.bf16.msra.mxu0 0
    %2546 = vmatprep.subr.bf16.mxu0 0
    %2547 = vmatpush2.bf16.msra.mxu0 0
    %2548 = vmatprep.subr.bf16.mxu0 0
    %2549 = vmatpush2.bf16.msra.mxu0 0
    %2550 = vmatprep.subr.bf16.mxu0 0
    %2551 = vmatpush2.bf16.msra.mxu0 0
    %2552 = vmatprep.subr.bf16.mxu0 0
    %2553 = vmatpush2.bf16.msra.mxu0 0
    %2554 = vmatprep.subr.bf16.mxu0 0
    %2555 = vmatpush2.bf16.msra.mxu0 0
    %2556 = vmatprep.subr.bf16.mxu0 0
    %2557 = vmatpush2.bf16.msra.mxu0 0
    %2558 = vmatprep.subr.bf16.mxu0 0
    %2559 = vmatpush2.bf16.msra.mxu0 0
    %2560 = vmatprep.mubr.bf16.mxu0 0
    %2561 = vmatmul.mubr.bf16.gmra.mxu0 %v2526
    %v2562 = vpop.f32.mrf.mxu0
    %v2563 = vadd.f32 0.0, %v2562
    %v2564 = vpop.f32.mrf.mxu0
    %v2565 = vpop.f32.mrf.mxu0
    %v2566 = vpop.f32.mrf.mxu0
    %2567 = vdwg.mxu0
    %v2568 = vadd.f32 %v1069, %v2563
    %v2569 = vpack.c.bf16 %v2403, %v2403
    %2571 = vrot.lane.b32.xlu0 %v2569, 32
    %v2572 = vpop.permute.xlu0 %2571
    %v2574 = vsel %vm212, %v2572, 0
    %2576 = vmatprep.subr.bf16.mxu0 0
    %2577 = vmatpush1.bf16.msra.mxu0 0
    %2578 = vmatprep.subr.bf16.mxu0 0
    %2579 = vmatpush1.bf16.msra.mxu0 0
    %2580 = vmatprep.subr.bf16.mxu0 0
    %2581 = vmatpush1.bf16.msra.mxu0 0
    %2582 = vmatprep.subr.bf16.mxu0 0
    %2583 = vmatpush1.bf16.msra.mxu0 0
    %2584 = vmatprep.subr.bf16.mxu0 0
    %2585 = vmatpush1.bf16.msra.mxu0 0
    %2586 = vmatprep.subr.bf16.mxu0 0
    %2587 = vmatpush1.bf16.msra.mxu0 0
    %2588 = vmatprep.subr.bf16.mxu0 0
    %2589 = vmatpush1.bf16.msra.mxu0 %v1158
    %2590 = vmatprep.subr.bf16.mxu0 0
    %2591 = vmatpush1.bf16.msra.mxu0 %v1157
    %2592 = vmatprep.subr.bf16.mxu0 0
    %2593 = vmatpush2.bf16.msra.mxu0 0
    %2594 = vmatprep.subr.bf16.mxu0 0
    %2595 = vmatpush2.bf16.msra.mxu0 0
    %2596 = vmatprep.subr.bf16.mxu0 0
    %2597 = vmatpush2.bf16.msra.mxu0 0
    %2598 = vmatprep.subr.bf16.mxu0 0
    %2599 = vmatpush2.bf16.msra.mxu0 0
    %2600 = vmatprep.subr.bf16.mxu0 0
    %2601 = vmatpush2.bf16.msra.mxu0 0
    %2602 = vmatprep.subr.bf16.mxu0 0
    %2603 = vmatpush2.bf16.msra.mxu0 0
    %2604 = vmatprep.subr.bf16.mxu0 0
    %2605 = vmatpush2.bf16.msra.mxu0 0
    %2606 = vmatprep.subr.bf16.mxu0 0
    %2607 = vmatpush2.bf16.msra.mxu0 0
    %2608 = vmatprep.mubr.bf16.mxu0 0
    %2609 = vmatmul.mubr.bf16.gmra.mxu0 %v2574
    %v2610 = vpop.f32.mrf.mxu0
    %v2611 = vadd.f32 0.0, %v2610
    %v2612 = vpop.f32.mrf.mxu0
    %v2613 = vpop.f32.mrf.mxu0
    %v2614 = vpop.f32.mrf.mxu0
    %2615 = vdwg.mxu0
    %v2616 = vadd.f32 %v2568, %v2611
    %v2617 = vxor.u32 %v2616, 2147483648
    %v2618 = vmul.f32 %v2617, 1.442695
    %v2619 = vpow.pop %v2618
    %v2620 = vadd.f32 %v2619, 1.0
    %v2621 = vrcp.pop %v2620
    %v2622 = vmul.f32 1.0, %v2621
    %v2623 = vtanh.pop %v2616
    %v2624 = vmul.f32 %v2622, %v2397
    %2626 = vrot.lane.b32.xlu0 %v2623, 64
    %v2627 = vpop.permute.xlu0 %2626
    %v2629 = vmul.f32 %v2622, %v2627
    %2631 = vrot.lane.b32.xlu0 %v2629, 32
    %v2632 = vpop.permute.xlu0 %2631
    %v2634 = vadd.f32 %v2624, %v2632
    %v2635 = vtanh.pop %v2634
    %2637 = vrot.lane.b32.xlu0 %v2635, 64
    %v2638 = vpop.permute.xlu0 %2637
    %v2640 = vmul.f32 %v2622, %v2638
    %2642 = vrot.lane.b32.xlu0 %v2520, 32
    %v2643 = vpop.permute.xlu0 %2642
    %2645 = vst.msk [vmem:[#allocation3 + $0x6] sm:$0x1] %vm1262, %v2643
    %2647 = vrot.lane.b32.xlu0 %v2640, 32
    %v2648 = vpop.permute.xlu0 %2647
    %2650 = vst.msk [vmem:[#allocation4 + $0x6] sm:$0x1] %vm1262, %v2648
    %v2651 = vld [vmem:[#allocation2 + $0x7] sm:$0x1]
    %2652 = vmatprep.subr.bf16.mxu0 0
    %2653 = vmatpush1.bf16.msra.mxu0 0
    %2654 = vmatprep.subr.bf16.mxu0 0
    %2655 = vmatpush1.bf16.msra.mxu0 0
    %2656 = vmatprep.subr.bf16.mxu0 0
    %2657 = vmatpush1.bf16.msra.mxu0 0
    %2658 = vmatprep.subr.bf16.mxu0 0
    %2659 = vmatpush1.bf16.msra.mxu0 0
    %2660 = vmatprep.subr.bf16.mxu0 0
    %2661 = vmatpush1.bf16.msra.mxu0 0
    %2662 = vmatprep.subr.bf16.mxu0 0
    %2663 = vmatpush1.bf16.msra.mxu0 0
    %2664 = vmatprep.subr.bf16.mxu0 0
    %2665 = vmatpush1.bf16.msra.mxu0 %v1152
    %2666 = vmatprep.subr.bf16.mxu0 0
    %2667 = vmatpush1.bf16.msra.mxu0 %v1151
    %2668 = vmatprep.subr.bf16.mxu0 0
    %2669 = vmatpush2.bf16.msra.mxu0 0
    %2670 = vmatprep.subr.bf16.mxu0 0
    %2671 = vmatpush2.bf16.msra.mxu0 0
    %2672 = vmatprep.subr.bf16.mxu0 0
    %2673 = vmatpush2.bf16.msra.mxu0 0
    %2674 = vmatprep.subr.bf16.mxu0 0
    %2675 = vmatpush2.bf16.msra.mxu0 0
    %2676 = vmatprep.subr.bf16.mxu0 0
    %2677 = vmatpush2.bf16.msra.mxu0 0
    %2678 = vmatprep.subr.bf16.mxu0 0
    %2679 = vmatpush2.bf16.msra.mxu0 0
    %2680 = vmatprep.subr.bf16.mxu0 0
    %2681 = vmatpush2.bf16.msra.mxu0 0
    %2682 = vmatprep.subr.bf16.mxu0 0
    %2683 = vmatpush2.bf16.msra.mxu0 0
    %2684 = vmatprep.mubr.bf16.mxu0 0
    %2685 = vmatmul.mubr.bf16.gmra.mxu0 %v2526
    %v2686 = vpop.f32.mrf.mxu0
    %v2687 = vadd.f32 0.0, %v2686
    %v2688 = vpop.f32.mrf.mxu0
    %v2689 = vpop.f32.mrf.mxu0
    %v2690 = vpop.f32.mrf.mxu0
    %2691 = vdwg.mxu0
    %v2692 = vadd.f32 %v2651, %v2687
    %2693 = vmatprep.subr.bf16.mxu0 0
    %2694 = vmatpush1.bf16.msra.mxu0 0
    %2695 = vmatprep.subr.bf16.mxu0 0
    %2696 = vmatpush1.bf16.msra.mxu0 0
    %2697 = vmatprep.subr.bf16.mxu0 0
    %2698 = vmatpush1.bf16.msra.mxu0 0
    %2699 = vmatprep.subr.bf16.mxu0 0
    %2700 = vmatpush1.bf16.msra.mxu0 0
    %2701 = vmatprep.subr.bf16.mxu0 0
    %2702 = vmatpush1.bf16.msra.mxu0 0
    %2703 = vmatprep.subr.bf16.mxu0 0
    %2704 = vmatpush1.bf16.msra.mxu0 0
    %2705 = vmatprep.subr.bf16.mxu0 0
    %2706 = vmatpush1.bf16.msra.mxu0 %v1154
    %2707 = vmatprep.subr.bf16.mxu0 0
    %2708 = vmatpush1.bf16.msra.mxu0 %v1153
    %2709 = vmatprep.subr.bf16.mxu0 0
    %2710 = vmatpush2.bf16.msra.mxu0 0
    %2711 = vmatprep.subr.bf16.mxu0 0
    %2712 = vmatpush2.bf16.msra.mxu0 0
    %2713 = vmatprep.subr.bf16.mxu0 0
    %2714 = vmatpush2.bf16.msra.mxu0 0
    %2715 = vmatprep.subr.bf16.mxu0 0
    %2716 = vmatpush2.bf16.msra.mxu0 0
    %2717 = vmatprep.subr.bf16.mxu0 0
    %2718 = vmatpush2.bf16.msra.mxu0 0
    %2719 = vmatprep.subr.bf16.mxu0 0
    %2720 = vmatpush2.bf16.msra.mxu0 0
    %2721 = vmatprep.subr.bf16.mxu0 0
    %2722 = vmatpush2.bf16.msra.mxu0 0
    %2723 = vmatprep.subr.bf16.mxu0 0
    %2724 = vmatpush2.bf16.msra.mxu0 0
    %2725 = vmatprep.mubr.bf16.mxu0 0
    %2726 = vmatmul.mubr.bf16.gmra.mxu0 %v2574
    %v2727 = vpop.f32.mrf.mxu0
    %v2728 = vadd.f32 0.0, %v2727
    %v2729 = vpop.f32.mrf.mxu0
    %v2730 = vpop.f32.mrf.mxu0
    %v2731 = vpop.f32.mrf.mxu0
    %2732 = vdwg.mxu0
    %v2733 = vadd.f32 %v2692, %v2728
    %v2734 = vxor.u32 %v2733, 2147483648
    %v2735 = vmul.f32 %v2734, 1.442695
    %v2736 = vpow.pop %v2735
    %v2737 = vadd.f32 %v2736, 1.0
    %v2738 = vrcp.pop %v2737
    %v2739 = vmul.f32 1.0, %v2738
    %v2740 = vtanh.pop %v2733
    %v2741 = vmul.f32 %v2739, %v2514
    %2743 = vrot.lane.b32.xlu0 %v2740, 64
    %v2744 = vpop.permute.xlu0 %2743
    %v2746 = vmul.f32 %v2739, %v2744
    %2748 = vrot.lane.b32.xlu0 %v2746, 32
    %v2749 = vpop.permute.xlu0 %2748
    %v2751 = vadd.f32 %v2741, %v2749
    %v2752 = vtanh.pop %v2751
    %2754 = vrot.lane.b32.xlu0 %v2752, 64
    %v2755 = vpop.permute.xlu0 %2754
    %v2757 = vmul.f32 %v2739, %v2755
    %v2758 = vpack.c.bf16 %v2757, %v2757
    %2760 = vrot.lane.b32.xlu0 %v2758, 32
    %v2761 = vpop.permute.xlu0 %2760
    %v2763 = vsel %vm212, %v2761, 0
    %2765 = vmatprep.subr.bf16.mxu0 0
    %2766 = vmatpush1.bf16.msra.mxu0 0
    %2767 = vmatprep.subr.bf16.mxu0 0
    %2768 = vmatpush1.bf16.msra.mxu0 0
    %2769 = vmatprep.subr.bf16.mxu0 0
    %2770 = vmatpush1.bf16.msra.mxu0 0
    %2771 = vmatprep.subr.bf16.mxu0 0
    %2772 = vmatpush1.bf16.msra.mxu0 0
    %2773 = vmatprep.subr.bf16.mxu0 0
    %2774 = vmatpush1.bf16.msra.mxu0 0
    %2775 = vmatprep.subr.bf16.mxu0 0
    %2776 = vmatpush1.bf16.msra.mxu0 0
    %2777 = vmatprep.subr.bf16.mxu0 0
    %2778 = vmatpush1.bf16.msra.mxu0 %v1156
    %2779 = vmatprep.subr.bf16.mxu0 0
    %2780 = vmatpush1.bf16.msra.mxu0 %v1155
    %2781 = vmatprep.subr.bf16.mxu0 0
    %2782 = vmatpush2.bf16.msra.mxu0 0
    %2783 = vmatprep.subr.bf16.mxu0 0
    %2784 = vmatpush2.bf16.msra.mxu0 0
    %2785 = vmatprep.subr.bf16.mxu0 0
    %2786 = vmatpush2.bf16.msra.mxu0 0
    %2787 = vmatprep.subr.bf16.mxu0 0
    %2788 = vmatpush2.bf16.msra.mxu0 0
    %2789 = vmatprep.subr.bf16.mxu0 0
    %2790 = vmatpush2.bf16.msra.mxu0 0
    %2791 = vmatprep.subr.bf16.mxu0 0
    %2792 = vmatpush2.bf16.msra.mxu0 0
    %2793 = vmatprep.subr.bf16.mxu0 0
    %2794 = vmatpush2.bf16.msra.mxu0 0
    %2795 = vmatprep.subr.bf16.mxu0 0
    %2796 = vmatpush2.bf16.msra.mxu0 0
    %2797 = vmatprep.mubr.bf16.mxu0 0
    %2798 = vmatmul.mubr.bf16.gmra.mxu0 %v2763
    %v2799 = vpop.f32.mrf.mxu0
    %v2800 = vadd.f32 0.0, %v2799
    %v2801 = vpop.f32.mrf.mxu0
    %v2802 = vpop.f32.mrf.mxu0
    %v2803 = vpop.f32.mrf.mxu0
    %2804 = vdwg.mxu0
    %v2805 = vadd.f32 %v1069, %v2800
    %v2806 = vpack.c.bf16 %v2640, %v2640
    %2808 = vrot.lane.b32.xlu0 %v2806, 32
    %v2809 = vpop.permute.xlu0 %2808
    %v2811 = vsel %vm212, %v2809, 0
    %2813 = vmatprep.subr.bf16.mxu0 0
    %2814 = vmatpush1.bf16.msra.mxu0 0
    %2815 = vmatprep.subr.bf16.mxu0 0
    %2816 = vmatpush1.bf16.msra.mxu0 0
    %2817 = vmatprep.subr.bf16.mxu0 0
    %2818 = vmatpush1.bf16.msra.mxu0 0
    %2819 = vmatprep.subr.bf16.mxu0 0
    %2820 = vmatpush1.bf16.msra.mxu0 0
    %2821 = vmatprep.subr.bf16.mxu0 0
    %2822 = vmatpush1.bf16.msra.mxu0 0
    %2823 = vmatprep.subr.bf16.mxu0 0
    %2824 = vmatpush1.bf16.msra.mxu0 0
    %2825 = vmatprep.subr.bf16.mxu0 0
    %2826 = vmatpush1.bf16.msra.mxu0 %v1158
    %2827 = vmatprep.subr.bf16.mxu0 0
    %2828 = vmatpush1.bf16.msra.mxu0 %v1157
    %2829 = vmatprep.subr.bf16.mxu0 0
    %2830 = vmatpush2.bf16.msra.mxu0 0
    %2831 = vmatprep.subr.bf16.mxu0 0
    %2832 = vmatpush2.bf16.msra.mxu0 0
    %2833 = vmatprep.subr.bf16.mxu0 0
    %2834 = vmatpush2.bf16.msra.mxu0 0
    %2835 = vmatprep.subr.bf16.mxu0 0
    %2836 = vmatpush2.bf16.msra.mxu0 0
    %2837 = vmatprep.subr.bf16.mxu0 0
    %2838 = vmatpush2.bf16.msra.mxu0 0
    %2839 = vmatprep.subr.bf16.mxu0 0
    %2840 = vmatpush2.bf16.msra.mxu0 0
    %2841 = vmatprep.subr.bf16.mxu0 0
    %2842 = vmatpush2.bf16.msra.mxu0 0
    %2843 = vmatprep.subr.bf16.mxu0 0
    %2844 = vmatpush2.bf16.msra.mxu0 0
    %2845 = vmatprep.mubr.bf16.mxu0 0
    %2846 = vmatmul.mubr.bf16.gmra.mxu0 %v2811
    %v2847 = vpop.f32.mrf.mxu0
    %v2848 = vadd.f32 0.0, %v2847
    %v2849 = vpop.f32.mrf.mxu0
    %v2850 = vpop.f32.mrf.mxu0
    %v2851 = vpop.f32.mrf.mxu0
    %2852 = vdwg.mxu0
    %v2853 = vadd.f32 %v2805, %v2848
    %v2854 = vxor.u32 %v2853, 2147483648
    %v2855 = vmul.f32 %v2854, 1.442695
    %v2856 = vpow.pop %v2855
    %v2857 = vadd.f32 %v2856, 1.0
    %v2858 = vrcp.pop %v2857
    %v2859 = vmul.f32 1.0, %v2858
    %v2860 = vtanh.pop %v2853
    %v2861 = vmul.f32 %v2859, %v2634
    %2863 = vrot.lane.b32.xlu0 %v2860, 64
    %v2864 = vpop.permute.xlu0 %2863
    %v2866 = vmul.f32 %v2859, %v2864
    %2868 = vrot.lane.b32.xlu0 %v2866, 32
    %v2869 = vpop.permute.xlu0 %2868
    %v2871 = vadd.f32 %v2861, %v2869
    %v2872 = vtanh.pop %v2871
    %2874 = vrot.lane.b32.xlu0 %v2872, 64
    %v2875 = vpop.permute.xlu0 %2874
    %v2877 = vmul.f32 %v2859, %v2875
    %2879 = vrot.lane.b32.xlu0 %v2757, 32
    %v2880 = vpop.permute.xlu0 %2879
    %2882 = vst.msk [vmem:[#allocation3 + $0x7] sm:$0x1] %vm1262, %v2880
    %2884 = vrot.lane.b32.xlu0 %v2877, 32
    %v2885 = vpop.permute.xlu0 %2884
    %2887 = vst.msk [vmem:[#allocation4 + $0x7] sm:$0x1] %vm1262, %v2885
    %v2888 = vld [vmem:[#allocation6] sm:$0xff]
    %v2889 = vld [vmem:[#allocation3] sm:$0xff]
    %v2890 = vld [vmem:[#allocation4] sm:$0xff]
    %v2891 = vlaneseq
    %v2892 = vshrl.u32 %v2891, 7
    %v2893 = vsub.s32 0, %v2892
    %v2894 = vrot.slane %v208, %v2893
    %v2897 = vsel %vm212, %v2889, 0
    %2899 = vmatprep.subr.mxu0 0.0
    %2900 = vmatpush1.msra.mxu0 0.0
    %2901 = vmatprep.subr.mxu0 0.0
    %2902 = vmatpush1.msra.mxu0 0.0
    %2903 = vmatprep.subr.mxu0 0.0
    %2904 = vmatpush1.msra.mxu0 0.0
    %2905 = vmatprep.subr.mxu0 0.0
    %2906 = vmatpush1.msra.mxu0 0.0
    %2907 = vmatprep.subr.mxu0 0.0
    %2908 = vmatpush1.msra.mxu0 0.0
    %2909 = vmatprep.subr.mxu0 0.0
    %2910 = vmatpush1.msra.mxu0 0.0
    %2911 = vmatprep.subr.mxu0 0.0
    %2912 = vmatpush1.msra.mxu0 0.0
    %2913 = vmatprep.subr.mxu0 0.0
    %2914 = vmatpush1.msra.mxu0 0.0
    %2915 = vmatprep.subr.mxu0 0.0
    %2916 = vmatpush1.msra.mxu0 0.0
    %2917 = vmatprep.subr.mxu0 0.0
    %2918 = vmatpush1.msra.mxu0 0.0
    %2919 = vmatprep.subr.mxu0 0.0
    %2920 = vmatpush1.msra.mxu0 0.0
    %2921 = vmatprep.subr.mxu0 0.0
    %2922 = vmatpush1.msra.mxu0 0.0
    %2923 = vmatprep.subr.mxu0 0.0
    %2924 = vmatpush1.msra.mxu0 %v203
    %2925 = vmatprep.subr.mxu0 0.0
    %2926 = vmatpush1.msra.mxu0 %v202
    %2927 = vmatprep.subr.mxu0 0.0
    %2928 = vmatpush1.msra.mxu0 %v201
    %2929 = vmatprep.subr.mxu0 0.0
    %2930 = vmatpush1.msra.mxu0 %v200
    %2931 = vmatprep.subr.mxu0 0.0
    %2932 = vmatpush2.msra.mxu0 0.0
    %2933 = vmatprep.subr.mxu0 0.0
    %2934 = vmatpush2.msra.mxu0 0.0
    %2935 = vmatprep.subr.mxu0 0.0
    %2936 = vmatpush2.msra.mxu0 0.0
    %2937 = vmatprep.subr.mxu0 0.0
    %2938 = vmatpush2.msra.mxu0 0.0
    %2939 = vmatprep.subr.mxu0 0.0
    %2940 = vmatpush2.msra.mxu0 0.0
    %2941 = vmatprep.subr.mxu0 0.0
    %2942 = vmatpush2.msra.mxu0 0.0
    %2943 = vmatprep.subr.mxu0 0.0
    %2944 = vmatpush2.msra.mxu0 0.0
    %2945 = vmatprep.subr.mxu0 0.0
    %2946 = vmatpush2.msra.mxu0 0.0
    %2947 = vmatprep.subr.mxu0 0.0
    %2948 = vmatpush2.msra.mxu0 0.0
    %2949 = vmatprep.subr.mxu0 0.0
    %2950 = vmatpush2.msra.mxu0 0.0
    %2951 = vmatprep.subr.mxu0 0.0
    %2952 = vmatpush2.msra.mxu0 0.0
    %2953 = vmatprep.subr.mxu0 0.0
    %2954 = vmatpush2.msra.mxu0 0.0
    %2955 = vmatprep.subr.mxu0 0.0
    %2956 = vmatpush2.msra.mxu0 0.0
    %2957 = vmatprep.subr.mxu0 0.0
    %2958 = vmatpush2.msra.mxu0 0.0
    %2959 = vmatprep.subr.mxu0 0.0
    %2960 = vmatpush2.msra.mxu0 0.0
    %2961 = vmatprep.subr.mxu0 0.0
    %2962 = vmatpush2.msra.mxu0 0.0
    %2963 = vmatprep.mubr.f32.mxu0 0.0
    %2964 = vmatmul.mubr.f32.gmra.mxu0 %v2897
    %v2965 = vpop.f32.mrf.mxu0
    %v2966 = vadd.f32 %v2894, %v2965
    %v2967 = vpop.f32.mrf.mxu0
    %2968 = vdwg.mxu0
    %v2969 = vlaneseq
    %v2970 = vshrl.u32 %v2969, 7
    %v2971 = vsub.s32 0, %v2970
    %v2972 = vrot.slane %v209, %v2971
    %v2975 = vsel %vm212, %v2890, 0
    %2977 = vmatprep.subr.mxu0 0.0
    %2978 = vmatpush1.msra.mxu0 0.0
    %2979 = vmatprep.subr.mxu0 0.0
    %2980 = vmatpush1.msra.mxu0 0.0
    %2981 = vmatprep.subr.mxu0 0.0
    %2982 = vmatpush1.msra.mxu0 0.0
    %2983 = vmatprep.subr.mxu0 0.0
    %2984 = vmatpush1.msra.mxu0 0.0
    %2985 = vmatprep.subr.mxu0 0.0
    %2986 = vmatpush1.msra.mxu0 0.0
    %2987 = vmatprep.subr.mxu0 0.0
    %2988 = vmatpush1.msra.mxu0 0.0
    %2989 = vmatprep.subr.mxu0 0.0
    %2990 = vmatpush1.msra.mxu0 0.0
    %2991 = vmatprep.subr.mxu0 0.0
    %2992 = vmatpush1.msra.mxu0 0.0
    %2993 = vmatprep.subr.mxu0 0.0
    %2994 = vmatpush1.msra.mxu0 0.0
    %2995 = vmatprep.subr.mxu0 0.0
    %2996 = vmatpush1.msra.mxu0 0.0
    %2997 = vmatprep.subr.mxu0 0.0
    %2998 = vmatpush1.msra.mxu0 0.0
    %2999 = vmatprep.subr.mxu0 0.0
    %3000 = vmatpush1.msra.mxu0 0.0
    %3001 = vmatprep.subr.mxu0 0.0
    %3002 = vmatpush1.msra.mxu0 %v207
    %3003 = vmatprep.subr.mxu0 0.0
    %3004 = vmatpush1.msra.mxu0 %v206
    %3005 = vmatprep.subr.mxu0 0.0
    %3006 = vmatpush1.msra.mxu0 %v205
    %3007 = vmatprep.subr.mxu0 0.0
    %3008 = vmatpush1.msra.mxu0 %v204
    %3009 = vmatprep.subr.mxu0 0.0
    %3010 = vmatpush2.msra.mxu0 0.0
    %3011 = vmatprep.subr.mxu0 0.0
    %3012 = vmatpush2.msra.mxu0 0.0
    %3013 = vmatprep.subr.mxu0 0.0
    %3014 = vmatpush2.msra.mxu0 0.0
    %3015 = vmatprep.subr.mxu0 0.0
    %3016 = vmatpush2.msra.mxu0 0.0
    %3017 = vmatprep.subr.mxu0 0.0
    %3018 = vmatpush2.msra.mxu0 0.0
    %3019 = vmatprep.subr.mxu0 0.0
    %3020 = vmatpush2.msra.mxu0 0.0
    %3021 = vmatprep.subr.mxu0 0.0
    %3022 = vmatpush2.msra.mxu0 0.0
    %3023 = vmatprep.subr.mxu0 0.0
    %3024 = vmatpush2.msra.mxu0 0.0
    %3025 = vmatprep.subr.mxu0 0.0
    %3026 = vmatpush2.msra.mxu0 0.0
    %3027 = vmatprep.subr.mxu0 0.0
    %3028 = vmatpush2.msra.mxu0 0.0
    %3029 = vmatprep.subr.mxu0 0.0
    %3030 = vmatpush2.msra.mxu0 0.0
    %3031 = vmatprep.subr.mxu0 0.0
    %3032 = vmatpush2.msra.mxu0 0.0
    %3033 = vmatprep.subr.mxu0 0.0
    %3034 = vmatpush2.msra.mxu0 0.0
    %3035 = vmatprep.subr.mxu0 0.0
    %3036 = vmatpush2.msra.mxu0 0.0
    %3037 = vmatprep.subr.mxu0 0.0
    %3038 = vmatpush2.msra.mxu0 0.0
    %3039 = vmatprep.subr.mxu0 0.0
    %3040 = vmatpush2.msra.mxu0 0.0
    %3041 = vmatprep.mubr.f32.mxu0 0.0
    %3042 = vmatmul.mubr.f32.gmra.mxu0 %v2975
    %v3043 = vpop.f32.mrf.mxu0
    %v3044 = vadd.f32 %v2972, %v3043
    %v3045 = vpop.f32.mrf.mxu0
    %3046 = vdwg.mxu0
    %v3047 = vand.u32 2147483647, %v2888
    %vm3048 = vcmask 122880
    %v3049 = vsel %vm3048, %v3047, 0.0
    %3050 = vadd.xlane.f32.xlu0 %v3049
    %v3051 = vpop.xlane.xlu0 %3050
    %v3052 = vrot.slane %v3051, 4
    %v3053 = vadd.f32 %v3051, %v3052
    %v3054 = vrot.slane %v3053, 2
    %v3055 = vadd.f32 %v3053, %v3054
    %v3056 = vrot.slane %v3055, 1
    %v3057 = vadd.f32 %v3055, %v3056
    %s3058 = vtos %v3057
    %v3059 = vstv %s3058
    %v3060 = vand.u32 2147483647, %v2889
    %v3061 = vsel %vm1262, %v3060, 0.0
    %3062 = vadd.xlane.f32.xlu0 %v3061
    %v3063 = vpop.xlane.xlu0 %3062
    %v3064 = vrot.slane %v3063, 4
    %v3065 = vadd.f32 %v3063, %v3064
    %v3066 = vrot.slane %v3065, 2
    %v3067 = vadd.f32 %v3065, %v3066
    %v3068 = vrot.slane %v3067, 1
    %v3069 = vadd.f32 %v3067, %v3068
    %s3070 = vtos %v3069
    %v3071 = vstv %s3070
    %v3073 = vrot.slane %v2966, 7
    %v3075 = vsub.f32 %v2888, %v3073
    %v3076 = vand.u32 2147483647, %v3075
    %v3078 = vrot.slane %v3076, 1
    %vm3080 = vcmask 129024
    %v3081 = vsel %vm3080, %v3078, 0.0
    %3082 = vadd.xlane.f32.xlu0 %v3081
    %v3083 = vpop.xlane.xlu0 %3082
    %v3084 = vrot.slane %v3083, 4
    %v3085 = vadd.f32 %v3083, %v3084
    %v3086 = vrot.slane %v3085, 2
    %v3087 = vadd.f32 %v3085, %v3086
    %v3088 = vrot.slane %v3087, 1
    %v3089 = vadd.f32 %v3087, %v3088
    %s3090 = vtos %v3089
    %v3091 = vstv %s3090
    %v3092 = vadd.f32 %v3059, %v3091
    %v3094 = vrot.slane %v3044, 7
    %v3096 = vsub.f32 %v2889, %v3094
    %v3097 = vand.u32 2147483647, %v3096
    %v3099 = vrot.slane %v3097, 1
    %vm3101 = vcmask 260096
    %v3102 = vsel %vm3101, %v3099, 0.0
    %3103 = vadd.xlane.f32.xlu0 %v3102
    %v3104 = vpop.xlane.xlu0 %3103
    %v3105 = vrot.slane %v3104, 4
    %v3106 = vadd.f32 %v3104, %v3105
    %v3107 = vrot.slane %v3106, 2
    %v3108 = vadd.f32 %v3106, %v3107
    %v3109 = vrot.slane %v3108, 1
    %v3110 = vadd.f32 %v3108, %v3109
    %s3111 = vtos %v3110
    %v3112 = vstv %s3111
    %v3113 = vadd.f32 %v3071, %v3112
    %s3114 = sld [smem:[#allocation5]]
    %v3115 = vstv %s3114
    %v3116 = vmul.f32 %v3115, %v3113
    %v3117 = vadd.f32 %v3092, %v3116
    %vm3118 = vcmask 0
    %3119 = vst.msk [vmem:[#allocation23] sm:$0x1] %vm3118, %v3117
    // Predicated region
    $region114: #{tpu_custom_call.1} parent=1 // pred_check
      _
    $region115: #{tpu_custom_call.1} parent=1 // pred_check_branch
      %3121 = sbr.rel (0) target = $region117
    $region116: #{tpu_custom_call.1} parent=1 // pred_region
      %s3123 = ssub.s32 16, 16
      %3124 = vsyncadd [#allocation8], %s3123
      %s3126 = sshll.u32 [#allocation23], 4
      %s3127 = int_to_ptr.vmem [resolvable:$true] %s3126
      %3129 = dma.vmem_to_hbm [thread:$0]  %s3127, 16, %s18, [#allocation8]
    $region117: #{tpu_custom_call.1} parent=1 // pred_fallthru
      _
    // Predicated region
    $region118: #{tpu_custom_call.1} parent=1 // pred_check
      _
    $region119: #{tpu_custom_call.1} parent=1 // pred_check_branch
      %3131 = sbr.rel (0) target = $region121
    $region120: #{tpu_custom_call.1} parent=1 // pred_region
      %3132 = dma.done [#allocation8], 16
    $region121: #{tpu_custom_call.1} parent=1 // pred_fallthru
      _
    %3133 = vsyncpa [#allocation7], 1
    %3134 = vsyncpa [#allocation10], 1
    %3135 = vsyncpa [#allocation13], 1
    %3136 = vsyncpa [#allocation16], 1
    %3137 = vsyncpa [#allocation19], 1
    %3138 = vsyncpa [#allocation22], 1
    %3139 = vsyncpa [#allocation8], 1

</llo_original>
